<compile_context>
chip_gen: v5e
topology: v5e:2x2
jax: 0.10.0
libtpu: 0.0.40
codegen_flags: <defaults>
</compile_context>

<pallas_src>
import functools

import numpy as np
import jax
import jax.numpy as jnp
from jax import lax
from jax.experimental import pallas as pl
from jax.experimental.pallas import tpu as pltpu


def _roi_bins(rois, outh, outw, spatial_scale, H, W):
    """Per-ROI integer bin boundaries, CUDA roi_forward float32 semantics."""
    rois = jnp.asarray(rois, jnp.float32)
    batch_idx = rois[:, 0].astype(jnp.int32)
    coords = jnp.floor(rois[:, 1:5] * jnp.float32(spatial_scale)
                       + jnp.float32(0.5)).astype(jnp.int32)
    xs, ys, xe, ye = coords[:, 0], coords[:, 1], coords[:, 2], coords[:, 3]

    rw = jnp.maximum(xe - xs + 1, 1).astype(jnp.float32)
    rh = jnp.maximum(ye - ys + 1, 1).astype(jnp.float32)
    bin_w = rw / jnp.float32(outw)
    bin_h = rh / jnp.float32(outh)

    pw = jnp.arange(outw, dtype=jnp.float32)
    ph = jnp.arange(outh, dtype=jnp.float32)

    wstart = jnp.floor(pw[None, :] * bin_w[:, None]).astype(jnp.int32) + xs[:, None]
    wend = jnp.ceil((pw[None, :] + 1.0) * bin_w[:, None]).astype(jnp.int32) + xs[:, None]
    hstart = jnp.floor(ph[None, :] * bin_h[:, None]).astype(jnp.int32) + ys[:, None]
    hend = jnp.ceil((ph[None, :] + 1.0) * bin_h[:, None]).astype(jnp.int32) + ys[:, None]

    wstart = jnp.clip(wstart, 0, W)
    wend = jnp.clip(wend, 0, W)
    hstart = jnp.clip(hstart, 0, H)
    hend = jnp.clip(hend, 0, H)
    return batch_idx, hstart, hend, wstart, wend


def _vmem_capacity_bytes():
    """Per-core VMEM capacity; conservative (v7x) fallback if query fails."""
    try:
        info = pltpu.get_tpu_info()
        cap = getattr(info, "vmem_capacity_bytes", None)
        if cap:
            return int(cap)
    except Exception:
        pass
    return 64 * 2**20


def _plan_channels(C, H, W, itemsize, budget):
    """Return (C_padded, ct) so the (H, W, ct) slab fits `budget` bytes.

    If the full-C slab fits, no padding and ct=C (whatever C is). Otherwise C
    is padded to a multiple of 128 so a 128-multiple tile is always legal.
    """
    if H * W * C * itemsize <= budget:
        return C, C
    C_pad = ((C + 127) // 128) * 128
    ct = 128
    for m in range(128, C_pad + 1, 128):
        if C_pad % m == 0 and H * W * m * itemsize <= budget:
            ct = m
    return C_pad, ct


def _roi_pool_kernel(bidx_ref, hs_ref, he_ref, ws_ref, we_ref,   # scalar prefetch
                     x_ref, out_ref, *, outh, outw):
    """One grid step = (one channel tile, one ROI).

    x_ref:   (H, W, Ct) channel-last slab of the ROI's image (leading dim squeezed).
    out_ref: (outw*outh, Ct) lane-dense output rows, row index = pw*outh + ph.
    """
    del bidx_ref  # only used by the index_map
    n = pl.program_id(1)  # ROI axis is the inner grid axis

    H, W, _ = x_ref.shape
    neg = jnp.array(-jnp.inf, dtype=out_ref.dtype)

    wi = lax.broadcasted_iota(jnp.int32, (1, W, 1), 1)   # pixel-col index
    hi = lax.broadcasted_iota(jnp.int32, (H, 1), 0)      # pixel-row index

    # Per-output-row H masks, hoisted (reused by every output column).
    hmasks, hempty = [], []
    for ph in range(outh):
        h0 = hs_ref[ph, n]
        h1 = he_ref[ph, n]
        hmasks.append(jnp.logical_and(hi >= h0, hi < h1))   # (H, 1)
        hempty.append(h1 <= h0)

    # One output column at a time: masked W-reduction -> (H, Ct), then all
    # outh H-reductions for that column, stored with a single (outh, Ct) write.
    for pw in range(outw):
        w0 = ws_ref[pw, n]
        w1 = we_ref[pw, n]
        wmask = jnp.logical_and(wi >= w0, wi < w1)                  # (1, W, 1)
        col = jnp.max(jnp.where(wmask, x_ref[...], neg), axis=1)    # (H, Ct)
        col_empty = w1 <= w0
        rows = []
        for ph in range(outh):
            m = jnp.max(jnp.where(hmasks[ph], col, neg),
                        axis=0, keepdims=True)                      # (1, Ct)
            is_empty = jnp.logical_or(col_empty, hempty[ph])
            rows.append(jnp.where(is_empty, jnp.zeros_like(m), m))
        out_ref[pl.ds(pw * outh, outh), :] = (
            jnp.concatenate(rows, axis=0).astype(out_ref.dtype))


def roi_pooling_2d(x, rois, outh, outw, spatial_scale):
    """Pallas equivalent of RoIPooling2D(outh, outw, spatial_scale)(x, rois).

    x: (B, C, H, W) float, rois: (N, 5) float [batch, x1, y1, x2, y2].
    Returns (N, C, outh, outw).
    """
    B, C, H, W = x.shape
    N = rois.shape[0]
    dtype = x.dtype

    batch_idx, hstart, hend, wstart, wend = _roi_bins(
        rois, outh, outw, spatial_scale, H, W)

    # Sort ROIs by batch index so consecutive (inner-axis) grid steps map to
    # the same feature slab and Pallas skips the HBM re-fetch.
    order = jnp.argsort(batch_idx)
    inv_order = jnp.argsort(order)
    bidx_s = batch_idx[order].astype(jnp.int32)
    # Bounds stored as (out, N): long axis last -> small SMEM padding.
    hs = hstart[order].T.astype(jnp.int32)   # (outh, N)
    he = hend[order].T.astype(jnp.int32)
    ws = wstart[order].T.astype(jnp.int32)   # (outw, N)
    we = wend[order].T.astype(jnp.int32)

    vmem_cap = _vmem_capacity_bytes()
    slab_budget = (6 << 20) if vmem_cap <= (64 << 20) else (16 << 20)

    C_pad, ct = _plan_channels(C, H, W, dtype.itemsize, slab_budget)
    n_ct = C_pad // ct

    # Channel-last feature map: lanes = C, sublanes = W.
    x_r = jnp.transpose(x, (0, 2, 3, 1))     # (B, H, W, C)
    if C_pad != C:
        x_r = jnp.pad(x_r, ((0, 0), (0, 0), (0, 0), (0, C_pad - C)))

    slab_bytes = H * W * ct * dtype.itemsize
    out_blk_bytes = outh * outw * ct * dtype.itemsize
    col_bytes = H * ct * max(dtype.itemsize, 4)
    needed = 2 * slab_bytes + 2 * out_blk_bytes + 4 * col_bytes + (2 << 20)
    vmem_limit = max(32 << 20, needed)
    vmem_limit = min(vmem_limit, vmem_cap - (8 << 20))
    vmem_limit = int(max(vmem_limit, needed))

    kernel = functools.partial(_roi_pool_kernel, outh=outh, outw=outw)

    out_flat = pl.pallas_call(
        kernel,
        out_shape=jax.ShapeDtypeStruct((N, outw * outh, C_pad), dtype),
        grid_spec=pltpu.PrefetchScalarGridSpec(
            num_scalar_prefetch=5,            # bidx, hs, he, ws, we -> SMEM
            grid=(n_ct, N),                   # channel tiles OUTER, ROIs INNER
            in_specs=[
                pl.BlockSpec((None, H, W, ct),
                             lambda c, n, bidx, hs, he, ws, we:
                             (bidx[n], 0, 0, c)),
            ],
            out_specs=pl.BlockSpec((None, outw * outh, ct),
                                   lambda c, n, bidx, hs, he, ws, we:
                                   (n, 0, c)),
        ),
        compiler_params=pltpu.CompilerParams(
            dimension_semantics=("parallel", "parallel"),
            vmem_limit_bytes=vmem_limit),
    )(bidx_s, hs, he, ws, we, x_r)

    # Lane-dense kernel output (rows ordered pw-major) -> NCHW, drop channel
    # padding, then restore the original ROI order.
    out = out_flat.reshape(N, outw, outh, C_pad).transpose(0, 3, 2, 1)[:, :C]
    return jnp.take(out, inv_order, axis=0)


def roi_pool_ref(x, rois, outh, outw, spatial_scale):
    """Reference: same CUDA-style f32 bin boundaries, naive NumPy max-pool."""
    x = np.asarray(x)
    B, C, H, W = x.shape
    batch_idx, hs, he, ws, we = map(
        np.asarray, _roi_bins(rois, outh, outw, spatial_scale, H, W))
    N = batch_idx.shape[0]
    out = np.zeros((N, C, outh, outw), dtype=x.dtype)
    for n in range(N):
        b = int(batch_idx[n])
        for ph in range(outh):
            for pw in range(outw):
                h0, h1 = int(hs[n, ph]), int(he[n, ph])
                w0, w1 = int(ws[n, pw]), int(we[n, pw])
                if h1 <= h0 or w1 <= w0:
                    out[n, :, ph, pw] = 0.0
                else:
                    out[n, :, ph, pw] = x[b, :, h0:h1, w0:w1].max(axis=(1, 2))
    return out


if __name__ == "__main__":
    B, C, H, W = 2, 4, 16, 16
    outh, outw, spatial_scale = 7, 7, 0.5
    N = 3
    img_size = H / spatial_scale  # 32

    key = jax.random.PRNGKey(0)
    kx, k1, k2 = jax.random.split(key, 3)
    x = jax.random.normal(kx, (B, C, H, W), dtype=jnp.float32)

    p1 = jax.random.uniform(k1, (N, 2), minval=0.0, maxval=img_size * 0.6)
    p2 = p1 + jax.random.uniform(k2, (N, 2), minval=2.0, maxval=img_size * 0.4)
    p2 = jnp.minimum(p2, img_size - 1.0)
    batch = jnp.array([[0.0], [1.0], [0.0]], dtype=jnp.float32)
    rois = jnp.concatenate(
        [batch, p1[:, 0:1], p1[:, 1:2], p2[:, 0:1], p2[:, 1:2]], axis=1
    ).astype(jnp.float32)

    out = roi_pooling_2d(x, rois, outh, outw, spatial_scale)
    out = jax.block_until_ready(out)

    ref = roi_pool_ref(x, rois, outh, outw, spatial_scale)
    np.testing.assert_allclose(np.asarray(out), ref, rtol=1e-6, atol=1e-6)

    print("KERNEL_OK")
</pallas_src>

<mosaic_0001>
module attributes {stable_mosaic.version = 11 : i64} {
  func.func @_roi_pool_kernel(%arg0: i32, %arg1: i32, %arg2: memref<3xi32, #tpu.memory_space<smem>>, %arg3: memref<7x3xi32, #tpu.memory_space<smem>>, %arg4: memref<7x3xi32, #tpu.memory_space<smem>>, %arg5: memref<7x3xi32, #tpu.memory_space<smem>>, %arg6: memref<7x3xi32, #tpu.memory_space<smem>>, %arg7: memref<1x16x16x4xf32, #tpu.memory_space<vmem>>, %arg8: memref<1x49x4xf32, #tpu.memory_space<vmem>>) attributes {dimension_semantics = [#tpu.dimension_semantics<parallel>, #tpu.dimension_semantics<parallel>], iteration_bounds = array<i64: 1, 3>, scalar_prefetch = 5 : i64, scratch_operands = 0 : i64, tpu.core_type = #tpu.core_type<tc>, window_params = [{transform_indices = @transform_0, window_bounds = array<i64: 1, 16, 16, 4>}, {transform_indices = @transform_1, window_bounds = array<i64: 1, 49, 4>}]} {
    %0 = tpu.iota {dimensions = array<i32: 1>} : vector<1x16x1xi32>
    %1 = tpu.iota {dimensions = array<i32: 0>} : vector<16x1xi32>
    %c0 = arith.constant 0 : index
    %2 = arith.index_cast %arg1 : i32 to index
    %3 = memref.load %arg3[%c0, %2] : memref<7x3xi32, #tpu.memory_space<smem>>
    %c0_0 = arith.constant 0 : index
    %4 = arith.index_cast %arg1 : i32 to index
    %5 = memref.load %arg4[%c0_0, %4] : memref<7x3xi32, #tpu.memory_space<smem>>
    %6 = vector.broadcast %3 : i32 to vector<16x1xi32>
    %7 = arith.cmpi sge, %1, %6 : vector<16x1xi32>
    %8 = vector.broadcast %5 : i32 to vector<16x1xi32>
    %9 = arith.cmpi slt, %1, %8 : vector<16x1xi32>
    %10 = arith.andi %7, %9 : vector<16x1xi1>
    %11 = arith.cmpi sle, %5, %3 : i32
    %c1 = arith.constant 1 : index
    %12 = arith.index_cast %arg1 : i32 to index
    %13 = memref.load %arg3[%c1, %12] : memref<7x3xi32, #tpu.memory_space<smem>>
    %c1_1 = arith.constant 1 : index
    %14 = arith.index_cast %arg1 : i32 to index
    %15 = memref.load %arg4[%c1_1, %14] : memref<7x3xi32, #tpu.memory_space<smem>>
    %16 = vector.broadcast %13 : i32 to vector<16x1xi32>
    %17 = arith.cmpi sge, %1, %16 : vector<16x1xi32>
    %18 = vector.broadcast %15 : i32 to vector<16x1xi32>
    %19 = arith.cmpi slt, %1, %18 : vector<16x1xi32>
    %20 = arith.andi %17, %19 : vector<16x1xi1>
    %21 = arith.cmpi sle, %15, %13 : i32
    %c2 = arith.constant 2 : index
    %22 = arith.index_cast %arg1 : i32 to index
    %23 = memref.load %arg3[%c2, %22] : memref<7x3xi32, #tpu.memory_space<smem>>
    %c2_2 = arith.constant 2 : index
    %24 = arith.index_cast %arg1 : i32 to index
    %25 = memref.load %arg4[%c2_2, %24] : memref<7x3xi32, #tpu.memory_space<smem>>
    %26 = vector.broadcast %23 : i32 to vector<16x1xi32>
    %27 = arith.cmpi sge, %1, %26 : vector<16x1xi32>
    %28 = vector.broadcast %25 : i32 to vector<16x1xi32>
    %29 = arith.cmpi slt, %1, %28 : vector<16x1xi32>
    %30 = arith.andi %27, %29 : vector<16x1xi1>
    %31 = arith.cmpi sle, %25, %23 : i32
    %c3 = arith.constant 3 : index
    %32 = arith.index_cast %arg1 : i32 to index
    %33 = memref.load %arg3[%c3, %32] : memref<7x3xi32, #tpu.memory_space<smem>>
    %c3_3 = arith.constant 3 : index
    %34 = arith.index_cast %arg1 : i32 to index
    %35 = memref.load %arg4[%c3_3, %34] : memref<7x3xi32, #tpu.memory_space<smem>>
    %36 = vector.broadcast %33 : i32 to vector<16x1xi32>
    %37 = arith.cmpi sge, %1, %36 : vector<16x1xi32>
    %38 = vector.broadcast %35 : i32 to vector<16x1xi32>
    %39 = arith.cmpi slt, %1, %38 : vector<16x1xi32>
    %40 = arith.andi %37, %39 : vector<16x1xi1>
    %41 = arith.cmpi sle, %35, %33 : i32
    %c4 = arith.constant 4 : index
    %42 = arith.index_cast %arg1 : i32 to index
    %43 = memref.load %arg3[%c4, %42] : memref<7x3xi32, #tpu.memory_space<smem>>
    %c4_4 = arith.constant 4 : index
    %44 = arith.index_cast %arg1 : i32 to index
    %45 = memref.load %arg4[%c4_4, %44] : memref<7x3xi32, #tpu.memory_space<smem>>
    %46 = vector.broadcast %43 : i32 to vector<16x1xi32>
    %47 = arith.cmpi sge, %1, %46 : vector<16x1xi32>
    %48 = vector.broadcast %45 : i32 to vector<16x1xi32>
    %49 = arith.cmpi slt, %1, %48 : vector<16x1xi32>
    %50 = arith.andi %47, %49 : vector<16x1xi1>
    %51 = arith.cmpi sle, %45, %43 : i32
    %c5 = arith.constant 5 : index
    %52 = arith.index_cast %arg1 : i32 to index
    %53 = memref.load %arg3[%c5, %52] : memref<7x3xi32, #tpu.memory_space<smem>>
    %c5_5 = arith.constant 5 : index
    %54 = arith.index_cast %arg1 : i32 to index
    %55 = memref.load %arg4[%c5_5, %54] : memref<7x3xi32, #tpu.memory_space<smem>>
    %56 = vector.broadcast %53 : i32 to vector<16x1xi32>
    %57 = arith.cmpi sge, %1, %56 : vector<16x1xi32>
    %58 = vector.broadcast %55 : i32 to vector<16x1xi32>
    %59 = arith.cmpi slt, %1, %58 : vector<16x1xi32>
    %60 = arith.andi %57, %59 : vector<16x1xi1>
    %61 = arith.cmpi sle, %55, %53 : i32
    %c6 = arith.constant 6 : index
    %62 = arith.index_cast %arg1 : i32 to index
    %63 = memref.load %arg3[%c6, %62] : memref<7x3xi32, #tpu.memory_space<smem>>
    %c6_6 = arith.constant 6 : index
    %64 = arith.index_cast %arg1 : i32 to index
    %65 = memref.load %arg4[%c6_6, %64] : memref<7x3xi32, #tpu.memory_space<smem>>
    %66 = vector.broadcast %63 : i32 to vector<16x1xi32>
    %67 = arith.cmpi sge, %1, %66 : vector<16x1xi32>
    %68 = vector.broadcast %65 : i32 to vector<16x1xi32>
    %69 = arith.cmpi slt, %1, %68 : vector<16x1xi32>
    %70 = arith.andi %67, %69 : vector<16x1xi1>
    %71 = arith.cmpi sle, %65, %63 : i32
    %c0_7 = arith.constant 0 : index
    %72 = arith.index_cast %arg1 : i32 to index
    %73 = memref.load %arg5[%c0_7, %72] : memref<7x3xi32, #tpu.memory_space<smem>>
    %c0_8 = arith.constant 0 : index
    %74 = arith.index_cast %arg1 : i32 to index
    %75 = memref.load %arg6[%c0_8, %74] : memref<7x3xi32, #tpu.memory_space<smem>>
    %76 = vector.broadcast %73 : i32 to vector<1x16x1xi32>
    %77 = arith.cmpi sge, %0, %76 : vector<1x16x1xi32>
    %78 = vector.broadcast %75 : i32 to vector<1x16x1xi32>
    %79 = arith.cmpi slt, %0, %78 : vector<1x16x1xi32>
    %80 = arith.andi %77, %79 : vector<1x16x1xi1>
    %c0_9 = arith.constant 0 : index
    %c0_10 = arith.constant 0 : index
    %c0_11 = arith.constant 0 : index
    %c0_12 = arith.constant 0 : index
    %81 = vector.load %arg7[%c0_9, %c0_10, %c0_11, %c0_12] : memref<1x16x16x4xf32, #tpu.memory_space<vmem>>, vector<1x16x16x4xf32>
    %82 = vector.shape_cast %81 : vector<1x16x16x4xf32> to vector<16x16x4xf32>
    %cst = arith.constant 0xFF800000 : f32
    %83 = vector.shape_cast %80 : vector<1x16x1xi1> to vector<1x16x1xi1>
    %84 = vector.broadcast %83 : vector<1x16x1xi1> to vector<16x16x4xi1>
    %85 = vector.broadcast %cst : f32 to vector<16x16x4xf32>
    %86 = arith.select %84, %82, %85 : vector<16x16x4xi1>, vector<16x16x4xf32>
    %cst_13 = arith.constant dense<0xFF800000> : vector<16x4xf32>
    %87 = vector.multi_reduction <maximumf>, %86, %cst_13 [1] : vector<16x16x4xf32> to vector<16x4xf32>
    %88 = arith.cmpi sle, %75, %73 : i32
    %cst_14 = arith.constant 0xFF800000 : f32
    %89 = vector.shape_cast %10 : vector<16x1xi1> to vector<16x1xi1>
    %90 = vector.broadcast %89 : vector<16x1xi1> to vector<16x4xi1>
    %91 = vector.broadcast %cst_14 : f32 to vector<16x4xf32>
    %92 = arith.select %90, %87, %91 : vector<16x4xi1>, vector<16x4xf32>
    %cst_15 = arith.constant dense<0xFF800000> : vector<4xf32>
    %93 = vector.multi_reduction <maximumf>, %92, %cst_15 [0] : vector<16x4xf32> to vector<4xf32>
    %94 = vector.shape_cast %93 : vector<4xf32> to vector<1x4xf32>
    %95 = arith.ori %88, %11 : i1
    %cst_16 = arith.constant 0.000000e+00 : f32
    %96 = vector.broadcast %cst_16 : f32 to vector<1x4xf32>
    %97 = arith.select %95, %96, %94 : vector<1x4xf32>
    %cst_17 = arith.constant 0xFF800000 : f32
    %98 = vector.shape_cast %20 : vector<16x1xi1> to vector<16x1xi1>
    %99 = vector.broadcast %98 : vector<16x1xi1> to vector<16x4xi1>
    %100 = vector.broadcast %cst_17 : f32 to vector<16x4xf32>
    %101 = arith.select %99, %87, %100 : vector<16x4xi1>, vector<16x4xf32>
    %cst_18 = arith.constant dense<0xFF800000> : vector<4xf32>
    %102 = vector.multi_reduction <maximumf>, %101, %cst_18 [0] : vector<16x4xf32> to vector<4xf32>
    %103 = vector.shape_cast %102 : vector<4xf32> to vector<1x4xf32>
    %104 = arith.ori %88, %21 : i1
    %cst_19 = arith.constant 0.000000e+00 : f32
    %105 = vector.broadcast %cst_19 : f32 to vector<1x4xf32>
    %106 = arith.select %104, %105, %103 : vector<1x4xf32>
    %cst_20 = arith.constant 0xFF800000 : f32
    %107 = vector.shape_cast %30 : vector<16x1xi1> to vector<16x1xi1>
    %108 = vector.broadcast %107 : vector<16x1xi1> to vector<16x4xi1>
    %109 = vector.broadcast %cst_20 : f32 to vector<16x4xf32>
    %110 = arith.select %108, %87, %109 : vector<16x4xi1>, vector<16x4xf32>
    %cst_21 = arith.constant dense<0xFF800000> : vector<4xf32>
    %111 = vector.multi_reduction <maximumf>, %110, %cst_21 [0] : vector<16x4xf32> to vector<4xf32>
    %112 = vector.shape_cast %111 : vector<4xf32> to vector<1x4xf32>
    %113 = arith.ori %88, %31 : i1
    %cst_22 = arith.constant 0.000000e+00 : f32
    %114 = vector.broadcast %cst_22 : f32 to vector<1x4xf32>
    %115 = arith.select %113, %114, %112 : vector<1x4xf32>
    %cst_23 = arith.constant 0xFF800000 : f32
    %116 = vector.shape_cast %40 : vector<16x1xi1> to vector<16x1xi1>
    %117 = vector.broadcast %116 : vector<16x1xi1> to vector<16x4xi1>
    %118 = vector.broadcast %cst_23 : f32 to vector<16x4xf32>
    %119 = arith.select %117, %87, %118 : vector<16x4xi1>, vector<16x4xf32>
    %cst_24 = arith.constant dense<0xFF800000> : vector<4xf32>
    %120 = vector.multi_reduction <maximumf>, %119, %cst_24 [0] : vector<16x4xf32> to vector<4xf32>
    %121 = vector.shape_cast %120 : vector<4xf32> to vector<1x4xf32>
    %122 = arith.ori %88, %41 : i1
    %cst_25 = arith.constant 0.000000e+00 : f32
    %123 = vector.broadcast %cst_25 : f32 to vector<1x4xf32>
    %124 = arith.select %122, %123, %121 : vector<1x4xf32>
    %cst_26 = arith.constant 0xFF800000 : f32
    %125 = vector.shape_cast %50 : vector<16x1xi1> to vector<16x1xi1>
    %126 = vector.broadcast %125 : vector<16x1xi1> to vector<16x4xi1>
    %127 = vector.broadcast %cst_26 : f32 to vector<16x4xf32>
    %128 = arith.select %126, %87, %127 : vector<16x4xi1>, vector<16x4xf32>
    %cst_27 = arith.constant dense<0xFF800000> : vector<4xf32>
    %129 = vector.multi_reduction <maximumf>, %128, %cst_27 [0] : vector<16x4xf32> to vector<4xf32>
    %130 = vector.shape_cast %129 : vector<4xf32> to vector<1x4xf32>
    %131 = arith.ori %88, %51 : i1
    %cst_28 = arith.constant 0.000000e+00 : f32
    %132 = vector.broadcast %cst_28 : f32 to vector<1x4xf32>
    %133 = arith.select %131, %132, %130 : vector<1x4xf32>
    %cst_29 = arith.constant 0xFF800000 : f32
    %134 = vector.shape_cast %60 : vector<16x1xi1> to vector<16x1xi1>
    %135 = vector.broadcast %134 : vector<16x1xi1> to vector<16x4xi1>
    %136 = vector.broadcast %cst_29 : f32 to vector<16x4xf32>
    %137 = arith.select %135, %87, %136 : vector<16x4xi1>, vector<16x4xf32>
    %cst_30 = arith.constant dense<0xFF800000> : vector<4xf32>
    %138 = vector.multi_reduction <maximumf>, %137, %cst_30 [0] : vector<16x4xf32> to vector<4xf32>
    %139 = vector.shape_cast %138 : vector<4xf32> to vector<1x4xf32>
    %140 = arith.ori %88, %61 : i1
    %cst_31 = arith.constant 0.000000e+00 : f32
    %141 = vector.broadcast %cst_31 : f32 to vector<1x4xf32>
    %142 = arith.select %140, %141, %139 : vector<1x4xf32>
    %cst_32 = arith.constant 0xFF800000 : f32
    %143 = vector.shape_cast %70 : vector<16x1xi1> to vector<16x1xi1>
    %144 = vector.broadcast %143 : vector<16x1xi1> to vector<16x4xi1>
    %145 = vector.broadcast %cst_32 : f32 to vector<16x4xf32>
    %146 = arith.select %144, %87, %145 : vector<16x4xi1>, vector<16x4xf32>
    %cst_33 = arith.constant dense<0xFF800000> : vector<4xf32>
    %147 = vector.multi_reduction <maximumf>, %146, %cst_33 [0] : vector<16x4xf32> to vector<4xf32>
    %148 = vector.shape_cast %147 : vector<4xf32> to vector<1x4xf32>
    %149 = arith.ori %88, %71 : i1
    %cst_34 = arith.constant 0.000000e+00 : f32
    %150 = vector.broadcast %cst_34 : f32 to vector<1x4xf32>
    %151 = arith.select %149, %150, %148 : vector<1x4xf32>
    %152 = tpu.concatenate %97, %106, %115, %124, %133, %142, %151 in 0 : vector<1x4xf32>, vector<1x4xf32>, vector<1x4xf32>, vector<1x4xf32>, vector<1x4xf32>, vector<1x4xf32>, vector<1x4xf32> -> vector<7x4xf32>
    %c0_35 = arith.constant 0 : index
    %c0_36 = arith.constant 0 : index
    %c0_37 = arith.constant 0 : index
    %153 = vector.load %arg8[%c0_35, %c0_36, %c0_37] : memref<1x49x4xf32, #tpu.memory_space<vmem>>, vector<1x7x4xf32>
    %154 = vector.shape_cast %153 : vector<1x7x4xf32> to vector<7x4xf32>
    %155 = vector.shape_cast %152 : vector<7x4xf32> to vector<1x7x4xf32>
    tpu.vector_store %arg8[%c0_35, %c0_36, %c0_37], %155 {strides = array<i32>} : memref<1x49x4xf32, #tpu.memory_space<vmem>>, vector<1x7x4xf32>,
    %c1_38 = arith.constant 1 : index
    %156 = arith.index_cast %arg1 : i32 to index
    %157 = memref.load %arg5[%c1_38, %156] : memref<7x3xi32, #tpu.memory_space<smem>>
    %c1_39 = arith.constant 1 : index
    %158 = arith.index_cast %arg1 : i32 to index
    %159 = memref.load %arg6[%c1_39, %158] : memref<7x3xi32, #tpu.memory_space<smem>>
    %160 = vector.broadcast %157 : i32 to vector<1x16x1xi32>
    %161 = arith.cmpi sge, %0, %160 : vector<1x16x1xi32>
    %162 = vector.broadcast %159 : i32 to vector<1x16x1xi32>
    %163 = arith.cmpi slt, %0, %162 : vector<1x16x1xi32>
    %164 = arith.andi %161, %163 : vector<1x16x1xi1>
    %c0_40 = arith.constant 0 : index
    %c0_41 = arith.constant 0 : index
    %c0_42 = arith.constant 0 : index
    %c0_43 = arith.constant 0 : index
    %165 = vector.load %arg7[%c0_40, %c0_41, %c0_42, %c0_43] : memref<1x16x16x4xf32, #tpu.memory_space<vmem>>, vector<1x16x16x4xf32>
    %166 = vector.shape_cast %165 : vector<1x16x16x4xf32> to vector<16x16x4xf32>
    %cst_44 = arith.constant 0xFF800000 : f32
    %167 = vector.shape_cast %164 : vector<1x16x1xi1> to vector<1x16x1xi1>
    %168 = vector.broadcast %167 : vector<1x16x1xi1> to vector<16x16x4xi1>
    %169 = vector.broadcast %cst_44 : f32 to vector<16x16x4xf32>
    %170 = arith.select %168, %166, %169 : vector<16x16x4xi1>, vector<16x16x4xf32>
    %cst_45 = arith.constant dense<0xFF800000> : vector<16x4xf32>
    %171 = vector.multi_reduction <maximumf>, %170, %cst_45 [1] : vector<16x16x4xf32> to vector<16x4xf32>
    %172 = arith.cmpi sle, %159, %157 : i32
    %cst_46 = arith.constant 0xFF800000 : f32
    %173 = vector.shape_cast %10 : vector<16x1xi1> to vector<16x1xi1>
    %174 = vector.broadcast %173 : vector<16x1xi1> to vector<16x4xi1>
    %175 = vector.broadcast %cst_46 : f32 to vector<16x4xf32>
    %176 = arith.select %174, %171, %175 : vector<16x4xi1>, vector<16x4xf32>
    %cst_47 = arith.constant dense<0xFF800000> : vector<4xf32>
    %177 = vector.multi_reduction <maximumf>, %176, %cst_47 [0] : vector<16x4xf32> to vector<4xf32>
    %178 = vector.shape_cast %177 : vector<4xf32> to vector<1x4xf32>
    %179 = arith.ori %172, %11 : i1
    %cst_48 = arith.constant 0.000000e+00 : f32
    %180 = vector.broadcast %cst_48 : f32 to vector<1x4xf32>
    %181 = arith.select %179, %180, %178 : vector<1x4xf32>
    %cst_49 = arith.constant 0xFF800000 : f32
    %182 = vector.shape_cast %20 : vector<16x1xi1> to vector<16x1xi1>
    %183 = vector.broadcast %182 : vector<16x1xi1> to vector<16x4xi1>
    %184 = vector.broadcast %cst_49 : f32 to vector<16x4xf32>
    %185 = arith.select %183, %171, %184 : vector<16x4xi1>, vector<16x4xf32>
    %cst_50 = arith.constant dense<0xFF800000> : vector<4xf32>
    %186 = vector.multi_reduction <maximumf>, %185, %cst_50 [0] : vector<16x4xf32> to vector<4xf32>
    %187 = vector.shape_cast %186 : vector<4xf32> to vector<1x4xf32>
    %188 = arith.ori %172, %21 : i1
    %cst_51 = arith.constant 0.000000e+00 : f32
    %189 = vector.broadcast %cst_51 : f32 to vector<1x4xf32>
    %190 = arith.select %188, %189, %187 : vector<1x4xf32>
    %cst_52 = arith.constant 0xFF800000 : f32
    %191 = vector.shape_cast %30 : vector<16x1xi1> to vector<16x1xi1>
    %192 = vector.broadcast %191 : vector<16x1xi1> to vector<16x4xi1>
    %193 = vector.broadcast %cst_52 : f32 to vector<16x4xf32>
    %194 = arith.select %192, %171, %193 : vector<16x4xi1>, vector<16x4xf32>
    %cst_53 = arith.constant dense<0xFF800000> : vector<4xf32>
    %195 = vector.multi_reduction <maximumf>, %194, %cst_53 [0] : vector<16x4xf32> to vector<4xf32>
    %196 = vector.shape_cast %195 : vector<4xf32> to vector<1x4xf32>
    %197 = arith.ori %172, %31 : i1
    %cst_54 = arith.constant 0.000000e+00 : f32
    %198 = vector.broadcast %cst_54 : f32 to vector<1x4xf32>
    %199 = arith.select %197, %198, %196 : vector<1x4xf32>
    %cst_55 = arith.constant 0xFF800000 : f32
    %200 = vector.shape_cast %40 : vector<16x1xi1> to vector<16x1xi1>
    %201 = vector.broadcast %200 : vector<16x1xi1> to vector<16x4xi1>
    %202 = vector.broadcast %cst_55 : f32 to vector<16x4xf32>
    %203 = arith.select %201, %171, %202 : vector<16x4xi1>, vector<16x4xf32>
    %cst_56 = arith.constant dense<0xFF800000> : vector<4xf32>
    %204 = vector.multi_reduction <maximumf>, %203, %cst_56 [0] : vector<16x4xf32> to vector<4xf32>
    %205 = vector.shape_cast %204 : vector<4xf32> to vector<1x4xf32>
    %206 = arith.ori %172, %41 : i1
    %cst_57 = arith.constant 0.000000e+00 : f32
    %207 = vector.broadcast %cst_57 : f32 to vector<1x4xf32>
    %208 = arith.select %206, %207, %205 : vector<1x4xf32>
    %cst_58 = arith.constant 0xFF800000 : f32
    %209 = vector.shape_cast %50 : vector<16x1xi1> to vector<16x1xi1>
    %210 = vector.broadcast %209 : vector<16x1xi1> to vector<16x4xi1>
    %211 = vector.broadcast %cst_58 : f32 to vector<16x4xf32>
    %212 = arith.select %210, %171, %211 : vector<16x4xi1>, vector<16x4xf32>
    %cst_59 = arith.constant dense<0xFF800000> : vector<4xf32>
    %213 = vector.multi_reduction <maximumf>, %212, %cst_59 [0] : vector<16x4xf32> to vector<4xf32>
    %214 = vector.shape_cast %213 : vector<4xf32> to vector<1x4xf32>
    %215 = arith.ori %172, %51 : i1
    %cst_60 = arith.constant 0.000000e+00 : f32
    %216 = vector.broadcast %cst_60 : f32 to vector<1x4xf32>
    %217 = arith.select %215, %216, %214 : vector<1x4xf32>
    %cst_61 = arith.constant 0xFF800000 : f32
    %218 = vector.shape_cast %60 : vector<16x1xi1> to vector<16x1xi1>
    %219 = vector.broadcast %218 : vector<16x1xi1> to vector<16x4xi1>
    %220 = vector.broadcast %cst_61 : f32 to vector<16x4xf32>
    %221 = arith.select %219, %171, %220 : vector<16x4xi1>, vector<16x4xf32>
    %cst_62 = arith.constant dense<0xFF800000> : vector<4xf32>
    %222 = vector.multi_reduction <maximumf>, %221, %cst_62 [0] : vector<16x4xf32> to vector<4xf32>
    %223 = vector.shape_cast %222 : vector<4xf32> to vector<1x4xf32>
    %224 = arith.ori %172, %61 : i1
    %cst_63 = arith.constant 0.000000e+00 : f32
    %225 = vector.broadcast %cst_63 : f32 to vector<1x4xf32>
    %226 = arith.select %224, %225, %223 : vector<1x4xf32>
    %cst_64 = arith.constant 0xFF800000 : f32
    %227 = vector.shape_cast %70 : vector<16x1xi1> to vector<16x1xi1>
    %228 = vector.broadcast %227 : vector<16x1xi1> to vector<16x4xi1>
    %229 = vector.broadcast %cst_64 : f32 to vector<16x4xf32>
    %230 = arith.select %228, %171, %229 : vector<16x4xi1>, vector<16x4xf32>
    %cst_65 = arith.constant dense<0xFF800000> : vector<4xf32>
    %231 = vector.multi_reduction <maximumf>, %230, %cst_65 [0] : vector<16x4xf32> to vector<4xf32>
    %232 = vector.shape_cast %231 : vector<4xf32> to vector<1x4xf32>
    %233 = arith.ori %172, %71 : i1
    %cst_66 = arith.constant 0.000000e+00 : f32
    %234 = vector.broadcast %cst_66 : f32 to vector<1x4xf32>
    %235 = arith.select %233, %234, %232 : vector<1x4xf32>
    %236 = tpu.concatenate %181, %190, %199, %208, %217, %226, %235 in 0 : vector<1x4xf32>, vector<1x4xf32>, vector<1x4xf32>, vector<1x4xf32>, vector<1x4xf32>, vector<1x4xf32>, vector<1x4xf32> -> vector<7x4xf32>
    %c0_67 = arith.constant 0 : index
    %c7 = arith.constant 7 : index
    %c0_68 = arith.constant 0 : index
    %237 = vector.load %arg8[%c0_67, %c7, %c0_68] : memref<1x49x4xf32, #tpu.memory_space<vmem>>, vector<1x7x4xf32>
    %238 = vector.shape_cast %237 : vector<1x7x4xf32> to vector<7x4xf32>
    %239 = vector.shape_cast %236 : vector<7x4xf32> to vector<1x7x4xf32>
    tpu.vector_store %arg8[%c0_67, %c7, %c0_68], %239 {strides = array<i32>} : memref<1x49x4xf32, #tpu.memory_space<vmem>>, vector<1x7x4xf32>,
    %c2_69 = arith.constant 2 : index
    %240 = arith.index_cast %arg1 : i32 to index
    %241 = memref.load %arg5[%c2_69, %240] : memref<7x3xi32, #tpu.memory_space<smem>>
    %c2_70 = arith.constant 2 : index
    %242 = arith.index_cast %arg1 : i32 to index
    %243 = memref.load %arg6[%c2_70, %242] : memref<7x3xi32, #tpu.memory_space<smem>>
    %244 = vector.broadcast %241 : i32 to vector<1x16x1xi32>
    %245 = arith.cmpi sge, %0, %244 : vector<1x16x1xi32>
    %246 = vector.broadcast %243 : i32 to vector<1x16x1xi32>
    %247 = arith.cmpi slt, %0, %246 : vector<1x16x1xi32>
    %248 = arith.andi %245, %247 : vector<1x16x1xi1>
    %c0_71 = arith.constant 0 : index
    %c0_72 = arith.constant 0 : index
    %c0_73 = arith.constant 0 : index
    %c0_74 = arith.constant 0 : index
    %249 = vector.load %arg7[%c0_71, %c0_72, %c0_73, %c0_74] : memref<1x16x16x4xf32, #tpu.memory_space<vmem>>, vector<1x16x16x4xf32>
    %250 = vector.shape_cast %249 : vector<1x16x16x4xf32> to vector<16x16x4xf32>
    %cst_75 = arith.constant 0xFF800000 : f32
    %251 = vector.shape_cast %248 : vector<1x16x1xi1> to vector<1x16x1xi1>
    %252 = vector.broadcast %251 : vector<1x16x1xi1> to vector<16x16x4xi1>
    %253 = vector.broadcast %cst_75 : f32 to vector<16x16x4xf32>
    %254 = arith.select %252, %250, %253 : vector<16x16x4xi1>, vector<16x16x4xf32>
    %cst_76 = arith.constant dense<0xFF800000> : vector<16x4xf32>
    %255 = vector.multi_reduction <maximumf>, %254, %cst_76 [1] : vector<16x16x4xf32> to vector<16x4xf32>
    %256 = arith.cmpi sle, %243, %241 : i32
    %cst_77 = arith.constant 0xFF800000 : f32
    %257 = vector.shape_cast %10 : vector<16x1xi1> to vector<16x1xi1>
    %258 = vector.broadcast %257 : vector<16x1xi1> to vector<16x4xi1>
    %259 = vector.broadcast %cst_77 : f32 to vector<16x4xf32>
    %260 = arith.select %258, %255, %259 : vector<16x4xi1>, vector<16x4xf32>
    %cst_78 = arith.constant dense<0xFF800000> : vector<4xf32>
    %261 = vector.multi_reduction <maximumf>, %260, %cst_78 [0] : vector<16x4xf32> to vector<4xf32>
    %262 = vector.shape_cast %261 : vector<4xf32> to vector<1x4xf32>
    %263 = arith.ori %256, %11 : i1
    %cst_79 = arith.constant 0.000000e+00 : f32
    %264 = vector.broadcast %cst_79 : f32 to vector<1x4xf32>
    %265 = arith.select %263, %264, %262 : vector<1x4xf32>
    %cst_80 = arith.constant 0xFF800000 : f32
    %266 = vector.shape_cast %20 : vector<16x1xi1> to vector<16x1xi1>
    %267 = vector.broadcast %266 : vector<16x1xi1> to vector<16x4xi1>
    %268 = vector.broadcast %cst_80 : f32 to vector<16x4xf32>
    %269 = arith.select %267, %255, %268 : vector<16x4xi1>, vector<16x4xf32>
    %cst_81 = arith.constant dense<0xFF800000> : vector<4xf32>
    %270 = vector.multi_reduction <maximumf>, %269, %cst_81 [0] : vector<16x4xf32> to vector<4xf32>
    %271 = vector.shape_cast %270 : vector<4xf32> to vector<1x4xf32>
    %272 = arith.ori %256, %21 : i1
    %cst_82 = arith.constant 0.000000e+00 : f32
    %273 = vector.broadcast %cst_82 : f32 to vector<1x4xf32>
    %274 = arith.select %272, %273, %271 : vector<1x4xf32>
    %cst_83 = arith.constant 0xFF800000 : f32
    %275 = vector.shape_cast %30 : vector<16x1xi1> to vector<16x1xi1>
    %276 = vector.broadcast %275 : vector<16x1xi1> to vector<16x4xi1>
    %277 = vector.broadcast %cst_83 : f32 to vector<16x4xf32>
    %278 = arith.select %276, %255, %277 : vector<16x4xi1>, vector<16x4xf32>
    %cst_84 = arith.constant dense<0xFF800000> : vector<4xf32>
    %279 = vector.multi_reduction <maximumf>, %278, %cst_84 [0] : vector<16x4xf32> to vector<4xf32>
    %280 = vector.shape_cast %279 : vector<4xf32> to vector<1x4xf32>
    %281 = arith.ori %256, %31 : i1
    %cst_85 = arith.constant 0.000000e+00 : f32
    %282 = vector.broadcast %cst_85 : f32 to vector<1x4xf32>
    %283 = arith.select %281, %282, %280 : vector<1x4xf32>
    %cst_86 = arith.constant 0xFF800000 : f32
    %284 = vector.shape_cast %40 : vector<16x1xi1> to vector<16x1xi1>
    %285 = vector.broadcast %284 : vector<16x1xi1> to vector<16x4xi1>
    %286 = vector.broadcast %cst_86 : f32 to vector<16x4xf32>
    %287 = arith.select %285, %255, %286 : vector<16x4xi1>, vector<16x4xf32>
    %cst_87 = arith.constant dense<0xFF800000> : vector<4xf32>
    %288 = vector.multi_reduction <maximumf>, %287, %cst_87 [0] : vector<16x4xf32> to vector<4xf32>
    %289 = vector.shape_cast %288 : vector<4xf32> to vector<1x4xf32>
    %290 = arith.ori %256, %41 : i1
    %cst_88 = arith.constant 0.000000e+00 : f32
    %291 = vector.broadcast %cst_88 : f32 to vector<1x4xf32>
    %292 = arith.select %290, %291, %289 : vector<1x4xf32>
    %cst_89 = arith.constant 0xFF800000 : f32
    %293 = vector.shape_cast %50 : vector<16x1xi1> to vector<16x1xi1>
    %294 = vector.broadcast %293 : vector<16x1xi1> to vector<16x4xi1>
    %295 = vector.broadcast %cst_89 : f32 to vector<16x4xf32>
    %296 = arith.select %294, %255, %295 : vector<16x4xi1>, vector<16x4xf32>
    %cst_90 = arith.constant dense<0xFF800000> : vector<4xf32>
    %297 = vector.multi_reduction <maximumf>, %296, %cst_90 [0] : vector<16x4xf32> to vector<4xf32>
    %298 = vector.shape_cast %297 : vector<4xf32> to vector<1x4xf32>
    %299 = arith.ori %256, %51 : i1
    %cst_91 = arith.constant 0.000000e+00 : f32
    %300 = vector.broadcast %cst_91 : f32 to vector<1x4xf32>
    %301 = arith.select %299, %300, %298 : vector<1x4xf32>
    %cst_92 = arith.constant 0xFF800000 : f32
    %302 = vector.shape_cast %60 : vector<16x1xi1> to vector<16x1xi1>
    %303 = vector.broadcast %302 : vector<16x1xi1> to vector<16x4xi1>
    %304 = vector.broadcast %cst_92 : f32 to vector<16x4xf32>
    %305 = arith.select %303, %255, %304 : vector<16x4xi1>, vector<16x4xf32>
    %cst_93 = arith.constant dense<0xFF800000> : vector<4xf32>
    %306 = vector.multi_reduction <maximumf>, %305, %cst_93 [0] : vector<16x4xf32> to vector<4xf32>
    %307 = vector.shape_cast %306 : vector<4xf32> to vector<1x4xf32>
    %308 = arith.ori %256, %61 : i1
    %cst_94 = arith.constant 0.000000e+00 : f32
    %309 = vector.broadcast %cst_94 : f32 to vector<1x4xf32>
    %310 = arith.select %308, %309, %307 : vector<1x4xf32>
    %cst_95 = arith.constant 0xFF800000 : f32
    %311 = vector.shape_cast %70 : vector<16x1xi1> to vector<16x1xi1>
    %312 = vector.broadcast %311 : vector<16x1xi1> to vector<16x4xi1>
    %313 = vector.broadcast %cst_95 : f32 to vector<16x4xf32>
    %314 = arith.select %312, %255, %313 : vector<16x4xi1>, vector<16x4xf32>
    %cst_96 = arith.constant dense<0xFF800000> : vector<4xf32>
    %315 = vector.multi_reduction <maximumf>, %314, %cst_96 [0] : vector<16x4xf32> to vector<4xf32>
    %316 = vector.shape_cast %315 : vector<4xf32> to vector<1x4xf32>
    %317 = arith.ori %256, %71 : i1
    %cst_97 = arith.constant 0.000000e+00 : f32
    %318 = vector.broadcast %cst_97 : f32 to vector<1x4xf32>
    %319 = arith.select %317, %318, %316 : vector<1x4xf32>
    %320 = tpu.concatenate %265, %274, %283, %292, %301, %310, %319 in 0 : vector<1x4xf32>, vector<1x4xf32>, vector<1x4xf32>, vector<1x4xf32>, vector<1x4xf32>, vector<1x4xf32>, vector<1x4xf32> -> vector<7x4xf32>
    %c0_98 = arith.constant 0 : index
    %c14 = arith.constant 14 : index
    %c0_99 = arith.constant 0 : index
    %321 = vector.load %arg8[%c0_98, %c14, %c0_99] : memref<1x49x4xf32, #tpu.memory_space<vmem>>, vector<1x7x4xf32>
    %322 = vector.shape_cast %321 : vector<1x7x4xf32> to vector<7x4xf32>
    %323 = vector.shape_cast %320 : vector<7x4xf32> to vector<1x7x4xf32>
    tpu.vector_store %arg8[%c0_98, %c14, %c0_99], %323 {strides = array<i32>} : memref<1x49x4xf32, #tpu.memory_space<vmem>>, vector<1x7x4xf32>,
    %c3_100 = arith.constant 3 : index
    %324 = arith.index_cast %arg1 : i32 to index
    %325 = memref.load %arg5[%c3_100, %324] : memref<7x3xi32, #tpu.memory_space<smem>>
    %c3_101 = arith.constant 3 : index
    %326 = arith.index_cast %arg1 : i32 to index
    %327 = memref.load %arg6[%c3_101, %326] : memref<7x3xi32, #tpu.memory_space<smem>>
    %328 = vector.broadcast %325 : i32 to vector<1x16x1xi32>
    %329 = arith.cmpi sge, %0, %328 : vector<1x16x1xi32>
    %330 = vector.broadcast %327 : i32 to vector<1x16x1xi32>
    %331 = arith.cmpi slt, %0, %330 : vector<1x16x1xi32>
    %332 = arith.andi %329, %331 : vector<1x16x1xi1>
    %c0_102 = arith.constant 0 : index
    %c0_103 = arith.constant 0 : index
    %c0_104 = arith.constant 0 : index
    %c0_105 = arith.constant 0 : index
    %333 = vector.load %arg7[%c0_102, %c0_103, %c0_104, %c0_105] : memref<1x16x16x4xf32, #tpu.memory_space<vmem>>, vector<1x16x16x4xf32>
    %334 = vector.shape_cast %333 : vector<1x16x16x4xf32> to vector<16x16x4xf32>
    %cst_106 = arith.constant 0xFF800000 : f32
    %335 = vector.shape_cast %332 : vector<1x16x1xi1> to vector<1x16x1xi1>
    %336 = vector.broadcast %335 : vector<1x16x1xi1> to vector<16x16x4xi1>
    %337 = vector.broadcast %cst_106 : f32 to vector<16x16x4xf32>
    %338 = arith.select %336, %334, %337 : vector<16x16x4xi1>, vector<16x16x4xf32>
    %cst_107 = arith.constant dense<0xFF800000> : vector<16x4xf32>
    %339 = vector.multi_reduction <maximumf>, %338, %cst_107 [1] : vector<16x16x4xf32> to vector<16x4xf32>
    %340 = arith.cmpi sle, %327, %325 : i32
    %cst_108 = arith.constant 0xFF800000 : f32
    %341 = vector.shape_cast %10 : vector<16x1xi1> to vector<16x1xi1>
    %342 = vector.broadcast %341 : vector<16x1xi1> to vector<16x4xi1>
    %343 = vector.broadcast %cst_108 : f32 to vector<16x4xf32>
    %344 = arith.select %342, %339, %343 : vector<16x4xi1>, vector<16x4xf32>
    %cst_109 = arith.constant dense<0xFF800000> : vector<4xf32>
    %345 = vector.multi_reduction <maximumf>, %344, %cst_109 [0] : vector<16x4xf32> to vector<4xf32>
    %346 = vector.shape_cast %345 : vector<4xf32> to vector<1x4xf32>
    %347 = arith.ori %340, %11 : i1
    %cst_110 = arith.constant 0.000000e+00 : f32
    %348 = vector.broadcast %cst_110 : f32 to vector<1x4xf32>
    %349 = arith.select %347, %348, %346 : vector<1x4xf32>
    %cst_111 = arith.constant 0xFF800000 : f32
    %350 = vector.shape_cast %20 : vector<16x1xi1> to vector<16x1xi1>
    %351 = vector.broadcast %350 : vector<16x1xi1> to vector<16x4xi1>
    %352 = vector.broadcast %cst_111 : f32 to vector<16x4xf32>
    %353 = arith.select %351, %339, %352 : vector<16x4xi1>, vector<16x4xf32>
    %cst_112 = arith.constant dense<0xFF800000> : vector<4xf32>
    %354 = vector.multi_reduction <maximumf>, %353, %cst_112 [0] : vector<16x4xf32> to vector<4xf32>
    %355 = vector.shape_cast %354 : vector<4xf32> to vector<1x4xf32>
    %356 = arith.ori %340, %21 : i1
    %cst_113 = arith.constant 0.000000e+00 : f32
    %357 = vector.broadcast %cst_113 : f32 to vector<1x4xf32>
    %358 = arith.select %356, %357, %355 : vector<1x4xf32>
    %cst_114 = arith.constant 0xFF800000 : f32
    %359 = vector.shape_cast %30 : vector<16x1xi1> to vector<16x1xi1>
    %360 = vector.broadcast %359 : vector<16x1xi1> to vector<16x4xi1>
    %361 = vector.broadcast %cst_114 : f32 to vector<16x4xf32>
    %362 = arith.select %360, %339, %361 : vector<16x4xi1>, vector<16x4xf32>
    %cst_115 = arith.constant dense<0xFF800000> : vector<4xf32>
    %363 = vector.multi_reduction <maximumf>, %362, %cst_115 [0] : vector<16x4xf32> to vector<4xf32>
    %364 = vector.shape_cast %363 : vector<4xf32> to vector<1x4xf32>
    %365 = arith.ori %340, %31 : i1
    %cst_116 = arith.constant 0.000000e+00 : f32
    %366 = vector.broadcast %cst_116 : f32 to vector<1x4xf32>
    %367 = arith.select %365, %366, %364 : vector<1x4xf32>
    %cst_117 = arith.constant 0xFF800000 : f32
    %368 = vector.shape_cast %40 : vector<16x1xi1> to vector<16x1xi1>
    %369 = vector.broadcast %368 : vector<16x1xi1> to vector<16x4xi1>
    %370 = vector.broadcast %cst_117 : f32 to vector<16x4xf32>
    %371 = arith.select %369, %339, %370 : vector<16x4xi1>, vector<16x4xf32>
    %cst_118 = arith.constant dense<0xFF800000> : vector<4xf32>
    %372 = vector.multi_reduction <maximumf>, %371, %cst_118 [0] : vector<16x4xf32> to vector<4xf32>
    %373 = vector.shape_cast %372 : vector<4xf32> to vector<1x4xf32>
    %374 = arith.ori %340, %41 : i1
    %cst_119 = arith.constant 0.000000e+00 : f32
    %375 = vector.broadcast %cst_119 : f32 to vector<1x4xf32>
    %376 = arith.select %374, %375, %373 : vector<1x4xf32>
    %cst_120 = arith.constant 0xFF800000 : f32
    %377 = vector.shape_cast %50 : vector<16x1xi1> to vector<16x1xi1>
    %378 = vector.broadcast %377 : vector<16x1xi1> to vector<16x4xi1>
    %379 = vector.broadcast %cst_120 : f32 to vector<16x4xf32>
    %380 = arith.select %378, %339, %379 : vector<16x4xi1>, vector<16x4xf32>
    %cst_121 = arith.constant dense<0xFF800000> : vector<4xf32>
    %381 = vector.multi_reduction <maximumf>, %380, %cst_121 [0] : vector<16x4xf32> to vector<4xf32>
    %382 = vector.shape_cast %381 : vector<4xf32> to vector<1x4xf32>
    %383 = arith.ori %340, %51 : i1
    %cst_122 = arith.constant 0.000000e+00 : f32
    %384 = vector.broadcast %cst_122 : f32 to vector<1x4xf32>
    %385 = arith.select %383, %384, %382 : vector<1x4xf32>
    %cst_123 = arith.constant 0xFF800000 : f32
    %386 = vector.shape_cast %60 : vector<16x1xi1> to vector<16x1xi1>
    %387 = vector.broadcast %386 : vector<16x1xi1> to vector<16x4xi1>
    %388 = vector.broadcast %cst_123 : f32 to vector<16x4xf32>
    %389 = arith.select %387, %339, %388 : vector<16x4xi1>, vector<16x4xf32>
    %cst_124 = arith.constant dense<0xFF800000> : vector<4xf32>
    %390 = vector.multi_reduction <maximumf>, %389, %cst_124 [0] : vector<16x4xf32> to vector<4xf32>
    %391 = vector.shape_cast %390 : vector<4xf32> to vector<1x4xf32>
    %392 = arith.ori %340, %61 : i1
    %cst_125 = arith.constant 0.000000e+00 : f32
    %393 = vector.broadcast %cst_125 : f32 to vector<1x4xf32>
    %394 = arith.select %392, %393, %391 : vector<1x4xf32>
    %cst_126 = arith.constant 0xFF800000 : f32
    %395 = vector.shape_cast %70 : vector<16x1xi1> to vector<16x1xi1>
    %396 = vector.broadcast %395 : vector<16x1xi1> to vector<16x4xi1>
    %397 = vector.broadcast %cst_126 : f32 to vector<16x4xf32>
    %398 = arith.select %396, %339, %397 : vector<16x4xi1>, vector<16x4xf32>
    %cst_127 = arith.constant dense<0xFF800000> : vector<4xf32>
    %399 = vector.multi_reduction <maximumf>, %398, %cst_127 [0] : vector<16x4xf32> to vector<4xf32>
    %400 = vector.shape_cast %399 : vector<4xf32> to vector<1x4xf32>
    %401 = arith.ori %340, %71 : i1
    %cst_128 = arith.constant 0.000000e+00 : f32
    %402 = vector.broadcast %cst_128 : f32 to vector<1x4xf32>
    %403 = arith.select %401, %402, %400 : vector<1x4xf32>
    %404 = tpu.concatenate %349, %358, %367, %376, %385, %394, %403 in 0 : vector<1x4xf32>, vector<1x4xf32>, vector<1x4xf32>, vector<1x4xf32>, vector<1x4xf32>, vector<1x4xf32>, vector<1x4xf32> -> vector<7x4xf32>
    %c0_129 = arith.constant 0 : index
    %c21 = arith.constant 21 : index
    %c0_130 = arith.constant 0 : index
    %405 = vector.load %arg8[%c0_129, %c21, %c0_130] : memref<1x49x4xf32, #tpu.memory_space<vmem>>, vector<1x7x4xf32>
    %406 = vector.shape_cast %405 : vector<1x7x4xf32> to vector<7x4xf32>
    %407 = vector.shape_cast %404 : vector<7x4xf32> to vector<1x7x4xf32>
    tpu.vector_store %arg8[%c0_129, %c21, %c0_130], %407 {strides = array<i32>} : memref<1x49x4xf32, #tpu.memory_space<vmem>>, vector<1x7x4xf32>,
    %c4_131 = arith.constant 4 : index
    %408 = arith.index_cast %arg1 : i32 to index
    %409 = memref.load %arg5[%c4_131, %408] : memref<7x3xi32, #tpu.memory_space<smem>>
    %c4_132 = arith.constant 4 : index
    %410 = arith.index_cast %arg1 : i32 to index
    %411 = memref.load %arg6[%c4_132, %410] : memref<7x3xi32, #tpu.memory_space<smem>>
    %412 = vector.broadcast %409 : i32 to vector<1x16x1xi32>
    %413 = arith.cmpi sge, %0, %412 : vector<1x16x1xi32>
    %414 = vector.broadcast %411 : i32 to vector<1x16x1xi32>
    %415 = arith.cmpi slt, %0, %414 : vector<1x16x1xi32>
    %416 = arith.andi %413, %415 : vector<1x16x1xi1>
    %c0_133 = arith.constant 0 : index
    %c0_134 = arith.constant 0 : index
    %c0_135 = arith.constant 0 : index
    %c0_136 = arith.constant 0 : index
    %417 = vector.load %arg7[%c0_133, %c0_134, %c0_135, %c0_136] : memref<1x16x16x4xf32, #tpu.memory_space<vmem>>, vector<1x16x16x4xf32>
    %418 = vector.shape_cast %417 : vector<1x16x16x4xf32> to vector<16x16x4xf32>
    %cst_137 = arith.constant 0xFF800000 : f32
    %419 = vector.shape_cast %416 : vector<1x16x1xi1> to vector<1x16x1xi1>
    %420 = vector.broadcast %419 : vector<1x16x1xi1> to vector<16x16x4xi1>
    %421 = vector.broadcast %cst_137 : f32 to vector<16x16x4xf32>
    %422 = arith.select %420, %418, %421 : vector<16x16x4xi1>, vector<16x16x4xf32>
    %cst_138 = arith.constant dense<0xFF800000> : vector<16x4xf32>
    %423 = vector.multi_reduction <maximumf>, %422, %cst_138 [1] : vector<16x16x4xf32> to vector<16x4xf32>
    %424 = arith.cmpi sle, %411, %409 : i32
    %cst_139 = arith.constant 0xFF800000 : f32
    %425 = vector.shape_cast %10 : vector<16x1xi1> to vector<16x1xi1>
    %426 = vector.broadcast %425 : vector<16x1xi1> to vector<16x4xi1>
    %427 = vector.broadcast %cst_139 : f32 to vector<16x4xf32>
    %428 = arith.select %426, %423, %427 : vector<16x4xi1>, vector<16x4xf32>
    %cst_140 = arith.constant dense<0xFF800000> : vector<4xf32>
    %429 = vector.multi_reduction <maximumf>, %428, %cst_140 [0] : vector<16x4xf32> to vector<4xf32>
    %430 = vector.shape_cast %429 : vector<4xf32> to vector<1x4xf32>
    %431 = arith.ori %424, %11 : i1
    %cst_141 = arith.constant 0.000000e+00 : f32
    %432 = vector.broadcast %cst_141 : f32 to vector<1x4xf32>
    %433 = arith.select %431, %432, %430 : vector<1x4xf32>
    %cst_142 = arith.constant 0xFF800000 : f32
    %434 = vector.shape_cast %20 : vector<16x1xi1> to vector<16x1xi1>
    %435 = vector.broadcast %434 : vector<16x1xi1> to vector<16x4xi1>
    %436 = vector.broadcast %cst_142 : f32 to vector<16x4xf32>
    %437 = arith.select %435, %423, %436 : vector<16x4xi1>, vector<16x4xf32>
    %cst_143 = arith.constant dense<0xFF800000> : vector<4xf32>
    %438 = vector.multi_reduction <maximumf>, %437, %cst_143 [0] : vector<16x4xf32> to vector<4xf32>
    %439 = vector.shape_cast %438 : vector<4xf32> to vector<1x4xf32>
    %440 = arith.ori %424, %21 : i1
    %cst_144 = arith.constant 0.000000e+00 : f32
    %441 = vector.broadcast %cst_144 : f32 to vector<1x4xf32>
    %442 = arith.select %440, %441, %439 : vector<1x4xf32>
    %cst_145 = arith.constant 0xFF800000 : f32
    %443 = vector.shape_cast %30 : vector<16x1xi1> to vector<16x1xi1>
    %444 = vector.broadcast %443 : vector<16x1xi1> to vector<16x4xi1>
    %445 = vector.broadcast %cst_145 : f32 to vector<16x4xf32>
    %446 = arith.select %444, %423, %445 : vector<16x4xi1>, vector<16x4xf32>
    %cst_146 = arith.constant dense<0xFF800000> : vector<4xf32>
    %447 = vector.multi_reduction <maximumf>, %446, %cst_146 [0] : vector<16x4xf32> to vector<4xf32>
    %448 = vector.shape_cast %447 : vector<4xf32> to vector<1x4xf32>
    %449 = arith.ori %424, %31 : i1
    %cst_147 = arith.constant 0.000000e+00 : f32
    %450 = vector.broadcast %cst_147 : f32 to vector<1x4xf32>
    %451 = arith.select %449, %450, %448 : vector<1x4xf32>
    %cst_148 = arith.constant 0xFF800000 : f32
    %452 = vector.shape_cast %40 : vector<16x1xi1> to vector<16x1xi1>
    %453 = vector.broadcast %452 : vector<16x1xi1> to vector<16x4xi1>
    %454 = vector.broadcast %cst_148 : f32 to vector<16x4xf32>
    %455 = arith.select %453, %423, %454 : vector<16x4xi1>, vector<16x4xf32>
    %cst_149 = arith.constant dense<0xFF800000> : vector<4xf32>
    %456 = vector.multi_reduction <maximumf>, %455, %cst_149 [0] : vector<16x4xf32> to vector<4xf32>
    %457 = vector.shape_cast %456 : vector<4xf32> to vector<1x4xf32>
    %458 = arith.ori %424, %41 : i1
    %cst_150 = arith.constant 0.000000e+00 : f32
    %459 = vector.broadcast %cst_150 : f32 to vector<1x4xf32>
    %460 = arith.select %458, %459, %457 : vector<1x4xf32>
    %cst_151 = arith.constant 0xFF800000 : f32
    %461 = vector.shape_cast %50 : vector<16x1xi1> to vector<16x1xi1>
    %462 = vector.broadcast %461 : vector<16x1xi1> to vector<16x4xi1>
    %463 = vector.broadcast %cst_151 : f32 to vector<16x4xf32>
    %464 = arith.select %462, %423, %463 : vector<16x4xi1>, vector<16x4xf32>
    %cst_152 = arith.constant dense<0xFF800000> : vector<4xf32>
    %465 = vector.multi_reduction <maximumf>, %464, %cst_152 [0] : vector<16x4xf32> to vector<4xf32>
    %466 = vector.shape_cast %465 : vector<4xf32> to vector<1x4xf32>
    %467 = arith.ori %424, %51 : i1
    %cst_153 = arith.constant 0.000000e+00 : f32
    %468 = vector.broadcast %cst_153 : f32 to vector<1x4xf32>
    %469 = arith.select %467, %468, %466 : vector<1x4xf32>
    %cst_154 = arith.constant 0xFF800000 : f32
    %470 = vector.shape_cast %60 : vector<16x1xi1> to vector<16x1xi1>
    %471 = vector.broadcast %470 : vector<16x1xi1> to vector<16x4xi1>
    %472 = vector.broadcast %cst_154 : f32 to vector<16x4xf32>
    %473 = arith.select %471, %423, %472 : vector<16x4xi1>, vector<16x4xf32>
    %cst_155 = arith.constant dense<0xFF800000> : vector<4xf32>
    %474 = vector.multi_reduction <maximumf>, %473, %cst_155 [0] : vector<16x4xf32> to vector<4xf32>
    %475 = vector.shape_cast %474 : vector<4xf32> to vector<1x4xf32>
    %476 = arith.ori %424, %61 : i1
    %cst_156 = arith.constant 0.000000e+00 : f32
    %477 = vector.broadcast %cst_156 : f32 to vector<1x4xf32>
    %478 = arith.select %476, %477, %475 : vector<1x4xf32>
    %cst_157 = arith.constant 0xFF800000 : f32
    %479 = vector.shape_cast %70 : vector<16x1xi1> to vector<16x1xi1>
    %480 = vector.broadcast %479 : vector<16x1xi1> to vector<16x4xi1>
    %481 = vector.broadcast %cst_157 : f32 to vector<16x4xf32>
    %482 = arith.select %480, %423, %481 : vector<16x4xi1>, vector<16x4xf32>
    %cst_158 = arith.constant dense<0xFF800000> : vector<4xf32>
    %483 = vector.multi_reduction <maximumf>, %482, %cst_158 [0] : vector<16x4xf32> to vector<4xf32>
    %484 = vector.shape_cast %483 : vector<4xf32> to vector<1x4xf32>
    %485 = arith.ori %424, %71 : i1
    %cst_159 = arith.constant 0.000000e+00 : f32
    %486 = vector.broadcast %cst_159 : f32 to vector<1x4xf32>
    %487 = arith.select %485, %486, %484 : vector<1x4xf32>
    %488 = tpu.concatenate %433, %442, %451, %460, %469, %478, %487 in 0 : vector<1x4xf32>, vector<1x4xf32>, vector<1x4xf32>, vector<1x4xf32>, vector<1x4xf32>, vector<1x4xf32>, vector<1x4xf32> -> vector<7x4xf32>
    %c0_160 = arith.constant 0 : index
    %c28 = arith.constant 28 : index
    %c0_161 = arith.constant 0 : index
    %489 = vector.load %arg8[%c0_160, %c28, %c0_161] : memref<1x49x4xf32, #tpu.memory_space<vmem>>, vector<1x7x4xf32>
    %490 = vector.shape_cast %489 : vector<1x7x4xf32> to vector<7x4xf32>
    %491 = vector.shape_cast %488 : vector<7x4xf32> to vector<1x7x4xf32>
    tpu.vector_store %arg8[%c0_160, %c28, %c0_161], %491 {strides = array<i32>} : memref<1x49x4xf32, #tpu.memory_space<vmem>>, vector<1x7x4xf32>,
    %c5_162 = arith.constant 5 : index
    %492 = arith.index_cast %arg1 : i32 to index
    %493 = memref.load %arg5[%c5_162, %492] : memref<7x3xi32, #tpu.memory_space<smem>>
    %c5_163 = arith.constant 5 : index
    %494 = arith.index_cast %arg1 : i32 to index
    %495 = memref.load %arg6[%c5_163, %494] : memref<7x3xi32, #tpu.memory_space<smem>>
    %496 = vector.broadcast %493 : i32 to vector<1x16x1xi32>
    %497 = arith.cmpi sge, %0, %496 : vector<1x16x1xi32>
    %498 = vector.broadcast %495 : i32 to vector<1x16x1xi32>
    %499 = arith.cmpi slt, %0, %498 : vector<1x16x1xi32>
    %500 = arith.andi %497, %499 : vector<1x16x1xi1>
    %c0_164 = arith.constant 0 : index
    %c0_165 = arith.constant 0 : index
    %c0_166 = arith.constant 0 : index
    %c0_167 = arith.constant 0 : index
    %501 = vector.load %arg7[%c0_164, %c0_165, %c0_166, %c0_167] : memref<1x16x16x4xf32, #tpu.memory_space<vmem>>, vector<1x16x16x4xf32>
    %502 = vector.shape_cast %501 : vector<1x16x16x4xf32> to vector<16x16x4xf32>
    %cst_168 = arith.constant 0xFF800000 : f32
    %503 = vector.shape_cast %500 : vector<1x16x1xi1> to vector<1x16x1xi1>
    %504 = vector.broadcast %503 : vector<1x16x1xi1> to vector<16x16x4xi1>
    %505 = vector.broadcast %cst_168 : f32 to vector<16x16x4xf32>
    %506 = arith.select %504, %502, %505 : vector<16x16x4xi1>, vector<16x16x4xf32>
    %cst_169 = arith.constant dense<0xFF800000> : vector<16x4xf32>
    %507 = vector.multi_reduction <maximumf>, %506, %cst_169 [1] : vector<16x16x4xf32> to vector<16x4xf32>
    %508 = arith.cmpi sle, %495, %493 : i32
    %cst_170 = arith.constant 0xFF800000 : f32
    %509 = vector.shape_cast %10 : vector<16x1xi1> to vector<16x1xi1>
    %510 = vector.broadcast %509 : vector<16x1xi1> to vector<16x4xi1>
    %511 = vector.broadcast %cst_170 : f32 to vector<16x4xf32>
    %512 = arith.select %510, %507, %511 : vector<16x4xi1>, vector<16x4xf32>
    %cst_171 = arith.constant dense<0xFF800000> : vector<4xf32>
    %513 = vector.multi_reduction <maximumf>, %512, %cst_171 [0] : vector<16x4xf32> to vector<4xf32>
    %514 = vector.shape_cast %513 : vector<4xf32> to vector<1x4xf32>
    %515 = arith.ori %508, %11 : i1
    %cst_172 = arith.constant 0.000000e+00 : f32
    %516 = vector.broadcast %cst_172 : f32 to vector<1x4xf32>
    %517 = arith.select %515, %516, %514 : vector<1x4xf32>
    %cst_173 = arith.constant 0xFF800000 : f32
    %518 = vector.shape_cast %20 : vector<16x1xi1> to vector<16x1xi1>
    %519 = vector.broadcast %518 : vector<16x1xi1> to vector<16x4xi1>
    %520 = vector.broadcast %cst_173 : f32 to vector<16x4xf32>
    %521 = arith.select %519, %507, %520 : vector<16x4xi1>, vector<16x4xf32>
    %cst_174 = arith.constant dense<0xFF800000> : vector<4xf32>
    %522 = vector.multi_reduction <maximumf>, %521, %cst_174 [0] : vector<16x4xf32> to vector<4xf32>
    %523 = vector.shape_cast %522 : vector<4xf32> to vector<1x4xf32>
    %524 = arith.ori %508, %21 : i1
    %cst_175 = arith.constant 0.000000e+00 : f32
    %525 = vector.broadcast %cst_175 : f32 to vector<1x4xf32>
    %526 = arith.select %524, %525, %523 : vector<1x4xf32>
    %cst_176 = arith.constant 0xFF800000 : f32
    %527 = vector.shape_cast %30 : vector<16x1xi1> to vector<16x1xi1>
    %528 = vector.broadcast %527 : vector<16x1xi1> to vector<16x4xi1>
    %529 = vector.broadcast %cst_176 : f32 to vector<16x4xf32>
    %530 = arith.select %528, %507, %529 : vector<16x4xi1>, vector<16x4xf32>
    %cst_177 = arith.constant dense<0xFF800000> : vector<4xf32>
    %531 = vector.multi_reduction <maximumf>, %530, %cst_177 [0] : vector<16x4xf32> to vector<4xf32>
    %532 = vector.shape_cast %531 : vector<4xf32> to vector<1x4xf32>
    %533 = arith.ori %508, %31 : i1
    %cst_178 = arith.constant 0.000000e+00 : f32
    %534 = vector.broadcast %cst_178 : f32 to vector<1x4xf32>
    %535 = arith.select %533, %534, %532 : vector<1x4xf32>
    %cst_179 = arith.constant 0xFF800000 : f32
    %536 = vector.shape_cast %40 : vector<16x1xi1> to vector<16x1xi1>
    %537 = vector.broadcast %536 : vector<16x1xi1> to vector<16x4xi1>
    %538 = vector.broadcast %cst_179 : f32 to vector<16x4xf32>
    %539 = arith.select %537, %507, %538 : vector<16x4xi1>, vector<16x4xf32>
    %cst_180 = arith.constant dense<0xFF800000> : vector<4xf32>
    %540 = vector.multi_reduction <maximumf>, %539, %cst_180 [0] : vector<16x4xf32> to vector<4xf32>
    %541 = vector.shape_cast %540 : vector<4xf32> to vector<1x4xf32>
    %542 = arith.ori %508, %41 : i1
    %cst_181 = arith.constant 0.000000e+00 : f32
    %543 = vector.broadcast %cst_181 : f32 to vector<1x4xf32>
    %544 = arith.select %542, %543, %541 : vector<1x4xf32>
    %cst_182 = arith.constant 0xFF800000 : f32
    %545 = vector.shape_cast %50 : vector<16x1xi1> to vector<16x1xi1>
    %546 = vector.broadcast %545 : vector<16x1xi1> to vector<16x4xi1>
    %547 = vector.broadcast %cst_182 : f32 to vector<16x4xf32>
    %548 = arith.select %546, %507, %547 : vector<16x4xi1>, vector<16x4xf32>
    %cst_183 = arith.constant dense<0xFF800000> : vector<4xf32>
    %549 = vector.multi_reduction <maximumf>, %548, %cst_183 [0] : vector<16x4xf32> to vector<4xf32>
    %550 = vector.shape_cast %549 : vector<4xf32> to vector<1x4xf32>
    %551 = arith.ori %508, %51 : i1
    %cst_184 = arith.constant 0.000000e+00 : f32
    %552 = vector.broadcast %cst_184 : f32 to vector<1x4xf32>
    %553 = arith.select %551, %552, %550 : vector<1x4xf32>
    %cst_185 = arith.constant 0xFF800000 : f32
    %554 = vector.shape_cast %60 : vector<16x1xi1> to vector<16x1xi1>
    %555 = vector.broadcast %554 : vector<16x1xi1> to vector<16x4xi1>
    %556 = vector.broadcast %cst_185 : f32 to vector<16x4xf32>
    %557 = arith.select %555, %507, %556 : vector<16x4xi1>, vector<16x4xf32>
    %cst_186 = arith.constant dense<0xFF800000> : vector<4xf32>
    %558 = vector.multi_reduction <maximumf>, %557, %cst_186 [0] : vector<16x4xf32> to vector<4xf32>
    %559 = vector.shape_cast %558 : vector<4xf32> to vector<1x4xf32>
    %560 = arith.ori %508, %61 : i1
    %cst_187 = arith.constant 0.000000e+00 : f32
    %561 = vector.broadcast %cst_187 : f32 to vector<1x4xf32>
    %562 = arith.select %560, %561, %559 : vector<1x4xf32>
    %cst_188 = arith.constant 0xFF800000 : f32
    %563 = vector.shape_cast %70 : vector<16x1xi1> to vector<16x1xi1>
    %564 = vector.broadcast %563 : vector<16x1xi1> to vector<16x4xi1>
    %565 = vector.broadcast %cst_188 : f32 to vector<16x4xf32>
    %566 = arith.select %564, %507, %565 : vector<16x4xi1>, vector<16x4xf32>
    %cst_189 = arith.constant dense<0xFF800000> : vector<4xf32>
    %567 = vector.multi_reduction <maximumf>, %566, %cst_189 [0] : vector<16x4xf32> to vector<4xf32>
    %568 = vector.shape_cast %567 : vector<4xf32> to vector<1x4xf32>
    %569 = arith.ori %508, %71 : i1
    %cst_190 = arith.constant 0.000000e+00 : f32
    %570 = vector.broadcast %cst_190 : f32 to vector<1x4xf32>
    %571 = arith.select %569, %570, %568 : vector<1x4xf32>
    %572 = tpu.concatenate %517, %526, %535, %544, %553, %562, %571 in 0 : vector<1x4xf32>, vector<1x4xf32>, vector<1x4xf32>, vector<1x4xf32>, vector<1x4xf32>, vector<1x4xf32>, vector<1x4xf32> -> vector<7x4xf32>
    %c0_191 = arith.constant 0 : index
    %c35 = arith.constant 35 : index
    %c0_192 = arith.constant 0 : index
    %573 = vector.load %arg8[%c0_191, %c35, %c0_192] : memref<1x49x4xf32, #tpu.memory_space<vmem>>, vector<1x7x4xf32>
    %574 = vector.shape_cast %573 : vector<1x7x4xf32> to vector<7x4xf32>
    %575 = vector.shape_cast %572 : vector<7x4xf32> to vector<1x7x4xf32>
    tpu.vector_store %arg8[%c0_191, %c35, %c0_192], %575 {strides = array<i32>} : memref<1x49x4xf32, #tpu.memory_space<vmem>>, vector<1x7x4xf32>,
    %c6_193 = arith.constant 6 : index
    %576 = arith.index_cast %arg1 : i32 to index
    %577 = memref.load %arg5[%c6_193, %576] : memref<7x3xi32, #tpu.memory_space<smem>>
    %c6_194 = arith.constant 6 : index
    %578 = arith.index_cast %arg1 : i32 to index
    %579 = memref.load %arg6[%c6_194, %578] : memref<7x3xi32, #tpu.memory_space<smem>>
    %580 = vector.broadcast %577 : i32 to vector<1x16x1xi32>
    %581 = arith.cmpi sge, %0, %580 : vector<1x16x1xi32>
    %582 = vector.broadcast %579 : i32 to vector<1x16x1xi32>
    %583 = arith.cmpi slt, %0, %582 : vector<1x16x1xi32>
    %584 = arith.andi %581, %583 : vector<1x16x1xi1>
    %c0_195 = arith.constant 0 : index
    %c0_196 = arith.constant 0 : index
    %c0_197 = arith.constant 0 : index
    %c0_198 = arith.constant 0 : index
    %585 = vector.load %arg7[%c0_195, %c0_196, %c0_197, %c0_198] : memref<1x16x16x4xf32, #tpu.memory_space<vmem>>, vector<1x16x16x4xf32>
    %586 = vector.shape_cast %585 : vector<1x16x16x4xf32> to vector<16x16x4xf32>
    %cst_199 = arith.constant 0xFF800000 : f32
    %587 = vector.shape_cast %584 : vector<1x16x1xi1> to vector<1x16x1xi1>
    %588 = vector.broadcast %587 : vector<1x16x1xi1> to vector<16x16x4xi1>
    %589 = vector.broadcast %cst_199 : f32 to vector<16x16x4xf32>
    %590 = arith.select %588, %586, %589 : vector<16x16x4xi1>, vector<16x16x4xf32>
    %cst_200 = arith.constant dense<0xFF800000> : vector<16x4xf32>
    %591 = vector.multi_reduction <maximumf>, %590, %cst_200 [1] : vector<16x16x4xf32> to vector<16x4xf32>
    %592 = arith.cmpi sle, %579, %577 : i32
    %cst_201 = arith.constant 0xFF800000 : f32
    %593 = vector.shape_cast %10 : vector<16x1xi1> to vector<16x1xi1>
    %594 = vector.broadcast %593 : vector<16x1xi1> to vector<16x4xi1>
    %595 = vector.broadcast %cst_201 : f32 to vector<16x4xf32>
    %596 = arith.select %594, %591, %595 : vector<16x4xi1>, vector<16x4xf32>
    %cst_202 = arith.constant dense<0xFF800000> : vector<4xf32>
    %597 = vector.multi_reduction <maximumf>, %596, %cst_202 [0] : vector<16x4xf32> to vector<4xf32>
    %598 = vector.shape_cast %597 : vector<4xf32> to vector<1x4xf32>
    %599 = arith.ori %592, %11 : i1
    %cst_203 = arith.constant 0.000000e+00 : f32
    %600 = vector.broadcast %cst_203 : f32 to vector<1x4xf32>
    %601 = arith.select %599, %600, %598 : vector<1x4xf32>
    %cst_204 = arith.constant 0xFF800000 : f32
    %602 = vector.shape_cast %20 : vector<16x1xi1> to vector<16x1xi1>
    %603 = vector.broadcast %602 : vector<16x1xi1> to vector<16x4xi1>
    %604 = vector.broadcast %cst_204 : f32 to vector<16x4xf32>
    %605 = arith.select %603, %591, %604 : vector<16x4xi1>, vector<16x4xf32>
    %cst_205 = arith.constant dense<0xFF800000> : vector<4xf32>
    %606 = vector.multi_reduction <maximumf>, %605, %cst_205 [0] : vector<16x4xf32> to vector<4xf32>
    %607 = vector.shape_cast %606 : vector<4xf32> to vector<1x4xf32>
    %608 = arith.ori %592, %21 : i1
    %cst_206 = arith.constant 0.000000e+00 : f32
    %609 = vector.broadcast %cst_206 : f32 to vector<1x4xf32>
    %610 = arith.select %608, %609, %607 : vector<1x4xf32>
    %cst_207 = arith.constant 0xFF800000 : f32
    %611 = vector.shape_cast %30 : vector<16x1xi1> to vector<16x1xi1>
    %612 = vector.broadcast %611 : vector<16x1xi1> to vector<16x4xi1>
    %613 = vector.broadcast %cst_207 : f32 to vector<16x4xf32>
    %614 = arith.select %612, %591, %613 : vector<16x4xi1>, vector<16x4xf32>
    %cst_208 = arith.constant dense<0xFF800000> : vector<4xf32>
    %615 = vector.multi_reduction <maximumf>, %614, %cst_208 [0] : vector<16x4xf32> to vector<4xf32>
    %616 = vector.shape_cast %615 : vector<4xf32> to vector<1x4xf32>
    %617 = arith.ori %592, %31 : i1
    %cst_209 = arith.constant 0.000000e+00 : f32
    %618 = vector.broadcast %cst_209 : f32 to vector<1x4xf32>
    %619 = arith.select %617, %618, %616 : vector<1x4xf32>
    %cst_210 = arith.constant 0xFF800000 : f32
    %620 = vector.shape_cast %40 : vector<16x1xi1> to vector<16x1xi1>
    %621 = vector.broadcast %620 : vector<16x1xi1> to vector<16x4xi1>
    %622 = vector.broadcast %cst_210 : f32 to vector<16x4xf32>
    %623 = arith.select %621, %591, %622 : vector<16x4xi1>, vector<16x4xf32>
    %cst_211 = arith.constant dense<0xFF800000> : vector<4xf32>
    %624 = vector.multi_reduction <maximumf>, %623, %cst_211 [0] : vector<16x4xf32> to vector<4xf32>
    %625 = vector.shape_cast %624 : vector<4xf32> to vector<1x4xf32>
    %626 = arith.ori %592, %41 : i1
    %cst_212 = arith.constant 0.000000e+00 : f32
    %627 = vector.broadcast %cst_212 : f32 to vector<1x4xf32>
    %628 = arith.select %626, %627, %625 : vector<1x4xf32>
    %cst_213 = arith.constant 0xFF800000 : f32
    %629 = vector.shape_cast %50 : vector<16x1xi1> to vector<16x1xi1>
    %630 = vector.broadcast %629 : vector<16x1xi1> to vector<16x4xi1>
    %631 = vector.broadcast %cst_213 : f32 to vector<16x4xf32>
    %632 = arith.select %630, %591, %631 : vector<16x4xi1>, vector<16x4xf32>
    %cst_214 = arith.constant dense<0xFF800000> : vector<4xf32>
    %633 = vector.multi_reduction <maximumf>, %632, %cst_214 [0] : vector<16x4xf32> to vector<4xf32>
    %634 = vector.shape_cast %633 : vector<4xf32> to vector<1x4xf32>
    %635 = arith.ori %592, %51 : i1
    %cst_215 = arith.constant 0.000000e+00 : f32
    %636 = vector.broadcast %cst_215 : f32 to vector<1x4xf32>
    %637 = arith.select %635, %636, %634 : vector<1x4xf32>
    %cst_216 = arith.constant 0xFF800000 : f32
    %638 = vector.shape_cast %60 : vector<16x1xi1> to vector<16x1xi1>
    %639 = vector.broadcast %638 : vector<16x1xi1> to vector<16x4xi1>
    %640 = vector.broadcast %cst_216 : f32 to vector<16x4xf32>
    %641 = arith.select %639, %591, %640 : vector<16x4xi1>, vector<16x4xf32>
    %cst_217 = arith.constant dense<0xFF800000> : vector<4xf32>
    %642 = vector.multi_reduction <maximumf>, %641, %cst_217 [0] : vector<16x4xf32> to vector<4xf32>
    %643 = vector.shape_cast %642 : vector<4xf32> to vector<1x4xf32>
    %644 = arith.ori %592, %61 : i1
    %cst_218 = arith.constant 0.000000e+00 : f32
    %645 = vector.broadcast %cst_218 : f32 to vector<1x4xf32>
    %646 = arith.select %644, %645, %643 : vector<1x4xf32>
    %cst_219 = arith.constant 0xFF800000 : f32
    %647 = vector.shape_cast %70 : vector<16x1xi1> to vector<16x1xi1>
    %648 = vector.broadcast %647 : vector<16x1xi1> to vector<16x4xi1>
    %649 = vector.broadcast %cst_219 : f32 to vector<16x4xf32>
    %650 = arith.select %648, %591, %649 : vector<16x4xi1>, vector<16x4xf32>
    %cst_220 = arith.constant dense<0xFF800000> : vector<4xf32>
    %651 = vector.multi_reduction <maximumf>, %650, %cst_220 [0] : vector<16x4xf32> to vector<4xf32>
    %652 = vector.shape_cast %651 : vector<4xf32> to vector<1x4xf32>
    %653 = arith.ori %592, %71 : i1
    %cst_221 = arith.constant 0.000000e+00 : f32
    %654 = vector.broadcast %cst_221 : f32 to vector<1x4xf32>
    %655 = arith.select %653, %654, %652 : vector<1x4xf32>
    %656 = tpu.concatenate %601, %610, %619, %628, %637, %646, %655 in 0 : vector<1x4xf32>, vector<1x4xf32>, vector<1x4xf32>, vector<1x4xf32>, vector<1x4xf32>, vector<1x4xf32>, vector<1x4xf32> -> vector<7x4xf32>
    %c0_222 = arith.constant 0 : index
    %c42 = arith.constant 42 : index
    %c0_223 = arith.constant 0 : index
    %657 = vector.load %arg8[%c0_222, %c42, %c0_223] : memref<1x49x4xf32, #tpu.memory_space<vmem>>, vector<1x7x4xf32>
    %658 = vector.shape_cast %657 : vector<1x7x4xf32> to vector<7x4xf32>
    %659 = vector.shape_cast %656 : vector<7x4xf32> to vector<1x7x4xf32>
    tpu.vector_store %arg8[%c0_222, %c42, %c0_223], %659 {strides = array<i32>} : memref<1x49x4xf32, #tpu.memory_space<vmem>>, vector<1x7x4xf32>,
    return
  }
  func.func @transform_0(%arg0: i32, %arg1: i32, %arg2: memref<3xi32, #tpu.memory_space<smem>>, %arg3: memref<7x3xi32, #tpu.memory_space<smem>>, %arg4: memref<7x3xi32, #tpu.memory_space<smem>>, %arg5: memref<7x3xi32, #tpu.memory_space<smem>>, %arg6: memref<7x3xi32, #tpu.memory_space<smem>>) -> (i32, i32, i32, i32) {
    %0 = arith.index_cast %arg1 : i32 to index
    %1 = memref.load %arg2[%0] : memref<3xi32, #tpu.memory_space<smem>>
    %c0_i32 = arith.constant 0 : i32
    %c0_i32_0 = arith.constant 0 : i32
    %c0_i32_1 = arith.constant 0 : i32
    return %1, %c0_i32, %c0_i32_0, %arg0 : i32, i32, i32, i32
  }
  func.func @transform_1(%arg0: i32, %arg1: i32, %arg2: memref<3xi32, #tpu.memory_space<smem>>, %arg3: memref<7x3xi32, #tpu.memory_space<smem>>, %arg4: memref<7x3xi32, #tpu.memory_space<smem>>, %arg5: memref<7x3xi32, #tpu.memory_space<smem>>, %arg6: memref<7x3xi32, #tpu.memory_space<smem>>) -> (i32, i32, i32) {
    %c0_i32 = arith.constant 0 : i32
    %c0_i32_0 = arith.constant 0 : i32
    return %arg1, %c0_i32, %arg0 : i32, i32, i32
  }
}

</mosaic_0001>

<llo_original>
// kernel: tpu_custom_call.1
$region0: #{tpu_custom_call.1}
  #allocation0 [shape = 'u32[]', space=smem, size = 0x4, offset = 0x4, fixed_abs, tag = 'smem constant byte address 0x4 - core index']
  #allocation1 [shape = 'u32[72,128]{1,0:T(1,128)}', space=vmem, size = 0x9000, scoped, tag = 'internal scratch']
  #allocation2 [shape = 's32[1]{0}', space=sflag, size = 0x4, scoped, tag = 'scoped memory for tpu_custom_call.1']
  #allocation3 [shape = 'u8[512]{0}', space=smem, size = 0x200, scoped, tag = 'prefetched SMEM operand 0']
  #allocation4 [shape = 'u8[4096]{0}', space=smem, size = 0x1000, scoped, tag = 'prefetched SMEM operand 1']
  #allocation5 [shape = 'u8[4096]{0}', space=smem, size = 0x1000, scoped, tag = 'prefetched SMEM operand 2']
  #allocation6 [shape = 'u8[4096]{0}', space=smem, size = 0x1000, scoped, tag = 'prefetched SMEM operand 3']
  #allocation7 [shape = 'u8[4096]{0}', space=smem, size = 0x1000, scoped, tag = 'prefetched SMEM operand 4']
  %s0 = inlined_call_operand.vmem [shape: s32[3], index: 0, kind: input, shape index: {}]
  %s1 = inlined_call_operand.vmem [shape: s32[7,3], index: 1, kind: input, shape index: {}]
  %s2 = inlined_call_operand.vmem [shape: s32[7,3], index: 2, kind: input, shape index: {}]
  %s3 = inlined_call_operand.vmem [shape: s32[7,3], index: 3, kind: input, shape index: {}]
  %s4 = inlined_call_operand.vmem [shape: s32[7,3], index: 4, kind: input, shape index: {}]
  %s5 = inlined_call_operand.vmem [shape: f32[2,16,16,4], index: 5, kind: input, shape index: {}]
  %s6 = inlined_call_operand.vmem [shape: f32[3,49,4], index: 6, kind: output, shape index: {}]
  %s7 = sld [smem:[#allocation0]]
  $region37: #{tpu_custom_call.1} parent=0
    _
  %s9 = ssub.s32 1, %s7
  %s10 = scalar_select 0, %s9, %s7
  %s12 = sshll.u32 %s0, 4
  %s13 = int_to_ptr.vmem [resolvable:$true] %s12
  %15 = dma.vmem_to_smem %s13, 16, [#allocation3], [#allocation2]
  %s17 = sshll.u32 %s1, 4
  %s18 = int_to_ptr.vmem [resolvable:$true] %s17
  %20 = dma.vmem_to_smem %s18, 128, [#allocation4], [#allocation2]
  %s22 = sshll.u32 %s2, 4
  %s23 = int_to_ptr.vmem [resolvable:$true] %s22
  %25 = dma.vmem_to_smem %s23, 128, [#allocation5], [#allocation2]
  %s27 = sshll.u32 %s3, 4
  %s28 = int_to_ptr.vmem [resolvable:$true] %s27
  %30 = dma.vmem_to_smem %s28, 128, [#allocation6], [#allocation2]
  %s32 = sshll.u32 %s4, 4
  %s33 = int_to_ptr.vmem [resolvable:$true] %s32
  %35 = dma.vmem_to_smem %s33, 128, [#allocation7], [#allocation2]
  %37 = dma.done [#allocation2], 528
  %38 = sfence
  loop: start=0, step=1, limit=5
  $region2: #{tpu_custom_call.1} parent=0 // loop_pre_header
    _
  $region3: #{tpu_custom_call.1} parent=0 // loop_header
    %s40 = sphi 0, %s44
    %p41 = scmp.ge.s32.totalorder %s40, 5
    %s47 = sphi 0, %s59
    %s48 = sphi 0, %s55
    %s49 = sphi 0, %s47
    %s50 = sphi 0, %s48
    %s51 = sphi 0, %s49
    %s52 = sphi 0, %s50
    %s66 = sphi 0, %s68
    %s69 = sphi 0, %s66
    %s70 = sphi 0, %s69
    %s86 = sphi 0, %s70
    %s94 = sphi 0, %s96
    %s97 = sphi 0, %s94
    %s98 = sphi 0, %s97
    %s114 = sphi 0, %s98
  $region4: #{tpu_custom_call.1} parent=0 // loop_header_branch
    %43 = sbr.rel (%p41) target = $region8
  $region5: #{tpu_custom_call.1} parent=0 // loop_body
    %s45 = ssub.s32 %s40, 1
    %s46 = ssub.s32 %s40, 2
    %s53 = sadd.s32 1, %s48
    %p54 = scmp.ge.s32.totalorder %s53, 3
    %s55 = scalar_select %p54, 0, %s53
    %s56 = sadd.s32 1, %s47
    %s57 = scalar_select %p54, %s56, %s47
    %p58 = scmp.ge.s32.totalorder %s57, 1
    %s59 = scalar_select %p58, 0, %s57
    %s60 = sld [smem:[#allocation3 + %s48]]
    %s61 = sld [smem:[#allocation3 + %s55]]
    %s62 = ssub.s32 %s60, %s61
    %s63 = ssub.s32 %s47, %s59
    %s64 = sor.u32 %s62, %s63
    %p65 = scmp.eq.s32.totalorder %s64, 0
    %s67 = sadd.s32 %s66, 1
    %s68 = scalar_select %p65, %s66, %s67
    %p71 = pneg %p65
    %p72 = scmp.eq.s32.totalorder %s40, 2
    %p73 = por %p71, %p72
    %p74 = scmp.ne.s32.totalorder %s66, %s69
    %p75 = scmp.eq.s32.totalorder %s40, 0
    %p76 = por %p74, %p75
    %p77 = scmp.ne.s32.totalorder %s66, %s69
    %p78 = scmp.eq.s32.totalorder %s45, 2
    %p79 = por %p77, %p78
    %p80 = scmp.ne.s32.totalorder %s69, %s70
    %p81 = scmp.eq.s32.totalorder %s45, 0
    %p82 = por %p80, %p81
    %p83 = scmp.ne.s32.totalorder %s69, %s70
    %p84 = scmp.eq.s32.totalorder %s46, 2
    %p85 = por %p83, %p84
    %p87 = scmp.ne.s32.totalorder %s70, %s86
    %p88 = scmp.eq.s32.totalorder %s46, 0
    %p89 = por %p87, %p88
    %s90 = ssub.s32 %s48, %s55
    %s91 = ssub.s32 %s47, %s59
    %s92 = sor.u32 %s90, %s91
    %p93 = scmp.eq.s32.totalorder %s92, 0
    %s95 = sadd.s32 %s94, 1
    %s96 = scalar_select %p93, %s94, %s95
    %p99 = pneg %p93
    %p100 = scmp.eq.s32.totalorder %s40, 2
    %p101 = por %p99, %p100
    %p102 = scmp.ne.s32.totalorder %s94, %s97
    %p103 = scmp.eq.s32.totalorder %s40, 0
    %p104 = por %p102, %p103
    %p105 = scmp.ne.s32.totalorder %s94, %s97
    %p106 = scmp.eq.s32.totalorder %s45, 2
    %p107 = por %p105, %p106
    %p108 = scmp.ne.s32.totalorder %s97, %s98
    %p109 = scmp.eq.s32.totalorder %s45, 0
    %p110 = por %p108, %p109
    %p111 = scmp.ne.s32.totalorder %s97, %s98
    %p112 = scmp.eq.s32.totalorder %s46, 2
    %p113 = por %p111, %p112
    %p115 = scmp.ne.s32.totalorder %s98, %s114
    %p116 = scmp.eq.s32.totalorder %s46, 0
    %p117 = por %p115, %p116
    %p118 = scmp.le.s32.totalorder 1, %s40
    %p119 = scmp.lt.s32.totalorder %s40, 4
    %p120 = pnand %p118, %p119
    %p121 = pneg %p120
    // Predicated region
    $region9: #{tpu_custom_call.1} parent=5 // pred_check
      _
    $region10: #{tpu_custom_call.1} parent=5 // pred_check_branch
      %123 = sbr.rel (%p120) target = $region12
    $region11: #{tpu_custom_call.1} parent=5 // pred_region
      %s124 = ssub.s32 %s40, 1
    $region12: #{tpu_custom_call.1} parent=5 // pred_fallthru
      _
    %p125 = scmp.lt.s32.totalorder %s40, 3
    // Predicated region
    $region13: #{tpu_custom_call.1} parent=5 // pred_check
      %p126 = pneg %p125
    $region14: #{tpu_custom_call.1} parent=5 // pred_check_branch
      %128 = sbr.rel (%p126) target = $region16
    $region15: #{tpu_custom_call.1} parent=5 // pred_region
      // Predicated region
      $region17: #{tpu_custom_call.1} parent=15 // pred_check
        %p129 = pneg %p76
      $region18: #{tpu_custom_call.1} parent=15 // pred_check_branch
        %131 = sbr.rel (%p129) target = $region20
      $region19: #{tpu_custom_call.1} parent=15 // pred_region
        %s132 = sld [smem:[#allocation3 + %s48]]
        %p133 = scmp.lt.s32.totalorder %s132, 1
        %s134 = scalar_select %p133, %s132, 1
        %p135 = scmp.lt.s32.totalorder %s47, 0
        %s136 = scalar_select %p135, %s47, 0
        %s137 = smul.addr %s134, 32
        %s138 = sadd.s32 %s136, %s137
        %s139 = smul.addr %s138, 8
        %s140 = scalar_lea.vmem %s5, %s139
        %s141 = sld [smem:[#allocation3 + %s48]]
      $region20: #{tpu_custom_call.1} parent=15 // pred_fallthru
        _
    $region16: #{tpu_custom_call.1} parent=5 // pred_fallthru
      _
    %p142 = scmp.le.s32.totalorder 1, %s40
    %p143 = scmp.lt.s32.totalorder %s40, 4
    %p144 = pnand %p142, %p143
    %p145 = pneg %p144
    // Predicated region
    $region21: #{tpu_custom_call.1} parent=5 // pred_check
      _
    $region22: #{tpu_custom_call.1} parent=5 // pred_check_branch
      %147 = sbr.rel (%p144) target = $region24
    $region23: #{tpu_custom_call.1} parent=5 // pred_region
      %s148 = ssub.s32 %s40, 1
      %s149 = sld [smem:[#allocation3 + %s50]]
      %p150 = scmp.lt.s32.totalorder %s149, 1
      %s151 = scalar_select %p150, %s149, 1
      %p152 = scmp.lt.s32.totalorder %s49, 0
      %s153 = scalar_select %p152, %s49, 0
      %s154 = smul.addr %s151, 32
      %s155 = sadd.s32 %s153, %s154
      %s156 = smul.addr %s155, 8
      %s157 = scalar_lea.vmem %s5, %s156
      %p158 = pneg %p82
      %p159 = pneg %p79
      %p160 = pneg %p110
      %p161 = pneg %p107
      %p162 = scmp.lt.s32.totalorder %s50, 2
      %s163 = scalar_select %p162, %s50, 2
      %p164 = scmp.lt.s32.totalorder %s49, 0
      %s165 = scalar_select %p164, %s49, 0
      %s166 = smul.addr %s163, 7
      %s167 = sadd.s32 %s165, %s166
      %s168 = smul.addr %s167, 8
      %s169 = scalar_lea.vmem %s6, %s168
      %s170 = sld [smem:[#allocation3 + %s50]]
      %p171 = scmp.lt.s32.totalorder %s170, 1
      %s172 = scalar_select %p171, %s170, 1
      %p173 = scmp.lt.s32.totalorder %s49, 0
      %s174 = scalar_select %p173, %s49, 0
      %s175 = smul.addr %s172, 32
      %s176 = sadd.s32 %s174, %s175
      %s177 = smul.addr %s176, 8
      %s178 = scalar_lea.vmem %s5, %s177
      %s179 = sld [smem:[#allocation3 + %s50]]
      %p180 = scmp.lt.s32.totalorder %s50, 2
      %s181 = scalar_select %p180, %s50, 2
      %p182 = scmp.lt.s32.totalorder %s49, 0
      %s183 = scalar_select %p182, %s49, 0
      %s184 = smul.addr %s181, 7
      %s185 = sadd.s32 %s183, %s184
      %s186 = smul.addr %s185, 8
      %s187 = scalar_lea.vmem %s6, %s186
      %v188 = vlaneseq
      %v189 = vshrl.u32 %v188, 7
      %v190 = vadd.s32 %v189, 8
      %s191 = sld [smem:[#allocation4 + %s50]]
      %s192 = sld [smem:[#allocation5 + %s50]]
      %v193 = vstv %s191
      %vm194 = vcmp.ge.s32.totalorder %v189, %v193
      %vm195 = vcmp.ge.s32.totalorder %v190, %v193
      %v196 = vstv %s192
      %vm197 = vcmp.lt.s32.totalorder %v189, %v196
      %vm198 = vcmp.lt.s32.totalorder %v190, %v196
      %vm199 = vmand %vm194, %vm197
      %vm200 = vmand %vm195, %vm198
      %p201 = scmp.le.s32.totalorder %s192, %s191
      %s202 = sshra.s32 %s50, 7
      %s203 = sand.u32 %s50, 127
      %s204 = sadd.s32 %s202, 1
      %s205 = smul.u32 %s204, 128
      %s206 = sshra.s32 %s50, 7
      %s207 = sand.u32 %s50, 127
      %s208 = sadd.s32 %s205, %s207
      %s209 = sld [smem:[#allocation4 + %s208]]
      %s210 = sld [smem:[#allocation5 + %s208]]
      %v211 = vstv %s209
      %vm212 = vcmp.ge.s32.totalorder %v189, %v211
      %vm213 = vcmp.ge.s32.totalorder %v190, %v211
      %v214 = vstv %s210
      %vm215 = vcmp.lt.s32.totalorder %v189, %v214
      %vm216 = vcmp.lt.s32.totalorder %v190, %v214
      %vm217 = vmand %vm212, %vm215
      %vm218 = vmand %vm213, %vm216
      %p219 = scmp.le.s32.totalorder %s210, %s209
      %s220 = sadd.s32 %s202, 2
      %s221 = smul.u32 %s220, 128
      %s222 = sadd.s32 %s221, %s207
      %s223 = sld [smem:[#allocation4 + %s222]]
      %s224 = sld [smem:[#allocation5 + %s222]]
      %v225 = vstv %s223
      %vm226 = vcmp.ge.s32.totalorder %v189, %v225
      %vm227 = vcmp.ge.s32.totalorder %v190, %v225
      %v228 = vstv %s224
      %vm229 = vcmp.lt.s32.totalorder %v189, %v228
      %vm230 = vcmp.lt.s32.totalorder %v190, %v228
      %vm231 = vmand %vm226, %vm229
      %vm232 = vmand %vm227, %vm230
      %p233 = scmp.le.s32.totalorder %s224, %s223
      %s234 = sadd.s32 %s202, 3
      %s235 = smul.u32 %s234, 128
      %s236 = sadd.s32 %s235, %s207
      %s237 = sld [smem:[#allocation4 + %s236]]
      %s238 = sld [smem:[#allocation5 + %s236]]
      %v239 = vstv %s237
      %vm240 = vcmp.ge.s32.totalorder %v189, %v239
      %vm241 = vcmp.ge.s32.totalorder %v190, %v239
      %v242 = vstv %s238
      %vm243 = vcmp.lt.s32.totalorder %v189, %v242
      %vm244 = vcmp.lt.s32.totalorder %v190, %v242
      %vm245 = vmand %vm240, %vm243
      %vm246 = vmand %vm241, %vm244
      %p247 = scmp.le.s32.totalorder %s238, %s237
      %s248 = sadd.s32 %s202, 4
      %s249 = smul.u32 %s248, 128
      %s250 = sadd.s32 %s249, %s207
      %s251 = sld [smem:[#allocation4 + %s250]]
      %s252 = sld [smem:[#allocation5 + %s250]]
      %v253 = vstv %s251
      %vm254 = vcmp.ge.s32.totalorder %v189, %v253
      %vm255 = vcmp.ge.s32.totalorder %v190, %v253
      %v256 = vstv %s252
      %vm257 = vcmp.lt.s32.totalorder %v189, %v256
      %vm258 = vcmp.lt.s32.totalorder %v190, %v256
      %vm259 = vmand %vm254, %vm257
      %vm260 = vmand %vm255, %vm258
      %p261 = scmp.le.s32.totalorder %s252, %s251
      %s262 = sadd.s32 %s202, 5
      %s263 = smul.u32 %s262, 128
      %s264 = sadd.s32 %s263, %s207
      %s265 = sld [smem:[#allocation4 + %s264]]
      %s266 = sld [smem:[#allocation5 + %s264]]
      %v267 = vstv %s265
      %vm268 = vcmp.ge.s32.totalorder %v189, %v267
      %vm269 = vcmp.ge.s32.totalorder %v190, %v267
      %v270 = vstv %s266
      %vm271 = vcmp.lt.s32.totalorder %v189, %v270
      %vm272 = vcmp.lt.s32.totalorder %v190, %v270
      %vm273 = vmand %vm268, %vm271
      %vm274 = vmand %vm269, %vm272
      %p275 = scmp.le.s32.totalorder %s266, %s265
      %s276 = sadd.s32 %s202, 6
      %s277 = smul.u32 %s276, 128
      %s278 = sadd.s32 %s277, %s207
      %s279 = sld [smem:[#allocation4 + %s278]]
      %s280 = sld [smem:[#allocation5 + %s278]]
      %v281 = vstv %s279
      %vm282 = vcmp.ge.s32.totalorder %v189, %v281
      %vm283 = vcmp.ge.s32.totalorder %v190, %v281
      %v284 = vstv %s280
      %vm285 = vcmp.lt.s32.totalorder %v189, %v284
      %vm286 = vcmp.lt.s32.totalorder %v190, %v284
      %vm287 = vmand %vm282, %vm285
      %vm288 = vmand %vm283, %vm286
      %p289 = scmp.le.s32.totalorder %s280, %s279
      %s290 = sld [smem:[#allocation6 + %s50]]
      %s291 = sld [smem:[#allocation7 + %s50]]
      %v292 = vstv %s290
      %vm293 = vcmp.ge.s32.totalorder %v189, %v292
      %vm294 = vcmp.ge.s32.totalorder %v190, %v292
      %v295 = vstv %s291
      %vm296 = vcmp.lt.s32.totalorder %v189, %v295
      %vm297 = vcmp.lt.s32.totalorder %v190, %v295
      %vm298 = vmand %vm293, %vm296
      %vm299 = vmand %vm294, %vm297
      %v300 = vld [vmem:[%s178] sm:$0xff]
      %v301 = vld [vmem:[%s178 + $0x8] sm:$0xff]
      %v302 = vld [vmem:[%s178 + $0x10] sm:$0xff]
      %v303 = vld [vmem:[%s178 + $0x18] sm:$0xff]
      %v304 = vld [vmem:[%s178 + $0x20] sm:$0xff]
      %v305 = vld [vmem:[%s178 + $0x28] sm:$0xff]
      %v306 = vld [vmem:[%s178 + $0x30] sm:$0xff]
      %v307 = vld [vmem:[%s178 + $0x38] sm:$0xff]
      %v308 = vld [vmem:[%s178 + $0x40] sm:$0xff]
      %v309 = vld [vmem:[%s178 + $0x48] sm:$0xff]
      %v310 = vld [vmem:[%s178 + $0x50] sm:$0xff]
      %v311 = vld [vmem:[%s178 + $0x58] sm:$0xff]
      %v312 = vld [vmem:[%s178 + $0x60] sm:$0xff]
      %v313 = vld [vmem:[%s178 + $0x68] sm:$0xff]
      %v314 = vld [vmem:[%s178 + $0x70] sm:$0xff]
      %v315 = vld [vmem:[%s178 + $0x78] sm:$0xff]
      %v316 = vld [vmem:[%s178 + $0x80] sm:$0xff]
      %v317 = vld [vmem:[%s178 + $0x88] sm:$0xff]
      %v318 = vld [vmem:[%s178 + $0x90] sm:$0xff]
      %v319 = vld [vmem:[%s178 + $0x98] sm:$0xff]
      %v320 = vld [vmem:[%s178 + $0xa0] sm:$0xff]
      %v321 = vld [vmem:[%s178 + $0xa8] sm:$0xff]
      %v322 = vld [vmem:[%s178 + $0xb0] sm:$0xff]
      %v323 = vld [vmem:[%s178 + $0xb8] sm:$0xff]
      %v324 = vld [vmem:[%s178 + $0xc0] sm:$0xff]
      %v325 = vld [vmem:[%s178 + $0xc8] sm:$0xff]
      %v326 = vld [vmem:[%s178 + $0xd0] sm:$0xff]
      %v327 = vld [vmem:[%s178 + $0xd8] sm:$0xff]
      %v328 = vld [vmem:[%s178 + $0xe0] sm:$0xff]
      %v329 = vld [vmem:[%s178 + $0xe8] sm:$0xff]
      %v330 = vld [vmem:[%s178 + $0xf0] sm:$0xff]
      %v331 = vld [vmem:[%s178 + $0xf8] sm:$0xff]
      %v332 = vsel %vm298, 1, 0
      %v333 = vsel %vm299, 1, 0
      %vm334 = vcmp.eq.s32.totalorder %v332, 1
      %vm335 = vcmp.eq.s32.totalorder %v333, 1
      %v336 = vsel %vm334, %v300, -inf
      %v337 = vsel %vm335, %v301, -inf
      %v338 = vsel %vm334, %v302, -inf
      %v339 = vsel %vm335, %v303, -inf
      %v340 = vsel %vm334, %v304, -inf
      %v341 = vsel %vm335, %v305, -inf
      %v342 = vsel %vm334, %v306, -inf
      %v343 = vsel %vm335, %v307, -inf
      %v344 = vsel %vm334, %v308, -inf
      %v345 = vsel %vm335, %v309, -inf
      %v346 = vsel %vm334, %v310, -inf
      %v347 = vsel %vm335, %v311, -inf
      %v348 = vsel %vm334, %v312, -inf
      %v349 = vsel %vm335, %v313, -inf
      %v350 = vsel %vm334, %v314, -inf
      %v351 = vsel %vm335, %v315, -inf
      %v352 = vsel %vm334, %v316, -inf
      %v353 = vsel %vm335, %v317, -inf
      %v354 = vsel %vm334, %v318, -inf
      %v355 = vsel %vm335, %v319, -inf
      %v356 = vsel %vm334, %v320, -inf
      %v357 = vsel %vm335, %v321, -inf
      %v358 = vsel %vm334, %v322, -inf
      %v359 = vsel %vm335, %v323, -inf
      %v360 = vsel %vm334, %v324, -inf
      %v361 = vsel %vm335, %v325, -inf
      %v362 = vsel %vm334, %v326, -inf
      %v363 = vsel %vm335, %v327, -inf
      %v364 = vsel %vm334, %v328, -inf
      %v365 = vsel %vm335, %v329, -inf
      %v366 = vsel %vm334, %v330, -inf
      %v367 = vsel %vm335, %v331, -inf
      %vm368 = vcmask 31744
      %v369 = vsel %vm368, %v336, -inf
      %v370 = vsel %vm368, %v337, -inf
      %v371 = vmax.f32 %v369, %v370
      %v372 = vrot.slane %v371, 4
      %v373 = vmax.f32 %v371, %v372
      %v374 = vrot.slane %v373, 2
      %v375 = vmax.f32 %v373, %v374
      %v376 = vrot.slane %v375, 1
      %v377 = vmax.f32 %v375, %v376
      %v378 = vsel %vm368, %v338, -inf
      %v379 = vsel %vm368, %v339, -inf
      %v380 = vmax.f32 %v378, %v379
      %v381 = vrot.slane %v380, 4
      %v382 = vmax.f32 %v380, %v381
      %v383 = vrot.slane %v382, 2
      %v384 = vmax.f32 %v382, %v383
      %v385 = vrot.slane %v384, 1
      %v386 = vmax.f32 %v384, %v385
      %v387 = vsel %vm368, %v340, -inf
      %v388 = vsel %vm368, %v341, -inf
      %v389 = vmax.f32 %v387, %v388
      %v390 = vrot.slane %v389, 4
      %v391 = vmax.f32 %v389, %v390
      %v392 = vrot.slane %v391, 2
      %v393 = vmax.f32 %v391, %v392
      %v394 = vrot.slane %v393, 1
      %v395 = vmax.f32 %v393, %v394
      %v396 = vsel %vm368, %v342, -inf
      %v397 = vsel %vm368, %v343, -inf
      %v398 = vmax.f32 %v396, %v397
      %v399 = vrot.slane %v398, 4
      %v400 = vmax.f32 %v398, %v399
      %v401 = vrot.slane %v400, 2
      %v402 = vmax.f32 %v400, %v401
      %v403 = vrot.slane %v402, 1
      %v404 = vmax.f32 %v402, %v403
      %v405 = vsel %vm368, %v344, -inf
      %v406 = vsel %vm368, %v345, -inf
      %v407 = vmax.f32 %v405, %v406
      %v408 = vrot.slane %v407, 4
      %v409 = vmax.f32 %v407, %v408
      %v410 = vrot.slane %v409, 2
      %v411 = vmax.f32 %v409, %v410
      %v412 = vrot.slane %v411, 1
      %v413 = vmax.f32 %v411, %v412
      %v414 = vsel %vm368, %v346, -inf
      %v415 = vsel %vm368, %v347, -inf
      %v416 = vmax.f32 %v414, %v415
      %v417 = vrot.slane %v416, 4
      %v418 = vmax.f32 %v416, %v417
      %v419 = vrot.slane %v418, 2
      %v420 = vmax.f32 %v418, %v419
      %v421 = vrot.slane %v420, 1
      %v422 = vmax.f32 %v420, %v421
      %v423 = vsel %vm368, %v348, -inf
      %v424 = vsel %vm368, %v349, -inf
      %v425 = vmax.f32 %v423, %v424
      %v426 = vrot.slane %v425, 4
      %v427 = vmax.f32 %v425, %v426
      %v428 = vrot.slane %v427, 2
      %v429 = vmax.f32 %v427, %v428
      %v430 = vrot.slane %v429, 1
      %v431 = vmax.f32 %v429, %v430
      %v432 = vsel %vm368, %v350, -inf
      %v433 = vsel %vm368, %v351, -inf
      %v434 = vmax.f32 %v432, %v433
      %v435 = vrot.slane %v434, 4
      %v436 = vmax.f32 %v434, %v435
      %v437 = vrot.slane %v436, 2
      %v438 = vmax.f32 %v436, %v437
      %v439 = vrot.slane %v438, 1
      %v440 = vmax.f32 %v438, %v439
      %v441 = vsel %vm368, %v352, -inf
      %v442 = vsel %vm368, %v353, -inf
      %v443 = vmax.f32 %v441, %v442
      %v444 = vrot.slane %v443, 4
      %v445 = vmax.f32 %v443, %v444
      %v446 = vrot.slane %v445, 2
      %v447 = vmax.f32 %v445, %v446
      %v448 = vrot.slane %v447, 1
      %v449 = vmax.f32 %v447, %v448
      %v450 = vsel %vm368, %v354, -inf
      %v451 = vsel %vm368, %v355, -inf
      %v452 = vmax.f32 %v450, %v451
      %v453 = vrot.slane %v452, 4
      %v454 = vmax.f32 %v452, %v453
      %v455 = vrot.slane %v454, 2
      %v456 = vmax.f32 %v454, %v455
      %v457 = vrot.slane %v456, 1
      %v458 = vmax.f32 %v456, %v457
      %v459 = vsel %vm368, %v356, -inf
      %v460 = vsel %vm368, %v357, -inf
      %v461 = vmax.f32 %v459, %v460
      %v462 = vrot.slane %v461, 4
      %v463 = vmax.f32 %v461, %v462
      %v464 = vrot.slane %v463, 2
      %v465 = vmax.f32 %v463, %v464
      %v466 = vrot.slane %v465, 1
      %v467 = vmax.f32 %v465, %v466
      %v468 = vsel %vm368, %v358, -inf
      %v469 = vsel %vm368, %v359, -inf
      %v470 = vmax.f32 %v468, %v469
      %v471 = vrot.slane %v470, 4
      %v472 = vmax.f32 %v470, %v471
      %v473 = vrot.slane %v472, 2
      %v474 = vmax.f32 %v472, %v473
      %v475 = vrot.slane %v474, 1
      %v476 = vmax.f32 %v474, %v475
      %v477 = vsel %vm368, %v360, -inf
      %v478 = vsel %vm368, %v361, -inf
      %v479 = vmax.f32 %v477, %v478
      %v480 = vrot.slane %v479, 4
      %v481 = vmax.f32 %v479, %v480
      %v482 = vrot.slane %v481, 2
      %v483 = vmax.f32 %v481, %v482
      %v484 = vrot.slane %v483, 1
      %v485 = vmax.f32 %v483, %v484
      %v486 = vsel %vm368, %v362, -inf
      %v487 = vsel %vm368, %v363, -inf
      %v488 = vmax.f32 %v486, %v487
      %v489 = vrot.slane %v488, 4
      %v490 = vmax.f32 %v488, %v489
      %v491 = vrot.slane %v490, 2
      %v492 = vmax.f32 %v490, %v491
      %v493 = vrot.slane %v492, 1
      %v494 = vmax.f32 %v492, %v493
      %v495 = vsel %vm368, %v364, -inf
      %v496 = vsel %vm368, %v365, -inf
      %v497 = vmax.f32 %v495, %v496
      %v498 = vrot.slane %v497, 4
      %v499 = vmax.f32 %v497, %v498
      %v500 = vrot.slane %v499, 2
      %v501 = vmax.f32 %v499, %v500
      %v502 = vrot.slane %v501, 1
      %v503 = vmax.f32 %v501, %v502
      %v504 = vsel %vm368, %v366, -inf
      %v505 = vsel %vm368, %v367, -inf
      %v506 = vmax.f32 %v504, %v505
      %v507 = vrot.slane %v506, 4
      %v508 = vmax.f32 %v506, %v507
      %v509 = vrot.slane %v508, 2
      %v510 = vmax.f32 %v508, %v509
      %v511 = vrot.slane %v510, 1
      %v512 = vmax.f32 %v510, %v511
      %p513 = scmp.le.s32.totalorder %s291, %s290
      %v514 = vsel %vm199, 1, 0
      %v515 = vsel %vm200, 1, 0
      %vm516 = vcmp.eq.s32.totalorder %v514, 1
      %vm517 = vcmp.eq.s32.totalorder %v515, 1
      %vm534 = vcmask 1041409
      %v535 = vsel %vm534, %v386, %v377
      %vm536 = vcmask 1042434
      %v537 = vsel %vm536, %v395, %v535
      %vm538 = vcmask 1043459
      %v539 = vsel %vm538, %v404, %v537
      %vm540 = vcmask 1044484
      %v541 = vsel %vm540, %v413, %v539
      %vm542 = vcmask 1045509
      %v543 = vsel %vm542, %v422, %v541
      %vm544 = vcmask 1046534
      %v545 = vsel %vm544, %v431, %v543
      %vm546 = vcmask 1047559
      %v547 = vsel %vm546, %v440, %v545
      %v548 = vsel %vm534, %v458, %v449
      %v549 = vsel %vm536, %v467, %v548
      %v550 = vsel %vm538, %v476, %v549
      %v551 = vsel %vm540, %v485, %v550
      %v552 = vsel %vm542, %v494, %v551
      %v553 = vsel %vm544, %v503, %v552
      %v554 = vsel %vm546, %v512, %v553
      %v557 = vsel %vm516, %v547, -inf
      %v558 = vsel %vm517, %v554, -inf
      %v559 = vsel %vm368, %v557, -inf
      %v560 = vsel %vm368, %v558, -inf
      %v561 = vmax.f32 %v559, %v560
      %v562 = vrot.slane %v561, 4
      %v563 = vmax.f32 %v561, %v562
      %v564 = vrot.slane %v563, 2
      %v565 = vmax.f32 %v563, %v564
      %v566 = vrot.slane %v565, 1
      %v567 = vmax.f32 %v565, %v566
      %p568 = por %p513, %p201
      %s569 = scalar_select %p568, 1, 0
      %v570 = vstv %s569
      %vm571 = vcmp.eq.s32.totalorder %v570, 1
      %v572 = vsel %vm571, 0.0, %v567
      %v573 = vsel %vm217, 1, 0
      %v574 = vsel %vm218, 1, 0
      %vm575 = vcmp.eq.s32.totalorder %v573, 1
      %vm576 = vcmp.eq.s32.totalorder %v574, 1
      %v577 = vsel %vm575, %v547, -inf
      %v578 = vsel %vm576, %v554, -inf
      %v579 = vsel %vm368, %v577, -inf
      %v580 = vsel %vm368, %v578, -inf
      %v581 = vmax.f32 %v579, %v580
      %v582 = vrot.slane %v581, 4
      %v583 = vmax.f32 %v581, %v582
      %v584 = vrot.slane %v583, 2
      %v585 = vmax.f32 %v583, %v584
      %v586 = vrot.slane %v585, 1
      %v587 = vmax.f32 %v585, %v586
      %p588 = por %p513, %p219
      %s589 = scalar_select %p588, 1, 0
      %v590 = vstv %s589
      %vm591 = vcmp.eq.s32.totalorder %v590, 1
      %v592 = vsel %vm591, 0.0, %v587
      %v593 = vsel %vm231, 1, 0
      %v594 = vsel %vm232, 1, 0
      %vm595 = vcmp.eq.s32.totalorder %v593, 1
      %vm596 = vcmp.eq.s32.totalorder %v594, 1
      %v597 = vsel %vm595, %v547, -inf
      %v598 = vsel %vm596, %v554, -inf
      %v599 = vsel %vm368, %v597, -inf
      %v600 = vsel %vm368, %v598, -inf
      %v601 = vmax.f32 %v599, %v600
      %v602 = vrot.slane %v601, 4
      %v603 = vmax.f32 %v601, %v602
      %v604 = vrot.slane %v603, 2
      %v605 = vmax.f32 %v603, %v604
      %v606 = vrot.slane %v605, 1
      %v607 = vmax.f32 %v605, %v606
      %p608 = por %p513, %p233
      %s609 = scalar_select %p608, 1, 0
      %v610 = vstv %s609
      %vm611 = vcmp.eq.s32.totalorder %v610, 1
      %v612 = vsel %vm611, 0.0, %v607
      %v613 = vsel %vm245, 1, 0
      %v614 = vsel %vm246, 1, 0
      %vm615 = vcmp.eq.s32.totalorder %v613, 1
      %vm616 = vcmp.eq.s32.totalorder %v614, 1
      %v617 = vsel %vm615, %v547, -inf
      %v618 = vsel %vm616, %v554, -inf
      %v619 = vsel %vm368, %v617, -inf
      %v620 = vsel %vm368, %v618, -inf
      %v621 = vmax.f32 %v619, %v620
      %v622 = vrot.slane %v621, 4
      %v623 = vmax.f32 %v621, %v622
      %v624 = vrot.slane %v623, 2
      %v625 = vmax.f32 %v623, %v624
      %v626 = vrot.slane %v625, 1
      %v627 = vmax.f32 %v625, %v626
      %p628 = por %p513, %p247
      %s629 = scalar_select %p628, 1, 0
      %v630 = vstv %s629
      %vm631 = vcmp.eq.s32.totalorder %v630, 1
      %v632 = vsel %vm631, 0.0, %v627
      %v633 = vsel %vm259, 1, 0
      %v634 = vsel %vm260, 1, 0
      %vm635 = vcmp.eq.s32.totalorder %v633, 1
      %vm636 = vcmp.eq.s32.totalorder %v634, 1
      %v637 = vsel %vm635, %v547, -inf
      %v638 = vsel %vm636, %v554, -inf
      %v639 = vsel %vm368, %v637, -inf
      %v640 = vsel %vm368, %v638, -inf
      %v641 = vmax.f32 %v639, %v640
      %v642 = vrot.slane %v641, 4
      %v643 = vmax.f32 %v641, %v642
      %v644 = vrot.slane %v643, 2
      %v645 = vmax.f32 %v643, %v644
      %v646 = vrot.slane %v645, 1
      %v647 = vmax.f32 %v645, %v646
      %p648 = por %p513, %p261
      %s649 = scalar_select %p648, 1, 0
      %v650 = vstv %s649
      %vm651 = vcmp.eq.s32.totalorder %v650, 1
      %v652 = vsel %vm651, 0.0, %v647
      %v653 = vsel %vm273, 1, 0
      %v654 = vsel %vm274, 1, 0
      %vm655 = vcmp.eq.s32.totalorder %v653, 1
      %vm656 = vcmp.eq.s32.totalorder %v654, 1
      %v657 = vsel %vm655, %v547, -inf
      %v658 = vsel %vm656, %v554, -inf
      %v659 = vsel %vm368, %v657, -inf
      %v660 = vsel %vm368, %v658, -inf
      %v661 = vmax.f32 %v659, %v660
      %v662 = vrot.slane %v661, 4
      %v663 = vmax.f32 %v661, %v662
      %v664 = vrot.slane %v663, 2
      %v665 = vmax.f32 %v663, %v664
      %v666 = vrot.slane %v665, 1
      %v667 = vmax.f32 %v665, %v666
      %p668 = por %p513, %p275
      %s669 = scalar_select %p668, 1, 0
      %v670 = vstv %s669
      %vm671 = vcmp.eq.s32.totalorder %v670, 1
      %v672 = vsel %vm671, 0.0, %v667
      %v673 = vsel %vm287, 1, 0
      %v674 = vsel %vm288, 1, 0
      %vm675 = vcmp.eq.s32.totalorder %v673, 1
      %vm676 = vcmp.eq.s32.totalorder %v674, 1
      %v677 = vsel %vm675, %v547, -inf
      %v678 = vsel %vm676, %v554, -inf
      %v679 = vsel %vm368, %v677, -inf
      %v680 = vsel %vm368, %v678, -inf
      %v681 = vmax.f32 %v679, %v680
      %v682 = vrot.slane %v681, 4
      %v683 = vmax.f32 %v681, %v682
      %v684 = vrot.slane %v683, 2
      %v685 = vmax.f32 %v683, %v684
      %v686 = vrot.slane %v685, 1
      %v687 = vmax.f32 %v685, %v686
      %p688 = por %p513, %p289
      %s689 = scalar_select %p688, 1, 0
      %v690 = vstv %s689
      %vm691 = vcmp.eq.s32.totalorder %v690, 1
      %v692 = vsel %vm691, 0.0, %v687
      %vm693 = vcmask 1040384
      %v694 = vsel %vm693, %v572, %v592
      %vm695 = vcmask 1041408
      %v696 = vsel %vm695, %v694, %v612
      %vm697 = vcmask 1042432
      %v698 = vsel %vm697, %v696, %v632
      %vm699 = vcmask 1043456
      %v700 = vsel %vm699, %v698, %v652
      %vm701 = vcmask 1044480
      %v702 = vsel %vm701, %v700, %v672
      %vm703 = vcmask 1045504
      %v704 = vsel %vm703, %v702, %v692
      %vm705 = vcmask 30720
      %706 = vst.msk [vmem:[%s187] sm:$0x7f] %vm705, %v704
      %s707 = sld [smem:[#allocation6 + %s208]]
      %s708 = sld [smem:[#allocation7 + %s208]]
      %v709 = vstv %s707
      %vm710 = vcmp.ge.s32.totalorder %v189, %v709
      %vm711 = vcmp.ge.s32.totalorder %v190, %v709
      %v712 = vstv %s708
      %vm713 = vcmp.lt.s32.totalorder %v189, %v712
      %vm714 = vcmp.lt.s32.totalorder %v190, %v712
      %vm715 = vmand %vm710, %vm713
      %vm716 = vmand %vm711, %vm714
      %v717 = vld [vmem:[%s178] sm:$0xff]
      %v718 = vld [vmem:[%s178 + $0x8] sm:$0xff]
      %v719 = vld [vmem:[%s178 + $0x10] sm:$0xff]
      %v720 = vld [vmem:[%s178 + $0x18] sm:$0xff]
      %v721 = vld [vmem:[%s178 + $0x20] sm:$0xff]
      %v722 = vld [vmem:[%s178 + $0x28] sm:$0xff]
      %v723 = vld [vmem:[%s178 + $0x30] sm:$0xff]
      %v724 = vld [vmem:[%s178 + $0x38] sm:$0xff]
      %v725 = vld [vmem:[%s178 + $0x40] sm:$0xff]
      %v726 = vld [vmem:[%s178 + $0x48] sm:$0xff]
      %v727 = vld [vmem:[%s178 + $0x50] sm:$0xff]
      %v728 = vld [vmem:[%s178 + $0x58] sm:$0xff]
      %v729 = vld [vmem:[%s178 + $0x60] sm:$0xff]
      %v730 = vld [vmem:[%s178 + $0x68] sm:$0xff]
      %v731 = vld [vmem:[%s178 + $0x70] sm:$0xff]
      %v732 = vld [vmem:[%s178 + $0x78] sm:$0xff]
      %v733 = vld [vmem:[%s178 + $0x80] sm:$0xff]
      %v734 = vld [vmem:[%s178 + $0x88] sm:$0xff]
      %v735 = vld [vmem:[%s178 + $0x90] sm:$0xff]
      %v736 = vld [vmem:[%s178 + $0x98] sm:$0xff]
      %v737 = vld [vmem:[%s178 + $0xa0] sm:$0xff]
      %v738 = vld [vmem:[%s178 + $0xa8] sm:$0xff]
      %v739 = vld [vmem:[%s178 + $0xb0] sm:$0xff]
      %v740 = vld [vmem:[%s178 + $0xb8] sm:$0xff]
      %v741 = vld [vmem:[%s178 + $0xc0] sm:$0xff]
      %v742 = vld [vmem:[%s178 + $0xc8] sm:$0xff]
      %v743 = vld [vmem:[%s178 + $0xd0] sm:$0xff]
      %v744 = vld [vmem:[%s178 + $0xd8] sm:$0xff]
      %v745 = vld [vmem:[%s178 + $0xe0] sm:$0xff]
      %v746 = vld [vmem:[%s178 + $0xe8] sm:$0xff]
      %v747 = vld [vmem:[%s178 + $0xf0] sm:$0xff]
      %v748 = vld [vmem:[%s178 + $0xf8] sm:$0xff]
      %v749 = vsel %vm715, 1, 0
      %v750 = vsel %vm716, 1, 0
      %vm751 = vcmp.eq.s32.totalorder %v749, 1
      %vm752 = vcmp.eq.s32.totalorder %v750, 1
      %v753 = vsel %vm751, %v717, -inf
      %v754 = vsel %vm752, %v718, -inf
      %v755 = vsel %vm751, %v719, -inf
      %v756 = vsel %vm752, %v720, -inf
      %v757 = vsel %vm751, %v721, -inf
      %v758 = vsel %vm752, %v722, -inf
      %v759 = vsel %vm751, %v723, -inf
      %v760 = vsel %vm752, %v724, -inf
      %v761 = vsel %vm751, %v725, -inf
      %v762 = vsel %vm752, %v726, -inf
      %v763 = vsel %vm751, %v727, -inf
      %v764 = vsel %vm752, %v728, -inf
      %v765 = vsel %vm751, %v729, -inf
      %v766 = vsel %vm752, %v730, -inf
      %v767 = vsel %vm751, %v731, -inf
      %v768 = vsel %vm752, %v732, -inf
      %v769 = vsel %vm751, %v733, -inf
      %v770 = vsel %vm752, %v734, -inf
      %v771 = vsel %vm751, %v735, -inf
      %v772 = vsel %vm752, %v736, -inf
      %v773 = vsel %vm751, %v737, -inf
      %v774 = vsel %vm752, %v738, -inf
      %v775 = vsel %vm751, %v739, -inf
      %v776 = vsel %vm752, %v740, -inf
      %v777 = vsel %vm751, %v741, -inf
      %v778 = vsel %vm752, %v742, -inf
      %v779 = vsel %vm751, %v743, -inf
      %v780 = vsel %vm752, %v744, -inf
      %v781 = vsel %vm751, %v745, -inf
      %v782 = vsel %vm752, %v746, -inf
      %v783 = vsel %vm751, %v747, -inf
      %v784 = vsel %vm752, %v748, -inf
      %v785 = vsel %vm368, %v753, -inf
      %v786 = vsel %vm368, %v754, -inf
      %v787 = vmax.f32 %v785, %v786
      %v788 = vrot.slane %v787, 4
      %v789 = vmax.f32 %v787, %v788
      %v790 = vrot.slane %v789, 2
      %v791 = vmax.f32 %v789, %v790
      %v792 = vrot.slane %v791, 1
      %v793 = vmax.f32 %v791, %v792
      %v794 = vsel %vm368, %v755, -inf
      %v795 = vsel %vm368, %v756, -inf
      %v796 = vmax.f32 %v794, %v795
      %v797 = vrot.slane %v796, 4
      %v798 = vmax.f32 %v796, %v797
      %v799 = vrot.slane %v798, 2
      %v800 = vmax.f32 %v798, %v799
      %v801 = vrot.slane %v800, 1
      %v802 = vmax.f32 %v800, %v801
      %v803 = vsel %vm368, %v757, -inf
      %v804 = vsel %vm368, %v758, -inf
      %v805 = vmax.f32 %v803, %v804
      %v806 = vrot.slane %v805, 4
      %v807 = vmax.f32 %v805, %v806
      %v808 = vrot.slane %v807, 2
      %v809 = vmax.f32 %v807, %v808
      %v810 = vrot.slane %v809, 1
      %v811 = vmax.f32 %v809, %v810
      %v812 = vsel %vm368, %v759, -inf
      %v813 = vsel %vm368, %v760, -inf
      %v814 = vmax.f32 %v812, %v813
      %v815 = vrot.slane %v814, 4
      %v816 = vmax.f32 %v814, %v815
      %v817 = vrot.slane %v816, 2
      %v818 = vmax.f32 %v816, %v817
      %v819 = vrot.slane %v818, 1
      %v820 = vmax.f32 %v818, %v819
      %v821 = vsel %vm368, %v761, -inf
      %v822 = vsel %vm368, %v762, -inf
      %v823 = vmax.f32 %v821, %v822
      %v824 = vrot.slane %v823, 4
      %v825 = vmax.f32 %v823, %v824
      %v826 = vrot.slane %v825, 2
      %v827 = vmax.f32 %v825, %v826
      %v828 = vrot.slane %v827, 1
      %v829 = vmax.f32 %v827, %v828
      %v830 = vsel %vm368, %v763, -inf
      %v831 = vsel %vm368, %v764, -inf
      %v832 = vmax.f32 %v830, %v831
      %v833 = vrot.slane %v832, 4
      %v834 = vmax.f32 %v832, %v833
      %v835 = vrot.slane %v834, 2
      %v836 = vmax.f32 %v834, %v835
      %v837 = vrot.slane %v836, 1
      %v838 = vmax.f32 %v836, %v837
      %v839 = vsel %vm368, %v765, -inf
      %v840 = vsel %vm368, %v766, -inf
      %v841 = vmax.f32 %v839, %v840
      %v842 = vrot.slane %v841, 4
      %v843 = vmax.f32 %v841, %v842
      %v844 = vrot.slane %v843, 2
      %v845 = vmax.f32 %v843, %v844
      %v846 = vrot.slane %v845, 1
      %v847 = vmax.f32 %v845, %v846
      %v848 = vsel %vm368, %v767, -inf
      %v849 = vsel %vm368, %v768, -inf
      %v850 = vmax.f32 %v848, %v849
      %v851 = vrot.slane %v850, 4
      %v852 = vmax.f32 %v850, %v851
      %v853 = vrot.slane %v852, 2
      %v854 = vmax.f32 %v852, %v853
      %v855 = vrot.slane %v854, 1
      %v856 = vmax.f32 %v854, %v855
      %v857 = vsel %vm368, %v769, -inf
      %v858 = vsel %vm368, %v770, -inf
      %v859 = vmax.f32 %v857, %v858
      %v860 = vrot.slane %v859, 4
      %v861 = vmax.f32 %v859, %v860
      %v862 = vrot.slane %v861, 2
      %v863 = vmax.f32 %v861, %v862
      %v864 = vrot.slane %v863, 1
      %v865 = vmax.f32 %v863, %v864
      %v866 = vsel %vm368, %v771, -inf
      %v867 = vsel %vm368, %v772, -inf
      %v868 = vmax.f32 %v866, %v867
      %v869 = vrot.slane %v868, 4
      %v870 = vmax.f32 %v868, %v869
      %v871 = vrot.slane %v870, 2
      %v872 = vmax.f32 %v870, %v871
      %v873 = vrot.slane %v872, 1
      %v874 = vmax.f32 %v872, %v873
      %v875 = vsel %vm368, %v773, -inf
      %v876 = vsel %vm368, %v774, -inf
      %v877 = vmax.f32 %v875, %v876
      %v878 = vrot.slane %v877, 4
      %v879 = vmax.f32 %v877, %v878
      %v880 = vrot.slane %v879, 2
      %v881 = vmax.f32 %v879, %v880
      %v882 = vrot.slane %v881, 1
      %v883 = vmax.f32 %v881, %v882
      %v884 = vsel %vm368, %v775, -inf
      %v885 = vsel %vm368, %v776, -inf
      %v886 = vmax.f32 %v884, %v885
      %v887 = vrot.slane %v886, 4
      %v888 = vmax.f32 %v886, %v887
      %v889 = vrot.slane %v888, 2
      %v890 = vmax.f32 %v888, %v889
      %v891 = vrot.slane %v890, 1
      %v892 = vmax.f32 %v890, %v891
      %v893 = vsel %vm368, %v777, -inf
      %v894 = vsel %vm368, %v778, -inf
      %v895 = vmax.f32 %v893, %v894
      %v896 = vrot.slane %v895, 4
      %v897 = vmax.f32 %v895, %v896
      %v898 = vrot.slane %v897, 2
      %v899 = vmax.f32 %v897, %v898
      %v900 = vrot.slane %v899, 1
      %v901 = vmax.f32 %v899, %v900
      %v902 = vsel %vm368, %v779, -inf
      %v903 = vsel %vm368, %v780, -inf
      %v904 = vmax.f32 %v902, %v903
      %v905 = vrot.slane %v904, 4
      %v906 = vmax.f32 %v904, %v905
      %v907 = vrot.slane %v906, 2
      %v908 = vmax.f32 %v906, %v907
      %v909 = vrot.slane %v908, 1
      %v910 = vmax.f32 %v908, %v909
      %v911 = vsel %vm368, %v781, -inf
      %v912 = vsel %vm368, %v782, -inf
      %v913 = vmax.f32 %v911, %v912
      %v914 = vrot.slane %v913, 4
      %v915 = vmax.f32 %v913, %v914
      %v916 = vrot.slane %v915, 2
      %v917 = vmax.f32 %v915, %v916
      %v918 = vrot.slane %v917, 1
      %v919 = vmax.f32 %v917, %v918
      %v920 = vsel %vm368, %v783, -inf
      %v921 = vsel %vm368, %v784, -inf
      %v922 = vmax.f32 %v920, %v921
      %v923 = vrot.slane %v922, 4
      %v924 = vmax.f32 %v922, %v923
      %v925 = vrot.slane %v924, 2
      %v926 = vmax.f32 %v924, %v925
      %v927 = vrot.slane %v926, 1
      %v928 = vmax.f32 %v926, %v927
      %p929 = scmp.le.s32.totalorder %s708, %s707
      %v946 = vsel %vm534, %v802, %v793
      %v947 = vsel %vm536, %v811, %v946
      %v948 = vsel %vm538, %v820, %v947
      %v949 = vsel %vm540, %v829, %v948
      %v950 = vsel %vm542, %v838, %v949
      %v951 = vsel %vm544, %v847, %v950
      %v952 = vsel %vm546, %v856, %v951
      %v953 = vsel %vm534, %v874, %v865
      %v954 = vsel %vm536, %v883, %v953
      %v955 = vsel %vm538, %v892, %v954
      %v956 = vsel %vm540, %v901, %v955
      %v957 = vsel %vm542, %v910, %v956
      %v958 = vsel %vm544, %v919, %v957
      %v959 = vsel %vm546, %v928, %v958
      %v962 = vsel %vm516, %v952, -inf
      %v963 = vsel %vm517, %v959, -inf
      %v964 = vsel %vm368, %v962, -inf
      %v965 = vsel %vm368, %v963, -inf
      %v966 = vmax.f32 %v964, %v965
      %v967 = vrot.slane %v966, 4
      %v968 = vmax.f32 %v966, %v967
      %v969 = vrot.slane %v968, 2
      %v970 = vmax.f32 %v968, %v969
      %v971 = vrot.slane %v970, 1
      %v972 = vmax.f32 %v970, %v971
      %p973 = por %p929, %p201
      %s974 = scalar_select %p973, 1, 0
      %v975 = vstv %s974
      %vm976 = vcmp.eq.s32.totalorder %v975, 1
      %v977 = vsel %vm976, 0.0, %v972
      %v978 = vsel %vm575, %v952, -inf
      %v979 = vsel %vm576, %v959, -inf
      %v980 = vsel %vm368, %v978, -inf
      %v981 = vsel %vm368, %v979, -inf
      %v982 = vmax.f32 %v980, %v981
      %v983 = vrot.slane %v982, 4
      %v984 = vmax.f32 %v982, %v983
      %v985 = vrot.slane %v984, 2
      %v986 = vmax.f32 %v984, %v985
      %v987 = vrot.slane %v986, 1
      %v988 = vmax.f32 %v986, %v987
      %p989 = por %p929, %p219
      %s990 = scalar_select %p989, 1, 0
      %v991 = vstv %s990
      %vm992 = vcmp.eq.s32.totalorder %v991, 1
      %v993 = vsel %vm992, 0.0, %v988
      %v994 = vsel %vm595, %v952, -inf
      %v995 = vsel %vm596, %v959, -inf
      %v996 = vsel %vm368, %v994, -inf
      %v997 = vsel %vm368, %v995, -inf
      %v998 = vmax.f32 %v996, %v997
      %v999 = vrot.slane %v998, 4
      %v1000 = vmax.f32 %v998, %v999
      %v1001 = vrot.slane %v1000, 2
      %v1002 = vmax.f32 %v1000, %v1001
      %v1003 = vrot.slane %v1002, 1
      %v1004 = vmax.f32 %v1002, %v1003
      %p1005 = por %p929, %p233
      %s1006 = scalar_select %p1005, 1, 0
      %v1007 = vstv %s1006
      %vm1008 = vcmp.eq.s32.totalorder %v1007, 1
      %v1009 = vsel %vm1008, 0.0, %v1004
      %v1010 = vsel %vm615, %v952, -inf
      %v1011 = vsel %vm616, %v959, -inf
      %v1012 = vsel %vm368, %v1010, -inf
      %v1013 = vsel %vm368, %v1011, -inf
      %v1014 = vmax.f32 %v1012, %v1013
      %v1015 = vrot.slane %v1014, 4
      %v1016 = vmax.f32 %v1014, %v1015
      %v1017 = vrot.slane %v1016, 2
      %v1018 = vmax.f32 %v1016, %v1017
      %v1019 = vrot.slane %v1018, 1
      %v1020 = vmax.f32 %v1018, %v1019
      %p1021 = por %p929, %p247
      %s1022 = scalar_select %p1021, 1, 0
      %v1023 = vstv %s1022
      %vm1024 = vcmp.eq.s32.totalorder %v1023, 1
      %v1025 = vsel %vm1024, 0.0, %v1020
      %v1026 = vsel %vm635, %v952, -inf
      %v1027 = vsel %vm636, %v959, -inf
      %v1028 = vsel %vm368, %v1026, -inf
      %v1029 = vsel %vm368, %v1027, -inf
      %v1030 = vmax.f32 %v1028, %v1029
      %v1031 = vrot.slane %v1030, 4
      %v1032 = vmax.f32 %v1030, %v1031
      %v1033 = vrot.slane %v1032, 2
      %v1034 = vmax.f32 %v1032, %v1033
      %v1035 = vrot.slane %v1034, 1
      %v1036 = vmax.f32 %v1034, %v1035
      %p1037 = por %p929, %p261
      %s1038 = scalar_select %p1037, 1, 0
      %v1039 = vstv %s1038
      %vm1040 = vcmp.eq.s32.totalorder %v1039, 1
      %v1041 = vsel %vm1040, 0.0, %v1036
      %v1042 = vsel %vm655, %v952, -inf
      %v1043 = vsel %vm656, %v959, -inf
      %v1044 = vsel %vm368, %v1042, -inf
      %v1045 = vsel %vm368, %v1043, -inf
      %v1046 = vmax.f32 %v1044, %v1045
      %v1047 = vrot.slane %v1046, 4
      %v1048 = vmax.f32 %v1046, %v1047
      %v1049 = vrot.slane %v1048, 2
      %v1050 = vmax.f32 %v1048, %v1049
      %v1051 = vrot.slane %v1050, 1
      %v1052 = vmax.f32 %v1050, %v1051
      %p1053 = por %p929, %p275
      %s1054 = scalar_select %p1053, 1, 0
      %v1055 = vstv %s1054
      %vm1056 = vcmp.eq.s32.totalorder %v1055, 1
      %v1057 = vsel %vm1056, 0.0, %v1052
      %v1058 = vsel %vm675, %v952, -inf
      %v1059 = vsel %vm676, %v959, -inf
      %v1060 = vsel %vm368, %v1058, -inf
      %v1061 = vsel %vm368, %v1059, -inf
      %v1062 = vmax.f32 %v1060, %v1061
      %v1063 = vrot.slane %v1062, 4
      %v1064 = vmax.f32 %v1062, %v1063
      %v1065 = vrot.slane %v1064, 2
      %v1066 = vmax.f32 %v1064, %v1065
      %v1067 = vrot.slane %v1066, 1
      %v1068 = vmax.f32 %v1066, %v1067
      %p1069 = por %p929, %p289
      %s1070 = scalar_select %p1069, 1, 0
      %v1071 = vstv %s1070
      %vm1072 = vcmp.eq.s32.totalorder %v1071, 1
      %v1073 = vsel %vm1072, 0.0, %v1068
      %v1074 = vsel %vm693, %v977, %v993
      %v1075 = vsel %vm695, %v1074, %v1009
      %v1076 = vsel %vm697, %v1075, %v1025
      %v1077 = vsel %vm699, %v1076, %v1041
      %v1078 = vsel %vm701, %v1077, %v1057
      %v1079 = vsel %vm703, %v1078, %v1073
      %1080 = vst.msk [vmem:[%s187 + $0x7] sm:$0x7f] %vm705, %v1079
      %s1081 = sld [smem:[#allocation6 + %s222]]
      %s1082 = sld [smem:[#allocation7 + %s222]]
      %v1083 = vstv %s1081
      %vm1084 = vcmp.ge.s32.totalorder %v189, %v1083
      %vm1085 = vcmp.ge.s32.totalorder %v190, %v1083
      %v1086 = vstv %s1082
      %vm1087 = vcmp.lt.s32.totalorder %v189, %v1086
      %vm1088 = vcmp.lt.s32.totalorder %v190, %v1086
      %vm1089 = vmand %vm1084, %vm1087
      %vm1090 = vmand %vm1085, %vm1088
      %v1091 = vld [vmem:[%s178] sm:$0xff]
      %v1092 = vld [vmem:[%s178 + $0x8] sm:$0xff]
      %v1093 = vld [vmem:[%s178 + $0x10] sm:$0xff]
      %v1094 = vld [vmem:[%s178 + $0x18] sm:$0xff]
      %v1095 = vld [vmem:[%s178 + $0x20] sm:$0xff]
      %v1096 = vld [vmem:[%s178 + $0x28] sm:$0xff]
      %v1097 = vld [vmem:[%s178 + $0x30] sm:$0xff]
      %v1098 = vld [vmem:[%s178 + $0x38] sm:$0xff]
      %v1099 = vld [vmem:[%s178 + $0x40] sm:$0xff]
      %v1100 = vld [vmem:[%s178 + $0x48] sm:$0xff]
      %v1101 = vld [vmem:[%s178 + $0x50] sm:$0xff]
      %v1102 = vld [vmem:[%s178 + $0x58] sm:$0xff]
      %v1103 = vld [vmem:[%s178 + $0x60] sm:$0xff]
      %v1104 = vld [vmem:[%s178 + $0x68] sm:$0xff]
      %v1105 = vld [vmem:[%s178 + $0x70] sm:$0xff]
      %v1106 = vld [vmem:[%s178 + $0x78] sm:$0xff]
      %v1107 = vld [vmem:[%s178 + $0x80] sm:$0xff]
      %v1108 = vld [vmem:[%s178 + $0x88] sm:$0xff]
      %v1109 = vld [vmem:[%s178 + $0x90] sm:$0xff]
      %v1110 = vld [vmem:[%s178 + $0x98] sm:$0xff]
      %v1111 = vld [vmem:[%s178 + $0xa0] sm:$0xff]
      %v1112 = vld [vmem:[%s178 + $0xa8] sm:$0xff]
      %v1113 = vld [vmem:[%s178 + $0xb0] sm:$0xff]
      %v1114 = vld [vmem:[%s178 + $0xb8] sm:$0xff]
      %v1115 = vld [vmem:[%s178 + $0xc0] sm:$0xff]
      %v1116 = vld [vmem:[%s178 + $0xc8] sm:$0xff]
      %v1117 = vld [vmem:[%s178 + $0xd0] sm:$0xff]
      %v1118 = vld [vmem:[%s178 + $0xd8] sm:$0xff]
      %v1119 = vld [vmem:[%s178 + $0xe0] sm:$0xff]
      %v1120 = vld [vmem:[%s178 + $0xe8] sm:$0xff]
      %v1121 = vld [vmem:[%s178 + $0xf0] sm:$0xff]
      %v1122 = vld [vmem:[%s178 + $0xf8] sm:$0xff]
      %v1123 = vsel %vm1089, 1, 0
      %v1124 = vsel %vm1090, 1, 0
      %vm1125 = vcmp.eq.s32.totalorder %v1123, 1
      %vm1126 = vcmp.eq.s32.totalorder %v1124, 1
      %v1127 = vsel %vm1125, %v1091, -inf
      %v1128 = vsel %vm1126, %v1092, -inf
      %v1129 = vsel %vm1125, %v1093, -inf
      %v1130 = vsel %vm1126, %v1094, -inf
      %v1131 = vsel %vm1125, %v1095, -inf
      %v1132 = vsel %vm1126, %v1096, -inf
      %v1133 = vsel %vm1125, %v1097, -inf
      %v1134 = vsel %vm1126, %v1098, -inf
      %v1135 = vsel %vm1125, %v1099, -inf
      %v1136 = vsel %vm1126, %v1100, -inf
      %v1137 = vsel %vm1125, %v1101, -inf
      %v1138 = vsel %vm1126, %v1102, -inf
      %v1139 = vsel %vm1125, %v1103, -inf
      %v1140 = vsel %vm1126, %v1104, -inf
      %v1141 = vsel %vm1125, %v1105, -inf
      %v1142 = vsel %vm1126, %v1106, -inf
      %v1143 = vsel %vm1125, %v1107, -inf
      %v1144 = vsel %vm1126, %v1108, -inf
      %v1145 = vsel %vm1125, %v1109, -inf
      %v1146 = vsel %vm1126, %v1110, -inf
      %v1147 = vsel %vm1125, %v1111, -inf
      %v1148 = vsel %vm1126, %v1112, -inf
      %v1149 = vsel %vm1125, %v1113, -inf
      %v1150 = vsel %vm1126, %v1114, -inf
      %v1151 = vsel %vm1125, %v1115, -inf
      %v1152 = vsel %vm1126, %v1116, -inf
      %v1153 = vsel %vm1125, %v1117, -inf
      %v1154 = vsel %vm1126, %v1118, -inf
      %v1155 = vsel %vm1125, %v1119, -inf
      %v1156 = vsel %vm1126, %v1120, -inf
      %v1157 = vsel %vm1125, %v1121, -inf
      %v1158 = vsel %vm1126, %v1122, -inf
      %v1159 = vsel %vm368, %v1127, -inf
      %v1160 = vsel %vm368, %v1128, -inf
      %v1161 = vmax.f32 %v1159, %v1160
      %v1162 = vrot.slane %v1161, 4
      %v1163 = vmax.f32 %v1161, %v1162
      %v1164 = vrot.slane %v1163, 2
      %v1165 = vmax.f32 %v1163, %v1164
      %v1166 = vrot.slane %v1165, 1
      %v1167 = vmax.f32 %v1165, %v1166
      %v1168 = vsel %vm368, %v1129, -inf
      %v1169 = vsel %vm368, %v1130, -inf
      %v1170 = vmax.f32 %v1168, %v1169
      %v1171 = vrot.slane %v1170, 4
      %v1172 = vmax.f32 %v1170, %v1171
      %v1173 = vrot.slane %v1172, 2
      %v1174 = vmax.f32 %v1172, %v1173
      %v1175 = vrot.slane %v1174, 1
      %v1176 = vmax.f32 %v1174, %v1175
      %v1177 = vsel %vm368, %v1131, -inf
      %v1178 = vsel %vm368, %v1132, -inf
      %v1179 = vmax.f32 %v1177, %v1178
      %v1180 = vrot.slane %v1179, 4
      %v1181 = vmax.f32 %v1179, %v1180
      %v1182 = vrot.slane %v1181, 2
      %v1183 = vmax.f32 %v1181, %v1182
      %v1184 = vrot.slane %v1183, 1
      %v1185 = vmax.f32 %v1183, %v1184
      %v1186 = vsel %vm368, %v1133, -inf
      %v1187 = vsel %vm368, %v1134, -inf
      %v1188 = vmax.f32 %v1186, %v1187
      %v1189 = vrot.slane %v1188, 4
      %v1190 = vmax.f32 %v1188, %v1189
      %v1191 = vrot.slane %v1190, 2
      %v1192 = vmax.f32 %v1190, %v1191
      %v1193 = vrot.slane %v1192, 1
      %v1194 = vmax.f32 %v1192, %v1193
      %v1195 = vsel %vm368, %v1135, -inf
      %v1196 = vsel %vm368, %v1136, -inf
      %v1197 = vmax.f32 %v1195, %v1196
      %v1198 = vrot.slane %v1197, 4
      %v1199 = vmax.f32 %v1197, %v1198
      %v1200 = vrot.slane %v1199, 2
      %v1201 = vmax.f32 %v1199, %v1200
      %v1202 = vrot.slane %v1201, 1
      %v1203 = vmax.f32 %v1201, %v1202
      %v1204 = vsel %vm368, %v1137, -inf
      %v1205 = vsel %vm368, %v1138, -inf
      %v1206 = vmax.f32 %v1204, %v1205
      %v1207 = vrot.slane %v1206, 4
      %v1208 = vmax.f32 %v1206, %v1207
      %v1209 = vrot.slane %v1208, 2
      %v1210 = vmax.f32 %v1208, %v1209
      %v1211 = vrot.slane %v1210, 1
      %v1212 = vmax.f32 %v1210, %v1211
      %v1213 = vsel %vm368, %v1139, -inf
      %v1214 = vsel %vm368, %v1140, -inf
      %v1215 = vmax.f32 %v1213, %v1214
      %v1216 = vrot.slane %v1215, 4
      %v1217 = vmax.f32 %v1215, %v1216
      %v1218 = vrot.slane %v1217, 2
      %v1219 = vmax.f32 %v1217, %v1218
      %v1220 = vrot.slane %v1219, 1
      %v1221 = vmax.f32 %v1219, %v1220
      %v1222 = vsel %vm368, %v1141, -inf
      %v1223 = vsel %vm368, %v1142, -inf
      %v1224 = vmax.f32 %v1222, %v1223
      %v1225 = vrot.slane %v1224, 4
      %v1226 = vmax.f32 %v1224, %v1225
      %v1227 = vrot.slane %v1226, 2
      %v1228 = vmax.f32 %v1226, %v1227
      %v1229 = vrot.slane %v1228, 1
      %v1230 = vmax.f32 %v1228, %v1229
      %v1231 = vsel %vm368, %v1143, -inf
      %v1232 = vsel %vm368, %v1144, -inf
      %v1233 = vmax.f32 %v1231, %v1232
      %v1234 = vrot.slane %v1233, 4
      %v1235 = vmax.f32 %v1233, %v1234
      %v1236 = vrot.slane %v1235, 2
      %v1237 = vmax.f32 %v1235, %v1236
      %v1238 = vrot.slane %v1237, 1
      %v1239 = vmax.f32 %v1237, %v1238
      %v1240 = vsel %vm368, %v1145, -inf
      %v1241 = vsel %vm368, %v1146, -inf
      %v1242 = vmax.f32 %v1240, %v1241
      %v1243 = vrot.slane %v1242, 4
      %v1244 = vmax.f32 %v1242, %v1243
      %v1245 = vrot.slane %v1244, 2
      %v1246 = vmax.f32 %v1244, %v1245
      %v1247 = vrot.slane %v1246, 1
      %v1248 = vmax.f32 %v1246, %v1247
      %v1249 = vsel %vm368, %v1147, -inf
      %v1250 = vsel %vm368, %v1148, -inf
      %v1251 = vmax.f32 %v1249, %v1250
      %v1252 = vrot.slane %v1251, 4
      %v1253 = vmax.f32 %v1251, %v1252
      %v1254 = vrot.slane %v1253, 2
      %v1255 = vmax.f32 %v1253, %v1254
      %v1256 = vrot.slane %v1255, 1
      %v1257 = vmax.f32 %v1255, %v1256
      %v1258 = vsel %vm368, %v1149, -inf
      %v1259 = vsel %vm368, %v1150, -inf
      %v1260 = vmax.f32 %v1258, %v1259
      %v1261 = vrot.slane %v1260, 4
      %v1262 = vmax.f32 %v1260, %v1261
      %v1263 = vrot.slane %v1262, 2
      %v1264 = vmax.f32 %v1262, %v1263
      %v1265 = vrot.slane %v1264, 1
      %v1266 = vmax.f32 %v1264, %v1265
      %v1267 = vsel %vm368, %v1151, -inf
      %v1268 = vsel %vm368, %v1152, -inf
      %v1269 = vmax.f32 %v1267, %v1268
      %v1270 = vrot.slane %v1269, 4
      %v1271 = vmax.f32 %v1269, %v1270
      %v1272 = vrot.slane %v1271, 2
      %v1273 = vmax.f32 %v1271, %v1272
      %v1274 = vrot.slane %v1273, 1
      %v1275 = vmax.f32 %v1273, %v1274
      %v1276 = vsel %vm368, %v1153, -inf
      %v1277 = vsel %vm368, %v1154, -inf
      %v1278 = vmax.f32 %v1276, %v1277
      %v1279 = vrot.slane %v1278, 4
      %v1280 = vmax.f32 %v1278, %v1279
      %v1281 = vrot.slane %v1280, 2
      %v1282 = vmax.f32 %v1280, %v1281
      %v1283 = vrot.slane %v1282, 1
      %v1284 = vmax.f32 %v1282, %v1283
      %v1285 = vsel %vm368, %v1155, -inf
      %v1286 = vsel %vm368, %v1156, -inf
      %v1287 = vmax.f32 %v1285, %v1286
      %v1288 = vrot.slane %v1287, 4
      %v1289 = vmax.f32 %v1287, %v1288
      %v1290 = vrot.slane %v1289, 2
      %v1291 = vmax.f32 %v1289, %v1290
      %v1292 = vrot.slane %v1291, 1
      %v1293 = vmax.f32 %v1291, %v1292
      %v1294 = vsel %vm368, %v1157, -inf
      %v1295 = vsel %vm368, %v1158, -inf
      %v1296 = vmax.f32 %v1294, %v1295
      %v1297 = vrot.slane %v1296, 4
      %v1298 = vmax.f32 %v1296, %v1297
      %v1299 = vrot.slane %v1298, 2
      %v1300 = vmax.f32 %v1298, %v1299
      %v1301 = vrot.slane %v1300, 1
      %v1302 = vmax.f32 %v1300, %v1301
      %p1303 = scmp.le.s32.totalorder %s1082, %s1081
      %v1320 = vsel %vm534, %v1176, %v1167
      %v1321 = vsel %vm536, %v1185, %v1320
      %v1322 = vsel %vm538, %v1194, %v1321
      %v1323 = vsel %vm540, %v1203, %v1322
      %v1324 = vsel %vm542, %v1212, %v1323
      %v1325 = vsel %vm544, %v1221, %v1324
      %v1326 = vsel %vm546, %v1230, %v1325
      %v1327 = vsel %vm534, %v1248, %v1239
      %v1328 = vsel %vm536, %v1257, %v1327
      %v1329 = vsel %vm538, %v1266, %v1328
      %v1330 = vsel %vm540, %v1275, %v1329
      %v1331 = vsel %vm542, %v1284, %v1330
      %v1332 = vsel %vm544, %v1293, %v1331
      %v1333 = vsel %vm546, %v1302, %v1332
      %v1336 = vsel %vm516, %v1326, -inf
      %v1337 = vsel %vm517, %v1333, -inf
      %v1338 = vsel %vm368, %v1336, -inf
      %v1339 = vsel %vm368, %v1337, -inf
      %v1340 = vmax.f32 %v1338, %v1339
      %v1341 = vrot.slane %v1340, 4
      %v1342 = vmax.f32 %v1340, %v1341
      %v1343 = vrot.slane %v1342, 2
      %v1344 = vmax.f32 %v1342, %v1343
      %v1345 = vrot.slane %v1344, 1
      %v1346 = vmax.f32 %v1344, %v1345
      %p1347 = por %p1303, %p201
      %s1348 = scalar_select %p1347, 1, 0
      %v1349 = vstv %s1348
      %vm1350 = vcmp.eq.s32.totalorder %v1349, 1
      %v1351 = vsel %vm1350, 0.0, %v1346
      %v1352 = vsel %vm575, %v1326, -inf
      %v1353 = vsel %vm576, %v1333, -inf
      %v1354 = vsel %vm368, %v1352, -inf
      %v1355 = vsel %vm368, %v1353, -inf
      %v1356 = vmax.f32 %v1354, %v1355
      %v1357 = vrot.slane %v1356, 4
      %v1358 = vmax.f32 %v1356, %v1357
      %v1359 = vrot.slane %v1358, 2
      %v1360 = vmax.f32 %v1358, %v1359
      %v1361 = vrot.slane %v1360, 1
      %v1362 = vmax.f32 %v1360, %v1361
      %p1363 = por %p1303, %p219
      %s1364 = scalar_select %p1363, 1, 0
      %v1365 = vstv %s1364
      %vm1366 = vcmp.eq.s32.totalorder %v1365, 1
      %v1367 = vsel %vm1366, 0.0, %v1362
      %v1368 = vsel %vm595, %v1326, -inf
      %v1369 = vsel %vm596, %v1333, -inf
      %v1370 = vsel %vm368, %v1368, -inf
      %v1371 = vsel %vm368, %v1369, -inf
      %v1372 = vmax.f32 %v1370, %v1371
      %v1373 = vrot.slane %v1372, 4
      %v1374 = vmax.f32 %v1372, %v1373
      %v1375 = vrot.slane %v1374, 2
      %v1376 = vmax.f32 %v1374, %v1375
      %v1377 = vrot.slane %v1376, 1
      %v1378 = vmax.f32 %v1376, %v1377
      %p1379 = por %p1303, %p233
      %s1380 = scalar_select %p1379, 1, 0
      %v1381 = vstv %s1380
      %vm1382 = vcmp.eq.s32.totalorder %v1381, 1
      %v1383 = vsel %vm1382, 0.0, %v1378
      %v1384 = vsel %vm615, %v1326, -inf
      %v1385 = vsel %vm616, %v1333, -inf
      %v1386 = vsel %vm368, %v1384, -inf
      %v1387 = vsel %vm368, %v1385, -inf
      %v1388 = vmax.f32 %v1386, %v1387
      %v1389 = vrot.slane %v1388, 4
      %v1390 = vmax.f32 %v1388, %v1389
      %v1391 = vrot.slane %v1390, 2
      %v1392 = vmax.f32 %v1390, %v1391
      %v1393 = vrot.slane %v1392, 1
      %v1394 = vmax.f32 %v1392, %v1393
      %p1395 = por %p1303, %p247
      %s1396 = scalar_select %p1395, 1, 0
      %v1397 = vstv %s1396
      %vm1398 = vcmp.eq.s32.totalorder %v1397, 1
      %v1399 = vsel %vm1398, 0.0, %v1394
      %v1400 = vsel %vm635, %v1326, -inf
      %v1401 = vsel %vm636, %v1333, -inf
      %v1402 = vsel %vm368, %v1400, -inf
      %v1403 = vsel %vm368, %v1401, -inf
      %v1404 = vmax.f32 %v1402, %v1403
      %v1405 = vrot.slane %v1404, 4
      %v1406 = vmax.f32 %v1404, %v1405
      %v1407 = vrot.slane %v1406, 2
      %v1408 = vmax.f32 %v1406, %v1407
      %v1409 = vrot.slane %v1408, 1
      %v1410 = vmax.f32 %v1408, %v1409
      %p1411 = por %p1303, %p261
      %s1412 = scalar_select %p1411, 1, 0
      %v1413 = vstv %s1412
      %vm1414 = vcmp.eq.s32.totalorder %v1413, 1
      %v1415 = vsel %vm1414, 0.0, %v1410
      %v1416 = vsel %vm655, %v1326, -inf
      %v1417 = vsel %vm656, %v1333, -inf
      %v1418 = vsel %vm368, %v1416, -inf
      %v1419 = vsel %vm368, %v1417, -inf
      %v1420 = vmax.f32 %v1418, %v1419
      %v1421 = vrot.slane %v1420, 4
      %v1422 = vmax.f32 %v1420, %v1421
      %v1423 = vrot.slane %v1422, 2
      %v1424 = vmax.f32 %v1422, %v1423
      %v1425 = vrot.slane %v1424, 1
      %v1426 = vmax.f32 %v1424, %v1425
      %p1427 = por %p1303, %p275
      %s1428 = scalar_select %p1427, 1, 0
      %v1429 = vstv %s1428
      %vm1430 = vcmp.eq.s32.totalorder %v1429, 1
      %v1431 = vsel %vm1430, 0.0, %v1426
      %v1432 = vsel %vm675, %v1326, -inf
      %v1433 = vsel %vm676, %v1333, -inf
      %v1434 = vsel %vm368, %v1432, -inf
      %v1435 = vsel %vm368, %v1433, -inf
      %v1436 = vmax.f32 %v1434, %v1435
      %v1437 = vrot.slane %v1436, 4
      %v1438 = vmax.f32 %v1436, %v1437
      %v1439 = vrot.slane %v1438, 2
      %v1440 = vmax.f32 %v1438, %v1439
      %v1441 = vrot.slane %v1440, 1
      %v1442 = vmax.f32 %v1440, %v1441
      %p1443 = por %p1303, %p289
      %s1444 = scalar_select %p1443, 1, 0
      %v1445 = vstv %s1444
      %vm1446 = vcmp.eq.s32.totalorder %v1445, 1
      %v1447 = vsel %vm1446, 0.0, %v1442
      %v1448 = vsel %vm693, %v1351, %v1367
      %v1449 = vsel %vm695, %v1448, %v1383
      %v1450 = vsel %vm697, %v1449, %v1399
      %v1451 = vsel %vm699, %v1450, %v1415
      %v1452 = vsel %vm701, %v1451, %v1431
      %v1453 = vsel %vm703, %v1452, %v1447
      %1454 = vst.msk [vmem:[%s187 + $0xe] sm:$0x7f] %vm705, %v1453
      %s1455 = sld [smem:[#allocation6 + %s236]]
      %s1456 = sld [smem:[#allocation7 + %s236]]
      %v1457 = vstv %s1455
      %vm1458 = vcmp.ge.s32.totalorder %v189, %v1457
      %vm1459 = vcmp.ge.s32.totalorder %v190, %v1457
      %v1460 = vstv %s1456
      %vm1461 = vcmp.lt.s32.totalorder %v189, %v1460
      %vm1462 = vcmp.lt.s32.totalorder %v190, %v1460
      %vm1463 = vmand %vm1458, %vm1461
      %vm1464 = vmand %vm1459, %vm1462
      %v1465 = vld [vmem:[%s178] sm:$0xff]
      %v1466 = vld [vmem:[%s178 + $0x8] sm:$0xff]
      %v1467 = vld [vmem:[%s178 + $0x10] sm:$0xff]
      %v1468 = vld [vmem:[%s178 + $0x18] sm:$0xff]
      %v1469 = vld [vmem:[%s178 + $0x20] sm:$0xff]
      %v1470 = vld [vmem:[%s178 + $0x28] sm:$0xff]
      %v1471 = vld [vmem:[%s178 + $0x30] sm:$0xff]
      %v1472 = vld [vmem:[%s178 + $0x38] sm:$0xff]
      %v1473 = vld [vmem:[%s178 + $0x40] sm:$0xff]
      %v1474 = vld [vmem:[%s178 + $0x48] sm:$0xff]
      %v1475 = vld [vmem:[%s178 + $0x50] sm:$0xff]
      %v1476 = vld [vmem:[%s178 + $0x58] sm:$0xff]
      %v1477 = vld [vmem:[%s178 + $0x60] sm:$0xff]
      %v1478 = vld [vmem:[%s178 + $0x68] sm:$0xff]
      %v1479 = vld [vmem:[%s178 + $0x70] sm:$0xff]
      %v1480 = vld [vmem:[%s178 + $0x78] sm:$0xff]
      %v1481 = vld [vmem:[%s178 + $0x80] sm:$0xff]
      %v1482 = vld [vmem:[%s178 + $0x88] sm:$0xff]
      %v1483 = vld [vmem:[%s178 + $0x90] sm:$0xff]
      %v1484 = vld [vmem:[%s178 + $0x98] sm:$0xff]
      %v1485 = vld [vmem:[%s178 + $0xa0] sm:$0xff]
      %v1486 = vld [vmem:[%s178 + $0xa8] sm:$0xff]
      %v1487 = vld [vmem:[%s178 + $0xb0] sm:$0xff]
      %v1488 = vld [vmem:[%s178 + $0xb8] sm:$0xff]
      %v1489 = vld [vmem:[%s178 + $0xc0] sm:$0xff]
      %v1490 = vld [vmem:[%s178 + $0xc8] sm:$0xff]
      %v1491 = vld [vmem:[%s178 + $0xd0] sm:$0xff]
      %v1492 = vld [vmem:[%s178 + $0xd8] sm:$0xff]
      %v1493 = vld [vmem:[%s178 + $0xe0] sm:$0xff]
      %v1494 = vld [vmem:[%s178 + $0xe8] sm:$0xff]
      %v1495 = vld [vmem:[%s178 + $0xf0] sm:$0xff]
      %v1496 = vld [vmem:[%s178 + $0xf8] sm:$0xff]
      %v1497 = vsel %vm1463, 1, 0
      %v1498 = vsel %vm1464, 1, 0
      %vm1499 = vcmp.eq.s32.totalorder %v1497, 1
      %vm1500 = vcmp.eq.s32.totalorder %v1498, 1
      %v1501 = vsel %vm1499, %v1465, -inf
      %v1502 = vsel %vm1500, %v1466, -inf
      %v1503 = vsel %vm1499, %v1467, -inf
      %v1504 = vsel %vm1500, %v1468, -inf
      %v1505 = vsel %vm1499, %v1469, -inf
      %v1506 = vsel %vm1500, %v1470, -inf
      %v1507 = vsel %vm1499, %v1471, -inf
      %v1508 = vsel %vm1500, %v1472, -inf
      %v1509 = vsel %vm1499, %v1473, -inf
      %v1510 = vsel %vm1500, %v1474, -inf
      %v1511 = vsel %vm1499, %v1475, -inf
      %v1512 = vsel %vm1500, %v1476, -inf
      %v1513 = vsel %vm1499, %v1477, -inf
      %v1514 = vsel %vm1500, %v1478, -inf
      %v1515 = vsel %vm1499, %v1479, -inf
      %v1516 = vsel %vm1500, %v1480, -inf
      %v1517 = vsel %vm1499, %v1481, -inf
      %v1518 = vsel %vm1500, %v1482, -inf
      %v1519 = vsel %vm1499, %v1483, -inf
      %v1520 = vsel %vm1500, %v1484, -inf
      %v1521 = vsel %vm1499, %v1485, -inf
      %v1522 = vsel %vm1500, %v1486, -inf
      %v1523 = vsel %vm1499, %v1487, -inf
      %v1524 = vsel %vm1500, %v1488, -inf
      %v1525 = vsel %vm1499, %v1489, -inf
      %v1526 = vsel %vm1500, %v1490, -inf
      %v1527 = vsel %vm1499, %v1491, -inf
      %v1528 = vsel %vm1500, %v1492, -inf
      %v1529 = vsel %vm1499, %v1493, -inf
      %v1530 = vsel %vm1500, %v1494, -inf
      %v1531 = vsel %vm1499, %v1495, -inf
      %v1532 = vsel %vm1500, %v1496, -inf
      %v1533 = vsel %vm368, %v1501, -inf
      %v1534 = vsel %vm368, %v1502, -inf
      %v1535 = vmax.f32 %v1533, %v1534
      %v1536 = vrot.slane %v1535, 4
      %v1537 = vmax.f32 %v1535, %v1536
      %v1538 = vrot.slane %v1537, 2
      %v1539 = vmax.f32 %v1537, %v1538
      %v1540 = vrot.slane %v1539, 1
      %v1541 = vmax.f32 %v1539, %v1540
      %v1542 = vsel %vm368, %v1503, -inf
      %v1543 = vsel %vm368, %v1504, -inf
      %v1544 = vmax.f32 %v1542, %v1543
      %v1545 = vrot.slane %v1544, 4
      %v1546 = vmax.f32 %v1544, %v1545
      %v1547 = vrot.slane %v1546, 2
      %v1548 = vmax.f32 %v1546, %v1547
      %v1549 = vrot.slane %v1548, 1
      %v1550 = vmax.f32 %v1548, %v1549
      %v1551 = vsel %vm368, %v1505, -inf
      %v1552 = vsel %vm368, %v1506, -inf
      %v1553 = vmax.f32 %v1551, %v1552
      %v1554 = vrot.slane %v1553, 4
      %v1555 = vmax.f32 %v1553, %v1554
      %v1556 = vrot.slane %v1555, 2
      %v1557 = vmax.f32 %v1555, %v1556
      %v1558 = vrot.slane %v1557, 1
      %v1559 = vmax.f32 %v1557, %v1558
      %v1560 = vsel %vm368, %v1507, -inf
      %v1561 = vsel %vm368, %v1508, -inf
      %v1562 = vmax.f32 %v1560, %v1561
      %v1563 = vrot.slane %v1562, 4
      %v1564 = vmax.f32 %v1562, %v1563
      %v1565 = vrot.slane %v1564, 2
      %v1566 = vmax.f32 %v1564, %v1565
      %v1567 = vrot.slane %v1566, 1
      %v1568 = vmax.f32 %v1566, %v1567
      %v1569 = vsel %vm368, %v1509, -inf
      %v1570 = vsel %vm368, %v1510, -inf
      %v1571 = vmax.f32 %v1569, %v1570
      %v1572 = vrot.slane %v1571, 4
      %v1573 = vmax.f32 %v1571, %v1572
      %v1574 = vrot.slane %v1573, 2
      %v1575 = vmax.f32 %v1573, %v1574
      %v1576 = vrot.slane %v1575, 1
      %v1577 = vmax.f32 %v1575, %v1576
      %v1578 = vsel %vm368, %v1511, -inf
      %v1579 = vsel %vm368, %v1512, -inf
      %v1580 = vmax.f32 %v1578, %v1579
      %v1581 = vrot.slane %v1580, 4
      %v1582 = vmax.f32 %v1580, %v1581
      %v1583 = vrot.slane %v1582, 2
      %v1584 = vmax.f32 %v1582, %v1583
      %v1585 = vrot.slane %v1584, 1
      %v1586 = vmax.f32 %v1584, %v1585
      %v1587 = vsel %vm368, %v1513, -inf
      %v1588 = vsel %vm368, %v1514, -inf
      %v1589 = vmax.f32 %v1587, %v1588
      %v1590 = vrot.slane %v1589, 4
      %v1591 = vmax.f32 %v1589, %v1590
      %v1592 = vrot.slane %v1591, 2
      %v1593 = vmax.f32 %v1591, %v1592
      %v1594 = vrot.slane %v1593, 1
      %v1595 = vmax.f32 %v1593, %v1594
      %v1596 = vsel %vm368, %v1515, -inf
      %v1597 = vsel %vm368, %v1516, -inf
      %v1598 = vmax.f32 %v1596, %v1597
      %v1599 = vrot.slane %v1598, 4
      %v1600 = vmax.f32 %v1598, %v1599
      %v1601 = vrot.slane %v1600, 2
      %v1602 = vmax.f32 %v1600, %v1601
      %v1603 = vrot.slane %v1602, 1
      %v1604 = vmax.f32 %v1602, %v1603
      %v1605 = vsel %vm368, %v1517, -inf
      %v1606 = vsel %vm368, %v1518, -inf
      %v1607 = vmax.f32 %v1605, %v1606
      %v1608 = vrot.slane %v1607, 4
      %v1609 = vmax.f32 %v1607, %v1608
      %v1610 = vrot.slane %v1609, 2
      %v1611 = vmax.f32 %v1609, %v1610
      %v1612 = vrot.slane %v1611, 1
      %v1613 = vmax.f32 %v1611, %v1612
      %v1614 = vsel %vm368, %v1519, -inf
      %v1615 = vsel %vm368, %v1520, -inf
      %v1616 = vmax.f32 %v1614, %v1615
      %v1617 = vrot.slane %v1616, 4
      %v1618 = vmax.f32 %v1616, %v1617
      %v1619 = vrot.slane %v1618, 2
      %v1620 = vmax.f32 %v1618, %v1619
      %v1621 = vrot.slane %v1620, 1
      %v1622 = vmax.f32 %v1620, %v1621
      %v1623 = vsel %vm368, %v1521, -inf
      %v1624 = vsel %vm368, %v1522, -inf
      %v1625 = vmax.f32 %v1623, %v1624
      %v1626 = vrot.slane %v1625, 4
      %v1627 = vmax.f32 %v1625, %v1626
      %v1628 = vrot.slane %v1627, 2
      %v1629 = vmax.f32 %v1627, %v1628
      %v1630 = vrot.slane %v1629, 1
      %v1631 = vmax.f32 %v1629, %v1630
      %v1632 = vsel %vm368, %v1523, -inf
      %v1633 = vsel %vm368, %v1524, -inf
      %v1634 = vmax.f32 %v1632, %v1633
      %v1635 = vrot.slane %v1634, 4
      %v1636 = vmax.f32 %v1634, %v1635
      %v1637 = vrot.slane %v1636, 2
      %v1638 = vmax.f32 %v1636, %v1637
      %v1639 = vrot.slane %v1638, 1
      %v1640 = vmax.f32 %v1638, %v1639
      %v1641 = vsel %vm368, %v1525, -inf
      %v1642 = vsel %vm368, %v1526, -inf
      %v1643 = vmax.f32 %v1641, %v1642
      %v1644 = vrot.slane %v1643, 4
      %v1645 = vmax.f32 %v1643, %v1644
      %v1646 = vrot.slane %v1645, 2
      %v1647 = vmax.f32 %v1645, %v1646
      %v1648 = vrot.slane %v1647, 1
      %v1649 = vmax.f32 %v1647, %v1648
      %v1650 = vsel %vm368, %v1527, -inf
      %v1651 = vsel %vm368, %v1528, -inf
      %v1652 = vmax.f32 %v1650, %v1651
      %v1653 = vrot.slane %v1652, 4
      %v1654 = vmax.f32 %v1652, %v1653
      %v1655 = vrot.slane %v1654, 2
      %v1656 = vmax.f32 %v1654, %v1655
      %v1657 = vrot.slane %v1656, 1
      %v1658 = vmax.f32 %v1656, %v1657
      %v1659 = vsel %vm368, %v1529, -inf
      %v1660 = vsel %vm368, %v1530, -inf
      %v1661 = vmax.f32 %v1659, %v1660
      %v1662 = vrot.slane %v1661, 4
      %v1663 = vmax.f32 %v1661, %v1662
      %v1664 = vrot.slane %v1663, 2
      %v1665 = vmax.f32 %v1663, %v1664
      %v1666 = vrot.slane %v1665, 1
      %v1667 = vmax.f32 %v1665, %v1666
      %v1668 = vsel %vm368, %v1531, -inf
      %v1669 = vsel %vm368, %v1532, -inf
      %v1670 = vmax.f32 %v1668, %v1669
      %v1671 = vrot.slane %v1670, 4
      %v1672 = vmax.f32 %v1670, %v1671
      %v1673 = vrot.slane %v1672, 2
      %v1674 = vmax.f32 %v1672, %v1673
      %v1675 = vrot.slane %v1674, 1
      %v1676 = vmax.f32 %v1674, %v1675
      %p1677 = scmp.le.s32.totalorder %s1456, %s1455
      %v1694 = vsel %vm534, %v1550, %v1541
      %v1695 = vsel %vm536, %v1559, %v1694
      %v1696 = vsel %vm538, %v1568, %v1695
      %v1697 = vsel %vm540, %v1577, %v1696
      %v1698 = vsel %vm542, %v1586, %v1697
      %v1699 = vsel %vm544, %v1595, %v1698
      %v1700 = vsel %vm546, %v1604, %v1699
      %v1701 = vsel %vm534, %v1622, %v1613
      %v1702 = vsel %vm536, %v1631, %v1701
      %v1703 = vsel %vm538, %v1640, %v1702
      %v1704 = vsel %vm540, %v1649, %v1703
      %v1705 = vsel %vm542, %v1658, %v1704
      %v1706 = vsel %vm544, %v1667, %v1705
      %v1707 = vsel %vm546, %v1676, %v1706
      %v1710 = vsel %vm516, %v1700, -inf
      %v1711 = vsel %vm517, %v1707, -inf
      %v1712 = vsel %vm368, %v1710, -inf
      %v1713 = vsel %vm368, %v1711, -inf
      %v1714 = vmax.f32 %v1712, %v1713
      %v1715 = vrot.slane %v1714, 4
      %v1716 = vmax.f32 %v1714, %v1715
      %v1717 = vrot.slane %v1716, 2
      %v1718 = vmax.f32 %v1716, %v1717
      %v1719 = vrot.slane %v1718, 1
      %v1720 = vmax.f32 %v1718, %v1719
      %p1721 = por %p1677, %p201
      %s1722 = scalar_select %p1721, 1, 0
      %v1723 = vstv %s1722
      %vm1724 = vcmp.eq.s32.totalorder %v1723, 1
      %v1725 = vsel %vm1724, 0.0, %v1720
      %v1726 = vsel %vm575, %v1700, -inf
      %v1727 = vsel %vm576, %v1707, -inf
      %v1728 = vsel %vm368, %v1726, -inf
      %v1729 = vsel %vm368, %v1727, -inf
      %v1730 = vmax.f32 %v1728, %v1729
      %v1731 = vrot.slane %v1730, 4
      %v1732 = vmax.f32 %v1730, %v1731
      %v1733 = vrot.slane %v1732, 2
      %v1734 = vmax.f32 %v1732, %v1733
      %v1735 = vrot.slane %v1734, 1
      %v1736 = vmax.f32 %v1734, %v1735
      %p1737 = por %p1677, %p219
      %s1738 = scalar_select %p1737, 1, 0
      %v1739 = vstv %s1738
      %vm1740 = vcmp.eq.s32.totalorder %v1739, 1
      %v1741 = vsel %vm1740, 0.0, %v1736
      %v1742 = vsel %vm595, %v1700, -inf
      %v1743 = vsel %vm596, %v1707, -inf
      %v1744 = vsel %vm368, %v1742, -inf
      %v1745 = vsel %vm368, %v1743, -inf
      %v1746 = vmax.f32 %v1744, %v1745
      %v1747 = vrot.slane %v1746, 4
      %v1748 = vmax.f32 %v1746, %v1747
      %v1749 = vrot.slane %v1748, 2
      %v1750 = vmax.f32 %v1748, %v1749
      %v1751 = vrot.slane %v1750, 1
      %v1752 = vmax.f32 %v1750, %v1751
      %p1753 = por %p1677, %p233
      %s1754 = scalar_select %p1753, 1, 0
      %v1755 = vstv %s1754
      %vm1756 = vcmp.eq.s32.totalorder %v1755, 1
      %v1757 = vsel %vm1756, 0.0, %v1752
      %v1758 = vsel %vm615, %v1700, -inf
      %v1759 = vsel %vm616, %v1707, -inf
      %v1760 = vsel %vm368, %v1758, -inf
      %v1761 = vsel %vm368, %v1759, -inf
      %v1762 = vmax.f32 %v1760, %v1761
      %v1763 = vrot.slane %v1762, 4
      %v1764 = vmax.f32 %v1762, %v1763
      %v1765 = vrot.slane %v1764, 2
      %v1766 = vmax.f32 %v1764, %v1765
      %v1767 = vrot.slane %v1766, 1
      %v1768 = vmax.f32 %v1766, %v1767
      %p1769 = por %p1677, %p247
      %s1770 = scalar_select %p1769, 1, 0
      %v1771 = vstv %s1770
      %vm1772 = vcmp.eq.s32.totalorder %v1771, 1
      %v1773 = vsel %vm1772, 0.0, %v1768
      %v1774 = vsel %vm635, %v1700, -inf
      %v1775 = vsel %vm636, %v1707, -inf
      %v1776 = vsel %vm368, %v1774, -inf
      %v1777 = vsel %vm368, %v1775, -inf
      %v1778 = vmax.f32 %v1776, %v1777
      %v1779 = vrot.slane %v1778, 4
      %v1780 = vmax.f32 %v1778, %v1779
      %v1781 = vrot.slane %v1780, 2
      %v1782 = vmax.f32 %v1780, %v1781
      %v1783 = vrot.slane %v1782, 1
      %v1784 = vmax.f32 %v1782, %v1783
      %p1785 = por %p1677, %p261
      %s1786 = scalar_select %p1785, 1, 0
      %v1787 = vstv %s1786
      %vm1788 = vcmp.eq.s32.totalorder %v1787, 1
      %v1789 = vsel %vm1788, 0.0, %v1784
      %v1790 = vsel %vm655, %v1700, -inf
      %v1791 = vsel %vm656, %v1707, -inf
      %v1792 = vsel %vm368, %v1790, -inf
      %v1793 = vsel %vm368, %v1791, -inf
      %v1794 = vmax.f32 %v1792, %v1793
      %v1795 = vrot.slane %v1794, 4
      %v1796 = vmax.f32 %v1794, %v1795
      %v1797 = vrot.slane %v1796, 2
      %v1798 = vmax.f32 %v1796, %v1797
      %v1799 = vrot.slane %v1798, 1
      %v1800 = vmax.f32 %v1798, %v1799
      %p1801 = por %p1677, %p275
      %s1802 = scalar_select %p1801, 1, 0
      %v1803 = vstv %s1802
      %vm1804 = vcmp.eq.s32.totalorder %v1803, 1
      %v1805 = vsel %vm1804, 0.0, %v1800
      %v1806 = vsel %vm675, %v1700, -inf
      %v1807 = vsel %vm676, %v1707, -inf
      %v1808 = vsel %vm368, %v1806, -inf
      %v1809 = vsel %vm368, %v1807, -inf
      %v1810 = vmax.f32 %v1808, %v1809
      %v1811 = vrot.slane %v1810, 4
      %v1812 = vmax.f32 %v1810, %v1811
      %v1813 = vrot.slane %v1812, 2
      %v1814 = vmax.f32 %v1812, %v1813
      %v1815 = vrot.slane %v1814, 1
      %v1816 = vmax.f32 %v1814, %v1815
      %p1817 = por %p1677, %p289
      %s1818 = scalar_select %p1817, 1, 0
      %v1819 = vstv %s1818
      %vm1820 = vcmp.eq.s32.totalorder %v1819, 1
      %v1821 = vsel %vm1820, 0.0, %v1816
      %v1822 = vsel %vm693, %v1725, %v1741
      %v1823 = vsel %vm695, %v1822, %v1757
      %v1824 = vsel %vm697, %v1823, %v1773
      %v1825 = vsel %vm699, %v1824, %v1789
      %v1826 = vsel %vm701, %v1825, %v1805
      %v1827 = vsel %vm703, %v1826, %v1821
      %1828 = vst.msk [vmem:[%s187 + $0x15] sm:$0x7f] %vm705, %v1827
      %s1829 = sld [smem:[#allocation6 + %s250]]
      %s1830 = sld [smem:[#allocation7 + %s250]]
      %v1831 = vstv %s1829
      %vm1832 = vcmp.ge.s32.totalorder %v189, %v1831
      %vm1833 = vcmp.ge.s32.totalorder %v190, %v1831
      %v1834 = vstv %s1830
      %vm1835 = vcmp.lt.s32.totalorder %v189, %v1834
      %vm1836 = vcmp.lt.s32.totalorder %v190, %v1834
      %vm1837 = vmand %vm1832, %vm1835
      %vm1838 = vmand %vm1833, %vm1836
      %v1839 = vld [vmem:[%s178] sm:$0xff]
      %v1840 = vld [vmem:[%s178 + $0x8] sm:$0xff]
      %v1841 = vld [vmem:[%s178 + $0x10] sm:$0xff]
      %v1842 = vld [vmem:[%s178 + $0x18] sm:$0xff]
      %v1843 = vld [vmem:[%s178 + $0x20] sm:$0xff]
      %v1844 = vld [vmem:[%s178 + $0x28] sm:$0xff]
      %v1845 = vld [vmem:[%s178 + $0x30] sm:$0xff]
      %v1846 = vld [vmem:[%s178 + $0x38] sm:$0xff]
      %v1847 = vld [vmem:[%s178 + $0x40] sm:$0xff]
      %v1848 = vld [vmem:[%s178 + $0x48] sm:$0xff]
      %v1849 = vld [vmem:[%s178 + $0x50] sm:$0xff]
      %v1850 = vld [vmem:[%s178 + $0x58] sm:$0xff]
      %v1851 = vld [vmem:[%s178 + $0x60] sm:$0xff]
      %v1852 = vld [vmem:[%s178 + $0x68] sm:$0xff]
      %v1853 = vld [vmem:[%s178 + $0x70] sm:$0xff]
      %v1854 = vld [vmem:[%s178 + $0x78] sm:$0xff]
      %v1855 = vld [vmem:[%s178 + $0x80] sm:$0xff]
      %v1856 = vld [vmem:[%s178 + $0x88] sm:$0xff]
      %v1857 = vld [vmem:[%s178 + $0x90] sm:$0xff]
      %v1858 = vld [vmem:[%s178 + $0x98] sm:$0xff]
      %v1859 = vld [vmem:[%s178 + $0xa0] sm:$0xff]
      %v1860 = vld [vmem:[%s178 + $0xa8] sm:$0xff]
      %v1861 = vld [vmem:[%s178 + $0xb0] sm:$0xff]
      %v1862 = vld [vmem:[%s178 + $0xb8] sm:$0xff]
      %v1863 = vld [vmem:[%s178 + $0xc0] sm:$0xff]
      %v1864 = vld [vmem:[%s178 + $0xc8] sm:$0xff]
      %v1865 = vld [vmem:[%s178 + $0xd0] sm:$0xff]
      %v1866 = vld [vmem:[%s178 + $0xd8] sm:$0xff]
      %v1867 = vld [vmem:[%s178 + $0xe0] sm:$0xff]
      %v1868 = vld [vmem:[%s178 + $0xe8] sm:$0xff]
      %v1869 = vld [vmem:[%s178 + $0xf0] sm:$0xff]
      %v1870 = vld [vmem:[%s178 + $0xf8] sm:$0xff]
      %v1871 = vsel %vm1837, 1, 0
      %v1872 = vsel %vm1838, 1, 0
      %vm1873 = vcmp.eq.s32.totalorder %v1871, 1
      %vm1874 = vcmp.eq.s32.totalorder %v1872, 1
      %v1875 = vsel %vm1873, %v1839, -inf
      %v1876 = vsel %vm1874, %v1840, -inf
      %v1877 = vsel %vm1873, %v1841, -inf
      %v1878 = vsel %vm1874, %v1842, -inf
      %v1879 = vsel %vm1873, %v1843, -inf
      %v1880 = vsel %vm1874, %v1844, -inf
      %v1881 = vsel %vm1873, %v1845, -inf
      %v1882 = vsel %vm1874, %v1846, -inf
      %v1883 = vsel %vm1873, %v1847, -inf
      %v1884 = vsel %vm1874, %v1848, -inf
      %v1885 = vsel %vm1873, %v1849, -inf
      %v1886 = vsel %vm1874, %v1850, -inf
      %v1887 = vsel %vm1873, %v1851, -inf
      %v1888 = vsel %vm1874, %v1852, -inf
      %v1889 = vsel %vm1873, %v1853, -inf
      %v1890 = vsel %vm1874, %v1854, -inf
      %v1891 = vsel %vm1873, %v1855, -inf
      %v1892 = vsel %vm1874, %v1856, -inf
      %v1893 = vsel %vm1873, %v1857, -inf
      %v1894 = vsel %vm1874, %v1858, -inf
      %v1895 = vsel %vm1873, %v1859, -inf
      %v1896 = vsel %vm1874, %v1860, -inf
      %v1897 = vsel %vm1873, %v1861, -inf
      %v1898 = vsel %vm1874, %v1862, -inf
      %v1899 = vsel %vm1873, %v1863, -inf
      %v1900 = vsel %vm1874, %v1864, -inf
      %v1901 = vsel %vm1873, %v1865, -inf
      %v1902 = vsel %vm1874, %v1866, -inf
      %v1903 = vsel %vm1873, %v1867, -inf
      %v1904 = vsel %vm1874, %v1868, -inf
      %v1905 = vsel %vm1873, %v1869, -inf
      %v1906 = vsel %vm1874, %v1870, -inf
      %v1907 = vsel %vm368, %v1875, -inf
      %v1908 = vsel %vm368, %v1876, -inf
      %v1909 = vmax.f32 %v1907, %v1908
      %v1910 = vrot.slane %v1909, 4
      %v1911 = vmax.f32 %v1909, %v1910
      %v1912 = vrot.slane %v1911, 2
      %v1913 = vmax.f32 %v1911, %v1912
      %v1914 = vrot.slane %v1913, 1
      %v1915 = vmax.f32 %v1913, %v1914
      %v1916 = vsel %vm368, %v1877, -inf
      %v1917 = vsel %vm368, %v1878, -inf
      %v1918 = vmax.f32 %v1916, %v1917
      %v1919 = vrot.slane %v1918, 4
      %v1920 = vmax.f32 %v1918, %v1919
      %v1921 = vrot.slane %v1920, 2
      %v1922 = vmax.f32 %v1920, %v1921
      %v1923 = vrot.slane %v1922, 1
      %v1924 = vmax.f32 %v1922, %v1923
      %v1925 = vsel %vm368, %v1879, -inf
      %v1926 = vsel %vm368, %v1880, -inf
      %v1927 = vmax.f32 %v1925, %v1926
      %v1928 = vrot.slane %v1927, 4
      %v1929 = vmax.f32 %v1927, %v1928
      %v1930 = vrot.slane %v1929, 2
      %v1931 = vmax.f32 %v1929, %v1930
      %v1932 = vrot.slane %v1931, 1
      %v1933 = vmax.f32 %v1931, %v1932
      %v1934 = vsel %vm368, %v1881, -inf
      %v1935 = vsel %vm368, %v1882, -inf
      %v1936 = vmax.f32 %v1934, %v1935
      %v1937 = vrot.slane %v1936, 4
      %v1938 = vmax.f32 %v1936, %v1937
      %v1939 = vrot.slane %v1938, 2
      %v1940 = vmax.f32 %v1938, %v1939
      %v1941 = vrot.slane %v1940, 1
      %v1942 = vmax.f32 %v1940, %v1941
      %v1943 = vsel %vm368, %v1883, -inf
      %v1944 = vsel %vm368, %v1884, -inf
      %v1945 = vmax.f32 %v1943, %v1944
      %v1946 = vrot.slane %v1945, 4
      %v1947 = vmax.f32 %v1945, %v1946
      %v1948 = vrot.slane %v1947, 2
      %v1949 = vmax.f32 %v1947, %v1948
      %v1950 = vrot.slane %v1949, 1
      %v1951 = vmax.f32 %v1949, %v1950
      %v1952 = vsel %vm368, %v1885, -inf
      %v1953 = vsel %vm368, %v1886, -inf
      %v1954 = vmax.f32 %v1952, %v1953
      %v1955 = vrot.slane %v1954, 4
      %v1956 = vmax.f32 %v1954, %v1955
      %v1957 = vrot.slane %v1956, 2
      %v1958 = vmax.f32 %v1956, %v1957
      %v1959 = vrot.slane %v1958, 1
      %v1960 = vmax.f32 %v1958, %v1959
      %v1961 = vsel %vm368, %v1887, -inf
      %v1962 = vsel %vm368, %v1888, -inf
      %v1963 = vmax.f32 %v1961, %v1962
      %v1964 = vrot.slane %v1963, 4
      %v1965 = vmax.f32 %v1963, %v1964
      %v1966 = vrot.slane %v1965, 2
      %v1967 = vmax.f32 %v1965, %v1966
      %v1968 = vrot.slane %v1967, 1
      %v1969 = vmax.f32 %v1967, %v1968
      %v1970 = vsel %vm368, %v1889, -inf
      %v1971 = vsel %vm368, %v1890, -inf
      %v1972 = vmax.f32 %v1970, %v1971
      %v1973 = vrot.slane %v1972, 4
      %v1974 = vmax.f32 %v1972, %v1973
      %v1975 = vrot.slane %v1974, 2
      %v1976 = vmax.f32 %v1974, %v1975
      %v1977 = vrot.slane %v1976, 1
      %v1978 = vmax.f32 %v1976, %v1977
      %v1979 = vsel %vm368, %v1891, -inf
      %v1980 = vsel %vm368, %v1892, -inf
      %v1981 = vmax.f32 %v1979, %v1980
      %v1982 = vrot.slane %v1981, 4
      %v1983 = vmax.f32 %v1981, %v1982
      %v1984 = vrot.slane %v1983, 2
      %v1985 = vmax.f32 %v1983, %v1984
      %v1986 = vrot.slane %v1985, 1
      %v1987 = vmax.f32 %v1985, %v1986
      %v1988 = vsel %vm368, %v1893, -inf
      %v1989 = vsel %vm368, %v1894, -inf
      %v1990 = vmax.f32 %v1988, %v1989
      %v1991 = vrot.slane %v1990, 4
      %v1992 = vmax.f32 %v1990, %v1991
      %v1993 = vrot.slane %v1992, 2
      %v1994 = vmax.f32 %v1992, %v1993
      %v1995 = vrot.slane %v1994, 1
      %v1996 = vmax.f32 %v1994, %v1995
      %v1997 = vsel %vm368, %v1895, -inf
      %v1998 = vsel %vm368, %v1896, -inf
      %v1999 = vmax.f32 %v1997, %v1998
      %v2000 = vrot.slane %v1999, 4
      %v2001 = vmax.f32 %v1999, %v2000
      %v2002 = vrot.slane %v2001, 2
      %v2003 = vmax.f32 %v2001, %v2002
      %v2004 = vrot.slane %v2003, 1
      %v2005 = vmax.f32 %v2003, %v2004
      %v2006 = vsel %vm368, %v1897, -inf
      %v2007 = vsel %vm368, %v1898, -inf
      %v2008 = vmax.f32 %v2006, %v2007
      %v2009 = vrot.slane %v2008, 4
      %v2010 = vmax.f32 %v2008, %v2009
      %v2011 = vrot.slane %v2010, 2
      %v2012 = vmax.f32 %v2010, %v2011
      %v2013 = vrot.slane %v2012, 1
      %v2014 = vmax.f32 %v2012, %v2013
      %v2015 = vsel %vm368, %v1899, -inf
      %v2016 = vsel %vm368, %v1900, -inf
      %v2017 = vmax.f32 %v2015, %v2016
      %v2018 = vrot.slane %v2017, 4
      %v2019 = vmax.f32 %v2017, %v2018
      %v2020 = vrot.slane %v2019, 2
      %v2021 = vmax.f32 %v2019, %v2020
      %v2022 = vrot.slane %v2021, 1
      %v2023 = vmax.f32 %v2021, %v2022
      %v2024 = vsel %vm368, %v1901, -inf
      %v2025 = vsel %vm368, %v1902, -inf
      %v2026 = vmax.f32 %v2024, %v2025
      %v2027 = vrot.slane %v2026, 4
      %v2028 = vmax.f32 %v2026, %v2027
      %v2029 = vrot.slane %v2028, 2
      %v2030 = vmax.f32 %v2028, %v2029
      %v2031 = vrot.slane %v2030, 1
      %v2032 = vmax.f32 %v2030, %v2031
      %v2033 = vsel %vm368, %v1903, -inf
      %v2034 = vsel %vm368, %v1904, -inf
      %v2035 = vmax.f32 %v2033, %v2034
      %v2036 = vrot.slane %v2035, 4
      %v2037 = vmax.f32 %v2035, %v2036
      %v2038 = vrot.slane %v2037, 2
      %v2039 = vmax.f32 %v2037, %v2038
      %v2040 = vrot.slane %v2039, 1
      %v2041 = vmax.f32 %v2039, %v2040
      %v2042 = vsel %vm368, %v1905, -inf
      %v2043 = vsel %vm368, %v1906, -inf
      %v2044 = vmax.f32 %v2042, %v2043
      %v2045 = vrot.slane %v2044, 4
      %v2046 = vmax.f32 %v2044, %v2045
      %v2047 = vrot.slane %v2046, 2
      %v2048 = vmax.f32 %v2046, %v2047
      %v2049 = vrot.slane %v2048, 1
      %v2050 = vmax.f32 %v2048, %v2049
      %p2051 = scmp.le.s32.totalorder %s1830, %s1829
      %v2068 = vsel %vm534, %v1924, %v1915
      %v2069 = vsel %vm536, %v1933, %v2068
      %v2070 = vsel %vm538, %v1942, %v2069
      %v2071 = vsel %vm540, %v1951, %v2070
      %v2072 = vsel %vm542, %v1960, %v2071
      %v2073 = vsel %vm544, %v1969, %v2072
      %v2074 = vsel %vm546, %v1978, %v2073
      %v2075 = vsel %vm534, %v1996, %v1987
      %v2076 = vsel %vm536, %v2005, %v2075
      %v2077 = vsel %vm538, %v2014, %v2076
      %v2078 = vsel %vm540, %v2023, %v2077
      %v2079 = vsel %vm542, %v2032, %v2078
      %v2080 = vsel %vm544, %v2041, %v2079
      %v2081 = vsel %vm546, %v2050, %v2080
      %v2084 = vsel %vm516, %v2074, -inf
      %v2085 = vsel %vm517, %v2081, -inf
      %v2086 = vsel %vm368, %v2084, -inf
      %v2087 = vsel %vm368, %v2085, -inf
      %v2088 = vmax.f32 %v2086, %v2087
      %v2089 = vrot.slane %v2088, 4
      %v2090 = vmax.f32 %v2088, %v2089
      %v2091 = vrot.slane %v2090, 2
      %v2092 = vmax.f32 %v2090, %v2091
      %v2093 = vrot.slane %v2092, 1
      %v2094 = vmax.f32 %v2092, %v2093
      %p2095 = por %p2051, %p201
      %s2096 = scalar_select %p2095, 1, 0
      %v2097 = vstv %s2096
      %vm2098 = vcmp.eq.s32.totalorder %v2097, 1
      %v2099 = vsel %vm2098, 0.0, %v2094
      %v2100 = vsel %vm575, %v2074, -inf
      %v2101 = vsel %vm576, %v2081, -inf
      %v2102 = vsel %vm368, %v2100, -inf
      %v2103 = vsel %vm368, %v2101, -inf
      %v2104 = vmax.f32 %v2102, %v2103
      %v2105 = vrot.slane %v2104, 4
      %v2106 = vmax.f32 %v2104, %v2105
      %v2107 = vrot.slane %v2106, 2
      %v2108 = vmax.f32 %v2106, %v2107
      %v2109 = vrot.slane %v2108, 1
      %v2110 = vmax.f32 %v2108, %v2109
      %p2111 = por %p2051, %p219
      %s2112 = scalar_select %p2111, 1, 0
      %v2113 = vstv %s2112
      %vm2114 = vcmp.eq.s32.totalorder %v2113, 1
      %v2115 = vsel %vm2114, 0.0, %v2110
      %v2116 = vsel %vm595, %v2074, -inf
      %v2117 = vsel %vm596, %v2081, -inf
      %v2118 = vsel %vm368, %v2116, -inf
      %v2119 = vsel %vm368, %v2117, -inf
      %v2120 = vmax.f32 %v2118, %v2119
      %v2121 = vrot.slane %v2120, 4
      %v2122 = vmax.f32 %v2120, %v2121
      %v2123 = vrot.slane %v2122, 2
      %v2124 = vmax.f32 %v2122, %v2123
      %v2125 = vrot.slane %v2124, 1
      %v2126 = vmax.f32 %v2124, %v2125
      %p2127 = por %p2051, %p233
      %s2128 = scalar_select %p2127, 1, 0
      %v2129 = vstv %s2128
      %vm2130 = vcmp.eq.s32.totalorder %v2129, 1
      %v2131 = vsel %vm2130, 0.0, %v2126
      %v2132 = vsel %vm615, %v2074, -inf
      %v2133 = vsel %vm616, %v2081, -inf
      %v2134 = vsel %vm368, %v2132, -inf
      %v2135 = vsel %vm368, %v2133, -inf
      %v2136 = vmax.f32 %v2134, %v2135
      %v2137 = vrot.slane %v2136, 4
      %v2138 = vmax.f32 %v2136, %v2137
      %v2139 = vrot.slane %v2138, 2
      %v2140 = vmax.f32 %v2138, %v2139
      %v2141 = vrot.slane %v2140, 1
      %v2142 = vmax.f32 %v2140, %v2141
      %p2143 = por %p2051, %p247
      %s2144 = scalar_select %p2143, 1, 0
      %v2145 = vstv %s2144
      %vm2146 = vcmp.eq.s32.totalorder %v2145, 1
      %v2147 = vsel %vm2146, 0.0, %v2142
      %v2148 = vsel %vm635, %v2074, -inf
      %v2149 = vsel %vm636, %v2081, -inf
      %v2150 = vsel %vm368, %v2148, -inf
      %v2151 = vsel %vm368, %v2149, -inf
      %v2152 = vmax.f32 %v2150, %v2151
      %v2153 = vrot.slane %v2152, 4
      %v2154 = vmax.f32 %v2152, %v2153
      %v2155 = vrot.slane %v2154, 2
      %v2156 = vmax.f32 %v2154, %v2155
      %v2157 = vrot.slane %v2156, 1
      %v2158 = vmax.f32 %v2156, %v2157
      %p2159 = por %p2051, %p261
      %s2160 = scalar_select %p2159, 1, 0
      %v2161 = vstv %s2160
      %vm2162 = vcmp.eq.s32.totalorder %v2161, 1
      %v2163 = vsel %vm2162, 0.0, %v2158
      %v2164 = vsel %vm655, %v2074, -inf
      %v2165 = vsel %vm656, %v2081, -inf
      %v2166 = vsel %vm368, %v2164, -inf
      %v2167 = vsel %vm368, %v2165, -inf
      %v2168 = vmax.f32 %v2166, %v2167
      %v2169 = vrot.slane %v2168, 4
      %v2170 = vmax.f32 %v2168, %v2169
      %v2171 = vrot.slane %v2170, 2
      %v2172 = vmax.f32 %v2170, %v2171
      %v2173 = vrot.slane %v2172, 1
      %v2174 = vmax.f32 %v2172, %v2173
      %p2175 = por %p2051, %p275
      %s2176 = scalar_select %p2175, 1, 0
      %v2177 = vstv %s2176
      %vm2178 = vcmp.eq.s32.totalorder %v2177, 1
      %v2179 = vsel %vm2178, 0.0, %v2174
      %v2180 = vsel %vm675, %v2074, -inf
      %v2181 = vsel %vm676, %v2081, -inf
      %v2182 = vsel %vm368, %v2180, -inf
      %v2183 = vsel %vm368, %v2181, -inf
      %v2184 = vmax.f32 %v2182, %v2183
      %v2185 = vrot.slane %v2184, 4
      %v2186 = vmax.f32 %v2184, %v2185
      %v2187 = vrot.slane %v2186, 2
      %v2188 = vmax.f32 %v2186, %v2187
      %v2189 = vrot.slane %v2188, 1
      %v2190 = vmax.f32 %v2188, %v2189
      %p2191 = por %p2051, %p289
      %s2192 = scalar_select %p2191, 1, 0
      %v2193 = vstv %s2192
      %vm2194 = vcmp.eq.s32.totalorder %v2193, 1
      %v2195 = vsel %vm2194, 0.0, %v2190
      %v2196 = vsel %vm693, %v2099, %v2115
      %v2197 = vsel %vm695, %v2196, %v2131
      %v2198 = vsel %vm697, %v2197, %v2147
      %v2199 = vsel %vm699, %v2198, %v2163
      %v2200 = vsel %vm701, %v2199, %v2179
      %v2201 = vsel %vm703, %v2200, %v2195
      %2202 = vst.msk [vmem:[%s187 + $0x1c] sm:$0x7f] %vm705, %v2201
      %s2203 = sld [smem:[#allocation6 + %s264]]
      %s2204 = sld [smem:[#allocation7 + %s264]]
      %v2205 = vstv %s2203
      %vm2206 = vcmp.ge.s32.totalorder %v189, %v2205
      %vm2207 = vcmp.ge.s32.totalorder %v190, %v2205
      %v2208 = vstv %s2204
      %vm2209 = vcmp.lt.s32.totalorder %v189, %v2208
      %vm2210 = vcmp.lt.s32.totalorder %v190, %v2208
      %vm2211 = vmand %vm2206, %vm2209
      %vm2212 = vmand %vm2207, %vm2210
      %v2213 = vld [vmem:[%s178] sm:$0xff]
      %v2214 = vld [vmem:[%s178 + $0x8] sm:$0xff]
      %v2215 = vld [vmem:[%s178 + $0x10] sm:$0xff]
      %v2216 = vld [vmem:[%s178 + $0x18] sm:$0xff]
      %v2217 = vld [vmem:[%s178 + $0x20] sm:$0xff]
      %v2218 = vld [vmem:[%s178 + $0x28] sm:$0xff]
      %v2219 = vld [vmem:[%s178 + $0x30] sm:$0xff]
      %v2220 = vld [vmem:[%s178 + $0x38] sm:$0xff]
      %v2221 = vld [vmem:[%s178 + $0x40] sm:$0xff]
      %v2222 = vld [vmem:[%s178 + $0x48] sm:$0xff]
      %v2223 = vld [vmem:[%s178 + $0x50] sm:$0xff]
      %v2224 = vld [vmem:[%s178 + $0x58] sm:$0xff]
      %v2225 = vld [vmem:[%s178 + $0x60] sm:$0xff]
      %v2226 = vld [vmem:[%s178 + $0x68] sm:$0xff]
      %v2227 = vld [vmem:[%s178 + $0x70] sm:$0xff]
      %v2228 = vld [vmem:[%s178 + $0x78] sm:$0xff]
      %v2229 = vld [vmem:[%s178 + $0x80] sm:$0xff]
      %v2230 = vld [vmem:[%s178 + $0x88] sm:$0xff]
      %v2231 = vld [vmem:[%s178 + $0x90] sm:$0xff]
      %v2232 = vld [vmem:[%s178 + $0x98] sm:$0xff]
      %v2233 = vld [vmem:[%s178 + $0xa0] sm:$0xff]
      %v2234 = vld [vmem:[%s178 + $0xa8] sm:$0xff]
      %v2235 = vld [vmem:[%s178 + $0xb0] sm:$0xff]
      %v2236 = vld [vmem:[%s178 + $0xb8] sm:$0xff]
      %v2237 = vld [vmem:[%s178 + $0xc0] sm:$0xff]
      %v2238 = vld [vmem:[%s178 + $0xc8] sm:$0xff]
      %v2239 = vld [vmem:[%s178 + $0xd0] sm:$0xff]
      %v2240 = vld [vmem:[%s178 + $0xd8] sm:$0xff]
      %v2241 = vld [vmem:[%s178 + $0xe0] sm:$0xff]
      %v2242 = vld [vmem:[%s178 + $0xe8] sm:$0xff]
      %v2243 = vld [vmem:[%s178 + $0xf0] sm:$0xff]
      %v2244 = vld [vmem:[%s178 + $0xf8] sm:$0xff]
      %v2245 = vsel %vm2211, 1, 0
      %v2246 = vsel %vm2212, 1, 0
      %vm2247 = vcmp.eq.s32.totalorder %v2245, 1
      %vm2248 = vcmp.eq.s32.totalorder %v2246, 1
      %v2249 = vsel %vm2247, %v2213, -inf
      %v2250 = vsel %vm2248, %v2214, -inf
      %v2251 = vsel %vm2247, %v2215, -inf
      %v2252 = vsel %vm2248, %v2216, -inf
      %v2253 = vsel %vm2247, %v2217, -inf
      %v2254 = vsel %vm2248, %v2218, -inf
      %v2255 = vsel %vm2247, %v2219, -inf
      %v2256 = vsel %vm2248, %v2220, -inf
      %v2257 = vsel %vm2247, %v2221, -inf
      %v2258 = vsel %vm2248, %v2222, -inf
      %v2259 = vsel %vm2247, %v2223, -inf
      %v2260 = vsel %vm2248, %v2224, -inf
      %v2261 = vsel %vm2247, %v2225, -inf
      %v2262 = vsel %vm2248, %v2226, -inf
      %v2263 = vsel %vm2247, %v2227, -inf
      %v2264 = vsel %vm2248, %v2228, -inf
      %v2265 = vsel %vm2247, %v2229, -inf
      %v2266 = vsel %vm2248, %v2230, -inf
      %v2267 = vsel %vm2247, %v2231, -inf
      %v2268 = vsel %vm2248, %v2232, -inf
      %v2269 = vsel %vm2247, %v2233, -inf
      %v2270 = vsel %vm2248, %v2234, -inf
      %v2271 = vsel %vm2247, %v2235, -inf
      %v2272 = vsel %vm2248, %v2236, -inf
      %v2273 = vsel %vm2247, %v2237, -inf
      %v2274 = vsel %vm2248, %v2238, -inf
      %v2275 = vsel %vm2247, %v2239, -inf
      %v2276 = vsel %vm2248, %v2240, -inf
      %v2277 = vsel %vm2247, %v2241, -inf
      %v2278 = vsel %vm2248, %v2242, -inf
      %v2279 = vsel %vm2247, %v2243, -inf
      %v2280 = vsel %vm2248, %v2244, -inf
      %v2281 = vsel %vm368, %v2249, -inf
      %v2282 = vsel %vm368, %v2250, -inf
      %v2283 = vmax.f32 %v2281, %v2282
      %v2284 = vrot.slane %v2283, 4
      %v2285 = vmax.f32 %v2283, %v2284
      %v2286 = vrot.slane %v2285, 2
      %v2287 = vmax.f32 %v2285, %v2286
      %v2288 = vrot.slane %v2287, 1
      %v2289 = vmax.f32 %v2287, %v2288
      %v2290 = vsel %vm368, %v2251, -inf
      %v2291 = vsel %vm368, %v2252, -inf
      %v2292 = vmax.f32 %v2290, %v2291
      %v2293 = vrot.slane %v2292, 4
      %v2294 = vmax.f32 %v2292, %v2293
      %v2295 = vrot.slane %v2294, 2
      %v2296 = vmax.f32 %v2294, %v2295
      %v2297 = vrot.slane %v2296, 1
      %v2298 = vmax.f32 %v2296, %v2297
      %v2299 = vsel %vm368, %v2253, -inf
      %v2300 = vsel %vm368, %v2254, -inf
      %v2301 = vmax.f32 %v2299, %v2300
      %v2302 = vrot.slane %v2301, 4
      %v2303 = vmax.f32 %v2301, %v2302
      %v2304 = vrot.slane %v2303, 2
      %v2305 = vmax.f32 %v2303, %v2304
      %v2306 = vrot.slane %v2305, 1
      %v2307 = vmax.f32 %v2305, %v2306
      %v2308 = vsel %vm368, %v2255, -inf
      %v2309 = vsel %vm368, %v2256, -inf
      %v2310 = vmax.f32 %v2308, %v2309
      %v2311 = vrot.slane %v2310, 4
      %v2312 = vmax.f32 %v2310, %v2311
      %v2313 = vrot.slane %v2312, 2
      %v2314 = vmax.f32 %v2312, %v2313
      %v2315 = vrot.slane %v2314, 1
      %v2316 = vmax.f32 %v2314, %v2315
      %v2317 = vsel %vm368, %v2257, -inf
      %v2318 = vsel %vm368, %v2258, -inf
      %v2319 = vmax.f32 %v2317, %v2318
      %v2320 = vrot.slane %v2319, 4
      %v2321 = vmax.f32 %v2319, %v2320
      %v2322 = vrot.slane %v2321, 2
      %v2323 = vmax.f32 %v2321, %v2322
      %v2324 = vrot.slane %v2323, 1
      %v2325 = vmax.f32 %v2323, %v2324
      %v2326 = vsel %vm368, %v2259, -inf
      %v2327 = vsel %vm368, %v2260, -inf
      %v2328 = vmax.f32 %v2326, %v2327
      %v2329 = vrot.slane %v2328, 4
      %v2330 = vmax.f32 %v2328, %v2329
      %v2331 = vrot.slane %v2330, 2
      %v2332 = vmax.f32 %v2330, %v2331
      %v2333 = vrot.slane %v2332, 1
      %v2334 = vmax.f32 %v2332, %v2333
      %v2335 = vsel %vm368, %v2261, -inf
      %v2336 = vsel %vm368, %v2262, -inf
      %v2337 = vmax.f32 %v2335, %v2336
      %v2338 = vrot.slane %v2337, 4
      %v2339 = vmax.f32 %v2337, %v2338
      %v2340 = vrot.slane %v2339, 2
      %v2341 = vmax.f32 %v2339, %v2340
      %v2342 = vrot.slane %v2341, 1
      %v2343 = vmax.f32 %v2341, %v2342
      %v2344 = vsel %vm368, %v2263, -inf
      %v2345 = vsel %vm368, %v2264, -inf
      %v2346 = vmax.f32 %v2344, %v2345
      %v2347 = vrot.slane %v2346, 4
      %v2348 = vmax.f32 %v2346, %v2347
      %v2349 = vrot.slane %v2348, 2
      %v2350 = vmax.f32 %v2348, %v2349
      %v2351 = vrot.slane %v2350, 1
      %v2352 = vmax.f32 %v2350, %v2351
      %v2353 = vsel %vm368, %v2265, -inf
      %v2354 = vsel %vm368, %v2266, -inf
      %v2355 = vmax.f32 %v2353, %v2354
      %v2356 = vrot.slane %v2355, 4
      %v2357 = vmax.f32 %v2355, %v2356
      %v2358 = vrot.slane %v2357, 2
      %v2359 = vmax.f32 %v2357, %v2358
      %v2360 = vrot.slane %v2359, 1
      %v2361 = vmax.f32 %v2359, %v2360
      %v2362 = vsel %vm368, %v2267, -inf
      %v2363 = vsel %vm368, %v2268, -inf
      %v2364 = vmax.f32 %v2362, %v2363
      %v2365 = vrot.slane %v2364, 4
      %v2366 = vmax.f32 %v2364, %v2365
      %v2367 = vrot.slane %v2366, 2
      %v2368 = vmax.f32 %v2366, %v2367
      %v2369 = vrot.slane %v2368, 1
      %v2370 = vmax.f32 %v2368, %v2369
      %v2371 = vsel %vm368, %v2269, -inf
      %v2372 = vsel %vm368, %v2270, -inf
      %v2373 = vmax.f32 %v2371, %v2372
      %v2374 = vrot.slane %v2373, 4
      %v2375 = vmax.f32 %v2373, %v2374
      %v2376 = vrot.slane %v2375, 2
      %v2377 = vmax.f32 %v2375, %v2376
      %v2378 = vrot.slane %v2377, 1
      %v2379 = vmax.f32 %v2377, %v2378
      %v2380 = vsel %vm368, %v2271, -inf
      %v2381 = vsel %vm368, %v2272, -inf
      %v2382 = vmax.f32 %v2380, %v2381
      %v2383 = vrot.slane %v2382, 4
      %v2384 = vmax.f32 %v2382, %v2383
      %v2385 = vrot.slane %v2384, 2
      %v2386 = vmax.f32 %v2384, %v2385
      %v2387 = vrot.slane %v2386, 1
      %v2388 = vmax.f32 %v2386, %v2387
      %v2389 = vsel %vm368, %v2273, -inf
      %v2390 = vsel %vm368, %v2274, -inf
      %v2391 = vmax.f32 %v2389, %v2390
      %v2392 = vrot.slane %v2391, 4
      %v2393 = vmax.f32 %v2391, %v2392
      %v2394 = vrot.slane %v2393, 2
      %v2395 = vmax.f32 %v2393, %v2394
      %v2396 = vrot.slane %v2395, 1
      %v2397 = vmax.f32 %v2395, %v2396
      %v2398 = vsel %vm368, %v2275, -inf
      %v2399 = vsel %vm368, %v2276, -inf
      %v2400 = vmax.f32 %v2398, %v2399
      %v2401 = vrot.slane %v2400, 4
      %v2402 = vmax.f32 %v2400, %v2401
      %v2403 = vrot.slane %v2402, 2
      %v2404 = vmax.f32 %v2402, %v2403
      %v2405 = vrot.slane %v2404, 1
      %v2406 = vmax.f32 %v2404, %v2405
      %v2407 = vsel %vm368, %v2277, -inf
      %v2408 = vsel %vm368, %v2278, -inf
      %v2409 = vmax.f32 %v2407, %v2408
      %v2410 = vrot.slane %v2409, 4
      %v2411 = vmax.f32 %v2409, %v2410
      %v2412 = vrot.slane %v2411, 2
      %v2413 = vmax.f32 %v2411, %v2412
      %v2414 = vrot.slane %v2413, 1
      %v2415 = vmax.f32 %v2413, %v2414
      %v2416 = vsel %vm368, %v2279, -inf
      %v2417 = vsel %vm368, %v2280, -inf
      %v2418 = vmax.f32 %v2416, %v2417
      %v2419 = vrot.slane %v2418, 4
      %v2420 = vmax.f32 %v2418, %v2419
      %v2421 = vrot.slane %v2420, 2
      %v2422 = vmax.f32 %v2420, %v2421
      %v2423 = vrot.slane %v2422, 1
      %v2424 = vmax.f32 %v2422, %v2423
      %p2425 = scmp.le.s32.totalorder %s2204, %s2203
      %v2442 = vsel %vm534, %v2298, %v2289
      %v2443 = vsel %vm536, %v2307, %v2442
      %v2444 = vsel %vm538, %v2316, %v2443
      %v2445 = vsel %vm540, %v2325, %v2444
      %v2446 = vsel %vm542, %v2334, %v2445
      %v2447 = vsel %vm544, %v2343, %v2446
      %v2448 = vsel %vm546, %v2352, %v2447
      %v2449 = vsel %vm534, %v2370, %v2361
      %v2450 = vsel %vm536, %v2379, %v2449
      %v2451 = vsel %vm538, %v2388, %v2450
      %v2452 = vsel %vm540, %v2397, %v2451
      %v2453 = vsel %vm542, %v2406, %v2452
      %v2454 = vsel %vm544, %v2415, %v2453
      %v2455 = vsel %vm546, %v2424, %v2454
      %v2458 = vsel %vm516, %v2448, -inf
      %v2459 = vsel %vm517, %v2455, -inf
      %v2460 = vsel %vm368, %v2458, -inf
      %v2461 = vsel %vm368, %v2459, -inf
      %v2462 = vmax.f32 %v2460, %v2461
      %v2463 = vrot.slane %v2462, 4
      %v2464 = vmax.f32 %v2462, %v2463
      %v2465 = vrot.slane %v2464, 2
      %v2466 = vmax.f32 %v2464, %v2465
      %v2467 = vrot.slane %v2466, 1
      %v2468 = vmax.f32 %v2466, %v2467
      %p2469 = por %p2425, %p201
      %s2470 = scalar_select %p2469, 1, 0
      %v2471 = vstv %s2470
      %vm2472 = vcmp.eq.s32.totalorder %v2471, 1
      %v2473 = vsel %vm2472, 0.0, %v2468
      %v2474 = vsel %vm575, %v2448, -inf
      %v2475 = vsel %vm576, %v2455, -inf
      %v2476 = vsel %vm368, %v2474, -inf
      %v2477 = vsel %vm368, %v2475, -inf
      %v2478 = vmax.f32 %v2476, %v2477
      %v2479 = vrot.slane %v2478, 4
      %v2480 = vmax.f32 %v2478, %v2479
      %v2481 = vrot.slane %v2480, 2
      %v2482 = vmax.f32 %v2480, %v2481
      %v2483 = vrot.slane %v2482, 1
      %v2484 = vmax.f32 %v2482, %v2483
      %p2485 = por %p2425, %p219
      %s2486 = scalar_select %p2485, 1, 0
      %v2487 = vstv %s2486
      %vm2488 = vcmp.eq.s32.totalorder %v2487, 1
      %v2489 = vsel %vm2488, 0.0, %v2484
      %v2490 = vsel %vm595, %v2448, -inf
      %v2491 = vsel %vm596, %v2455, -inf
      %v2492 = vsel %vm368, %v2490, -inf
      %v2493 = vsel %vm368, %v2491, -inf
      %v2494 = vmax.f32 %v2492, %v2493
      %v2495 = vrot.slane %v2494, 4
      %v2496 = vmax.f32 %v2494, %v2495
      %v2497 = vrot.slane %v2496, 2
      %v2498 = vmax.f32 %v2496, %v2497
      %v2499 = vrot.slane %v2498, 1
      %v2500 = vmax.f32 %v2498, %v2499
      %p2501 = por %p2425, %p233
      %s2502 = scalar_select %p2501, 1, 0
      %v2503 = vstv %s2502
      %vm2504 = vcmp.eq.s32.totalorder %v2503, 1
      %v2505 = vsel %vm2504, 0.0, %v2500
      %v2506 = vsel %vm615, %v2448, -inf
      %v2507 = vsel %vm616, %v2455, -inf
      %v2508 = vsel %vm368, %v2506, -inf
      %v2509 = vsel %vm368, %v2507, -inf
      %v2510 = vmax.f32 %v2508, %v2509
      %v2511 = vrot.slane %v2510, 4
      %v2512 = vmax.f32 %v2510, %v2511
      %v2513 = vrot.slane %v2512, 2
      %v2514 = vmax.f32 %v2512, %v2513
      %v2515 = vrot.slane %v2514, 1
      %v2516 = vmax.f32 %v2514, %v2515
      %p2517 = por %p2425, %p247
      %s2518 = scalar_select %p2517, 1, 0
      %v2519 = vstv %s2518
      %vm2520 = vcmp.eq.s32.totalorder %v2519, 1
      %v2521 = vsel %vm2520, 0.0, %v2516
      %v2522 = vsel %vm635, %v2448, -inf
      %v2523 = vsel %vm636, %v2455, -inf
      %v2524 = vsel %vm368, %v2522, -inf
      %v2525 = vsel %vm368, %v2523, -inf
      %v2526 = vmax.f32 %v2524, %v2525
      %v2527 = vrot.slane %v2526, 4
      %v2528 = vmax.f32 %v2526, %v2527
      %v2529 = vrot.slane %v2528, 2
      %v2530 = vmax.f32 %v2528, %v2529
      %v2531 = vrot.slane %v2530, 1
      %v2532 = vmax.f32 %v2530, %v2531
      %p2533 = por %p2425, %p261
      %s2534 = scalar_select %p2533, 1, 0
      %v2535 = vstv %s2534
      %vm2536 = vcmp.eq.s32.totalorder %v2535, 1
      %v2537 = vsel %vm2536, 0.0, %v2532
      %v2538 = vsel %vm655, %v2448, -inf
      %v2539 = vsel %vm656, %v2455, -inf
      %v2540 = vsel %vm368, %v2538, -inf
      %v2541 = vsel %vm368, %v2539, -inf
      %v2542 = vmax.f32 %v2540, %v2541
      %v2543 = vrot.slane %v2542, 4
      %v2544 = vmax.f32 %v2542, %v2543
      %v2545 = vrot.slane %v2544, 2
      %v2546 = vmax.f32 %v2544, %v2545
      %v2547 = vrot.slane %v2546, 1
      %v2548 = vmax.f32 %v2546, %v2547
      %p2549 = por %p2425, %p275
      %s2550 = scalar_select %p2549, 1, 0
      %v2551 = vstv %s2550
      %vm2552 = vcmp.eq.s32.totalorder %v2551, 1
      %v2553 = vsel %vm2552, 0.0, %v2548
      %v2554 = vsel %vm675, %v2448, -inf
      %v2555 = vsel %vm676, %v2455, -inf
      %v2556 = vsel %vm368, %v2554, -inf
      %v2557 = vsel %vm368, %v2555, -inf
      %v2558 = vmax.f32 %v2556, %v2557
      %v2559 = vrot.slane %v2558, 4
      %v2560 = vmax.f32 %v2558, %v2559
      %v2561 = vrot.slane %v2560, 2
      %v2562 = vmax.f32 %v2560, %v2561
      %v2563 = vrot.slane %v2562, 1
      %v2564 = vmax.f32 %v2562, %v2563
      %p2565 = por %p2425, %p289
      %s2566 = scalar_select %p2565, 1, 0
      %v2567 = vstv %s2566
      %vm2568 = vcmp.eq.s32.totalorder %v2567, 1
      %v2569 = vsel %vm2568, 0.0, %v2564
      %v2570 = vsel %vm693, %v2473, %v2489
      %v2571 = vsel %vm695, %v2570, %v2505
      %v2572 = vsel %vm697, %v2571, %v2521
      %v2573 = vsel %vm699, %v2572, %v2537
      %v2574 = vsel %vm701, %v2573, %v2553
      %v2575 = vsel %vm703, %v2574, %v2569
      %2576 = vst.msk [vmem:[%s187 + $0x23] sm:$0x7f] %vm705, %v2575
      %s2577 = sld [smem:[#allocation6 + %s278]]
      %s2578 = sld [smem:[#allocation7 + %s278]]
      %v2579 = vstv %s2577
      %vm2580 = vcmp.ge.s32.totalorder %v189, %v2579
      %vm2581 = vcmp.ge.s32.totalorder %v190, %v2579
      %v2582 = vstv %s2578
      %vm2583 = vcmp.lt.s32.totalorder %v189, %v2582
      %vm2584 = vcmp.lt.s32.totalorder %v190, %v2582
      %vm2585 = vmand %vm2580, %vm2583
      %vm2586 = vmand %vm2581, %vm2584
      %v2587 = vld [vmem:[%s178] sm:$0xff]
      %v2588 = vld [vmem:[%s178 + $0x8] sm:$0xff]
      %v2589 = vld [vmem:[%s178 + $0x10] sm:$0xff]
      %v2590 = vld [vmem:[%s178 + $0x18] sm:$0xff]
      %v2591 = vld [vmem:[%s178 + $0x20] sm:$0xff]
      %v2592 = vld [vmem:[%s178 + $0x28] sm:$0xff]
      %v2593 = vld [vmem:[%s178 + $0x30] sm:$0xff]
      %v2594 = vld [vmem:[%s178 + $0x38] sm:$0xff]
      %v2595 = vld [vmem:[%s178 + $0x40] sm:$0xff]
      %v2596 = vld [vmem:[%s178 + $0x48] sm:$0xff]
      %v2597 = vld [vmem:[%s178 + $0x50] sm:$0xff]
      %v2598 = vld [vmem:[%s178 + $0x58] sm:$0xff]
      %v2599 = vld [vmem:[%s178 + $0x60] sm:$0xff]
      %v2600 = vld [vmem:[%s178 + $0x68] sm:$0xff]
      %v2601 = vld [vmem:[%s178 + $0x70] sm:$0xff]
      %v2602 = vld [vmem:[%s178 + $0x78] sm:$0xff]
      %v2603 = vld [vmem:[%s178 + $0x80] sm:$0xff]
      %v2604 = vld [vmem:[%s178 + $0x88] sm:$0xff]
      %v2605 = vld [vmem:[%s178 + $0x90] sm:$0xff]
      %v2606 = vld [vmem:[%s178 + $0x98] sm:$0xff]
      %v2607 = vld [vmem:[%s178 + $0xa0] sm:$0xff]
      %v2608 = vld [vmem:[%s178 + $0xa8] sm:$0xff]
      %v2609 = vld [vmem:[%s178 + $0xb0] sm:$0xff]
      %v2610 = vld [vmem:[%s178 + $0xb8] sm:$0xff]
      %v2611 = vld [vmem:[%s178 + $0xc0] sm:$0xff]
      %v2612 = vld [vmem:[%s178 + $0xc8] sm:$0xff]
      %v2613 = vld [vmem:[%s178 + $0xd0] sm:$0xff]
      %v2614 = vld [vmem:[%s178 + $0xd8] sm:$0xff]
      %v2615 = vld [vmem:[%s178 + $0xe0] sm:$0xff]
      %v2616 = vld [vmem:[%s178 + $0xe8] sm:$0xff]
      %v2617 = vld [vmem:[%s178 + $0xf0] sm:$0xff]
      %v2618 = vld [vmem:[%s178 + $0xf8] sm:$0xff]
      %v2619 = vsel %vm2585, 1, 0
      %v2620 = vsel %vm2586, 1, 0
      %vm2621 = vcmp.eq.s32.totalorder %v2619, 1
      %vm2622 = vcmp.eq.s32.totalorder %v2620, 1
      %v2623 = vsel %vm2621, %v2587, -inf
      %v2624 = vsel %vm2622, %v2588, -inf
      %v2625 = vsel %vm2621, %v2589, -inf
      %v2626 = vsel %vm2622, %v2590, -inf
      %v2627 = vsel %vm2621, %v2591, -inf
      %v2628 = vsel %vm2622, %v2592, -inf
      %v2629 = vsel %vm2621, %v2593, -inf
      %v2630 = vsel %vm2622, %v2594, -inf
      %v2631 = vsel %vm2621, %v2595, -inf
      %v2632 = vsel %vm2622, %v2596, -inf
      %v2633 = vsel %vm2621, %v2597, -inf
      %v2634 = vsel %vm2622, %v2598, -inf
      %v2635 = vsel %vm2621, %v2599, -inf
      %v2636 = vsel %vm2622, %v2600, -inf
      %v2637 = vsel %vm2621, %v2601, -inf
      %v2638 = vsel %vm2622, %v2602, -inf
      %v2639 = vsel %vm2621, %v2603, -inf
      %v2640 = vsel %vm2622, %v2604, -inf
      %v2641 = vsel %vm2621, %v2605, -inf
      %v2642 = vsel %vm2622, %v2606, -inf
      %v2643 = vsel %vm2621, %v2607, -inf
      %v2644 = vsel %vm2622, %v2608, -inf
      %v2645 = vsel %vm2621, %v2609, -inf
      %v2646 = vsel %vm2622, %v2610, -inf
      %v2647 = vsel %vm2621, %v2611, -inf
      %v2648 = vsel %vm2622, %v2612, -inf
      %v2649 = vsel %vm2621, %v2613, -inf
      %v2650 = vsel %vm2622, %v2614, -inf
      %v2651 = vsel %vm2621, %v2615, -inf
      %v2652 = vsel %vm2622, %v2616, -inf
      %v2653 = vsel %vm2621, %v2617, -inf
      %v2654 = vsel %vm2622, %v2618, -inf
      %v2655 = vsel %vm368, %v2623, -inf
      %v2656 = vsel %vm368, %v2624, -inf
      %v2657 = vmax.f32 %v2655, %v2656
      %v2658 = vrot.slane %v2657, 4
      %v2659 = vmax.f32 %v2657, %v2658
      %v2660 = vrot.slane %v2659, 2
      %v2661 = vmax.f32 %v2659, %v2660
      %v2662 = vrot.slane %v2661, 1
      %v2663 = vmax.f32 %v2661, %v2662
      %v2664 = vsel %vm368, %v2625, -inf
      %v2665 = vsel %vm368, %v2626, -inf
      %v2666 = vmax.f32 %v2664, %v2665
      %v2667 = vrot.slane %v2666, 4
      %v2668 = vmax.f32 %v2666, %v2667
      %v2669 = vrot.slane %v2668, 2
      %v2670 = vmax.f32 %v2668, %v2669
      %v2671 = vrot.slane %v2670, 1
      %v2672 = vmax.f32 %v2670, %v2671
      %v2673 = vsel %vm368, %v2627, -inf
      %v2674 = vsel %vm368, %v2628, -inf
      %v2675 = vmax.f32 %v2673, %v2674
      %v2676 = vrot.slane %v2675, 4
      %v2677 = vmax.f32 %v2675, %v2676
      %v2678 = vrot.slane %v2677, 2
      %v2679 = vmax.f32 %v2677, %v2678
      %v2680 = vrot.slane %v2679, 1
      %v2681 = vmax.f32 %v2679, %v2680
      %v2682 = vsel %vm368, %v2629, -inf
      %v2683 = vsel %vm368, %v2630, -inf
      %v2684 = vmax.f32 %v2682, %v2683
      %v2685 = vrot.slane %v2684, 4
      %v2686 = vmax.f32 %v2684, %v2685
      %v2687 = vrot.slane %v2686, 2
      %v2688 = vmax.f32 %v2686, %v2687
      %v2689 = vrot.slane %v2688, 1
      %v2690 = vmax.f32 %v2688, %v2689
      %v2691 = vsel %vm368, %v2631, -inf
      %v2692 = vsel %vm368, %v2632, -inf
      %v2693 = vmax.f32 %v2691, %v2692
      %v2694 = vrot.slane %v2693, 4
      %v2695 = vmax.f32 %v2693, %v2694
      %v2696 = vrot.slane %v2695, 2
      %v2697 = vmax.f32 %v2695, %v2696
      %v2698 = vrot.slane %v2697, 1
      %v2699 = vmax.f32 %v2697, %v2698
      %v2700 = vsel %vm368, %v2633, -inf
      %v2701 = vsel %vm368, %v2634, -inf
      %v2702 = vmax.f32 %v2700, %v2701
      %v2703 = vrot.slane %v2702, 4
      %v2704 = vmax.f32 %v2702, %v2703
      %v2705 = vrot.slane %v2704, 2
      %v2706 = vmax.f32 %v2704, %v2705
      %v2707 = vrot.slane %v2706, 1
      %v2708 = vmax.f32 %v2706, %v2707
      %v2709 = vsel %vm368, %v2635, -inf
      %v2710 = vsel %vm368, %v2636, -inf
      %v2711 = vmax.f32 %v2709, %v2710
      %v2712 = vrot.slane %v2711, 4
      %v2713 = vmax.f32 %v2711, %v2712
      %v2714 = vrot.slane %v2713, 2
      %v2715 = vmax.f32 %v2713, %v2714
      %v2716 = vrot.slane %v2715, 1
      %v2717 = vmax.f32 %v2715, %v2716
      %v2718 = vsel %vm368, %v2637, -inf
      %v2719 = vsel %vm368, %v2638, -inf
      %v2720 = vmax.f32 %v2718, %v2719
      %v2721 = vrot.slane %v2720, 4
      %v2722 = vmax.f32 %v2720, %v2721
      %v2723 = vrot.slane %v2722, 2
      %v2724 = vmax.f32 %v2722, %v2723
      %v2725 = vrot.slane %v2724, 1
      %v2726 = vmax.f32 %v2724, %v2725
      %v2727 = vsel %vm368, %v2639, -inf
      %v2728 = vsel %vm368, %v2640, -inf
      %v2729 = vmax.f32 %v2727, %v2728
      %v2730 = vrot.slane %v2729, 4
      %v2731 = vmax.f32 %v2729, %v2730
      %v2732 = vrot.slane %v2731, 2
      %v2733 = vmax.f32 %v2731, %v2732
      %v2734 = vrot.slane %v2733, 1
      %v2735 = vmax.f32 %v2733, %v2734
      %v2736 = vsel %vm368, %v2641, -inf
      %v2737 = vsel %vm368, %v2642, -inf
      %v2738 = vmax.f32 %v2736, %v2737
      %v2739 = vrot.slane %v2738, 4
      %v2740 = vmax.f32 %v2738, %v2739
      %v2741 = vrot.slane %v2740, 2
      %v2742 = vmax.f32 %v2740, %v2741
      %v2743 = vrot.slane %v2742, 1
      %v2744 = vmax.f32 %v2742, %v2743
      %v2745 = vsel %vm368, %v2643, -inf
      %v2746 = vsel %vm368, %v2644, -inf
      %v2747 = vmax.f32 %v2745, %v2746
      %v2748 = vrot.slane %v2747, 4
      %v2749 = vmax.f32 %v2747, %v2748
      %v2750 = vrot.slane %v2749, 2
      %v2751 = vmax.f32 %v2749, %v2750
      %v2752 = vrot.slane %v2751, 1
      %v2753 = vmax.f32 %v2751, %v2752
      %v2754 = vsel %vm368, %v2645, -inf
      %v2755 = vsel %vm368, %v2646, -inf
      %v2756 = vmax.f32 %v2754, %v2755
      %v2757 = vrot.slane %v2756, 4
      %v2758 = vmax.f32 %v2756, %v2757
      %v2759 = vrot.slane %v2758, 2
      %v2760 = vmax.f32 %v2758, %v2759
      %v2761 = vrot.slane %v2760, 1
      %v2762 = vmax.f32 %v2760, %v2761
      %v2763 = vsel %vm368, %v2647, -inf
      %v2764 = vsel %vm368, %v2648, -inf
      %v2765 = vmax.f32 %v2763, %v2764
      %v2766 = vrot.slane %v2765, 4
      %v2767 = vmax.f32 %v2765, %v2766
      %v2768 = vrot.slane %v2767, 2
      %v2769 = vmax.f32 %v2767, %v2768
      %v2770 = vrot.slane %v2769, 1
      %v2771 = vmax.f32 %v2769, %v2770
      %v2772 = vsel %vm368, %v2649, -inf
      %v2773 = vsel %vm368, %v2650, -inf
      %v2774 = vmax.f32 %v2772, %v2773
      %v2775 = vrot.slane %v2774, 4
      %v2776 = vmax.f32 %v2774, %v2775
      %v2777 = vrot.slane %v2776, 2
      %v2778 = vmax.f32 %v2776, %v2777
      %v2779 = vrot.slane %v2778, 1
      %v2780 = vmax.f32 %v2778, %v2779
      %v2781 = vsel %vm368, %v2651, -inf
      %v2782 = vsel %vm368, %v2652, -inf
      %v2783 = vmax.f32 %v2781, %v2782
      %v2784 = vrot.slane %v2783, 4
      %v2785 = vmax.f32 %v2783, %v2784
      %v2786 = vrot.slane %v2785, 2
      %v2787 = vmax.f32 %v2785, %v2786
      %v2788 = vrot.slane %v2787, 1
      %v2789 = vmax.f32 %v2787, %v2788
      %v2790 = vsel %vm368, %v2653, -inf
      %v2791 = vsel %vm368, %v2654, -inf
      %v2792 = vmax.f32 %v2790, %v2791
      %v2793 = vrot.slane %v2792, 4
      %v2794 = vmax.f32 %v2792, %v2793
      %v2795 = vrot.slane %v2794, 2
      %v2796 = vmax.f32 %v2794, %v2795
      %v2797 = vrot.slane %v2796, 1
      %v2798 = vmax.f32 %v2796, %v2797
      %p2799 = scmp.le.s32.totalorder %s2578, %s2577
      %v2816 = vsel %vm534, %v2672, %v2663
      %v2817 = vsel %vm536, %v2681, %v2816
      %v2818 = vsel %vm538, %v2690, %v2817
      %v2819 = vsel %vm540, %v2699, %v2818
      %v2820 = vsel %vm542, %v2708, %v2819
      %v2821 = vsel %vm544, %v2717, %v2820
      %v2822 = vsel %vm546, %v2726, %v2821
      %v2823 = vsel %vm534, %v2744, %v2735
      %v2824 = vsel %vm536, %v2753, %v2823
      %v2825 = vsel %vm538, %v2762, %v2824
      %v2826 = vsel %vm540, %v2771, %v2825
      %v2827 = vsel %vm542, %v2780, %v2826
      %v2828 = vsel %vm544, %v2789, %v2827
      %v2829 = vsel %vm546, %v2798, %v2828
      %v2832 = vsel %vm516, %v2822, -inf
      %v2833 = vsel %vm517, %v2829, -inf
      %v2834 = vsel %vm368, %v2832, -inf
      %v2835 = vsel %vm368, %v2833, -inf
      %v2836 = vmax.f32 %v2834, %v2835
      %v2837 = vrot.slane %v2836, 4
      %v2838 = vmax.f32 %v2836, %v2837
      %v2839 = vrot.slane %v2838, 2
      %v2840 = vmax.f32 %v2838, %v2839
      %v2841 = vrot.slane %v2840, 1
      %v2842 = vmax.f32 %v2840, %v2841
      %p2843 = por %p2799, %p201
      %s2844 = scalar_select %p2843, 1, 0
      %v2845 = vstv %s2844
      %vm2846 = vcmp.eq.s32.totalorder %v2845, 1
      %v2847 = vsel %vm2846, 0.0, %v2842
      %v2848 = vsel %vm575, %v2822, -inf
      %v2849 = vsel %vm576, %v2829, -inf
      %v2850 = vsel %vm368, %v2848, -inf
      %v2851 = vsel %vm368, %v2849, -inf
      %v2852 = vmax.f32 %v2850, %v2851
      %v2853 = vrot.slane %v2852, 4
      %v2854 = vmax.f32 %v2852, %v2853
      %v2855 = vrot.slane %v2854, 2
      %v2856 = vmax.f32 %v2854, %v2855
      %v2857 = vrot.slane %v2856, 1
      %v2858 = vmax.f32 %v2856, %v2857
      %p2859 = por %p2799, %p219
      %s2860 = scalar_select %p2859, 1, 0
      %v2861 = vstv %s2860
      %vm2862 = vcmp.eq.s32.totalorder %v2861, 1
      %v2863 = vsel %vm2862, 0.0, %v2858
      %v2864 = vsel %vm595, %v2822, -inf
      %v2865 = vsel %vm596, %v2829, -inf
      %v2866 = vsel %vm368, %v2864, -inf
      %v2867 = vsel %vm368, %v2865, -inf
      %v2868 = vmax.f32 %v2866, %v2867
      %v2869 = vrot.slane %v2868, 4
      %v2870 = vmax.f32 %v2868, %v2869
      %v2871 = vrot.slane %v2870, 2
      %v2872 = vmax.f32 %v2870, %v2871
      %v2873 = vrot.slane %v2872, 1
      %v2874 = vmax.f32 %v2872, %v2873
      %p2875 = por %p2799, %p233
      %s2876 = scalar_select %p2875, 1, 0
      %v2877 = vstv %s2876
      %vm2878 = vcmp.eq.s32.totalorder %v2877, 1
      %v2879 = vsel %vm2878, 0.0, %v2874
      %v2880 = vsel %vm615, %v2822, -inf
      %v2881 = vsel %vm616, %v2829, -inf
      %v2882 = vsel %vm368, %v2880, -inf
      %v2883 = vsel %vm368, %v2881, -inf
      %v2884 = vmax.f32 %v2882, %v2883
      %v2885 = vrot.slane %v2884, 4
      %v2886 = vmax.f32 %v2884, %v2885
      %v2887 = vrot.slane %v2886, 2
      %v2888 = vmax.f32 %v2886, %v2887
      %v2889 = vrot.slane %v2888, 1
      %v2890 = vmax.f32 %v2888, %v2889
      %p2891 = por %p2799, %p247
      %s2892 = scalar_select %p2891, 1, 0
      %v2893 = vstv %s2892
      %vm2894 = vcmp.eq.s32.totalorder %v2893, 1
      %v2895 = vsel %vm2894, 0.0, %v2890
      %v2896 = vsel %vm635, %v2822, -inf
      %v2897 = vsel %vm636, %v2829, -inf
      %v2898 = vsel %vm368, %v2896, -inf
      %v2899 = vsel %vm368, %v2897, -inf
      %v2900 = vmax.f32 %v2898, %v2899
      %v2901 = vrot.slane %v2900, 4
      %v2902 = vmax.f32 %v2900, %v2901
      %v2903 = vrot.slane %v2902, 2
      %v2904 = vmax.f32 %v2902, %v2903
      %v2905 = vrot.slane %v2904, 1
      %v2906 = vmax.f32 %v2904, %v2905
      %p2907 = por %p2799, %p261
      %s2908 = scalar_select %p2907, 1, 0
      %v2909 = vstv %s2908
      %vm2910 = vcmp.eq.s32.totalorder %v2909, 1
      %v2911 = vsel %vm2910, 0.0, %v2906
      %v2912 = vsel %vm655, %v2822, -inf
      %v2913 = vsel %vm656, %v2829, -inf
      %v2914 = vsel %vm368, %v2912, -inf
      %v2915 = vsel %vm368, %v2913, -inf
      %v2916 = vmax.f32 %v2914, %v2915
      %v2917 = vrot.slane %v2916, 4
      %v2918 = vmax.f32 %v2916, %v2917
      %v2919 = vrot.slane %v2918, 2
      %v2920 = vmax.f32 %v2918, %v2919
      %v2921 = vrot.slane %v2920, 1
      %v2922 = vmax.f32 %v2920, %v2921
      %p2923 = por %p2799, %p275
      %s2924 = scalar_select %p2923, 1, 0
      %v2925 = vstv %s2924
      %vm2926 = vcmp.eq.s32.totalorder %v2925, 1
      %v2927 = vsel %vm2926, 0.0, %v2922
      %v2928 = vsel %vm675, %v2822, -inf
      %v2929 = vsel %vm676, %v2829, -inf
      %v2930 = vsel %vm368, %v2928, -inf
      %v2931 = vsel %vm368, %v2929, -inf
      %v2932 = vmax.f32 %v2930, %v2931
      %v2933 = vrot.slane %v2932, 4
      %v2934 = vmax.f32 %v2932, %v2933
      %v2935 = vrot.slane %v2934, 2
      %v2936 = vmax.f32 %v2934, %v2935
      %v2937 = vrot.slane %v2936, 1
      %v2938 = vmax.f32 %v2936, %v2937
      %p2939 = por %p2799, %p289
      %s2940 = scalar_select %p2939, 1, 0
      %v2941 = vstv %s2940
      %vm2942 = vcmp.eq.s32.totalorder %v2941, 1
      %v2943 = vsel %vm2942, 0.0, %v2938
      %v2944 = vsel %vm693, %v2847, %v2863
      %v2945 = vsel %vm695, %v2944, %v2879
      %v2946 = vsel %vm697, %v2945, %v2895
      %v2947 = vsel %vm699, %v2946, %v2911
      %v2948 = vsel %vm701, %v2947, %v2927
      %v2949 = vsel %vm703, %v2948, %v2943
      %2950 = vst.msk [vmem:[%s187 + $0x2a] sm:$0x7f] %vm705, %v2949
      %p2951 = scmp.lt.s32.totalorder %s50, 2
      %s2952 = scalar_select %p2951, %s50, 2
      %p2953 = scmp.lt.s32.totalorder %s49, 0
      %s2954 = scalar_select %p2953, %s49, 0
      %s2955 = smul.addr %s2952, 7
      %s2956 = sadd.s32 %s2954, %s2955
      %s2957 = smul.addr %s2956, 8
      %s2958 = scalar_lea.vmem %s6, %s2957
      // Predicated region
      $region25: #{tpu_custom_call.1} parent=23 // pred_check
        %p2959 = pneg %p107
      $region26: #{tpu_custom_call.1} parent=23 // pred_check_branch
        %2961 = sbr.rel (%p2959) target = $region28
      $region27: #{tpu_custom_call.1} parent=23 // pred_region
        _
      $region28: #{tpu_custom_call.1} parent=23 // pred_fallthru
        _
    $region24: #{tpu_custom_call.1} parent=5 // pred_fallthru
      _
    %p2962 = scmp.le.s32.totalorder 2, %s40
    // Predicated region
    $region29: #{tpu_custom_call.1} parent=5 // pred_check
      %p2963 = pneg %p2962
    $region30: #{tpu_custom_call.1} parent=5 // pred_check_branch
      %2965 = sbr.rel (%p2963) target = $region32
    $region31: #{tpu_custom_call.1} parent=5 // pred_region
      %s2966 = ssub.s32 %s40, 2
      // Predicated region
      $region33: #{tpu_custom_call.1} parent=31 // pred_check
        %p2967 = pneg %p113
      $region34: #{tpu_custom_call.1} parent=31 // pred_check_branch
        %2969 = sbr.rel (%p2967) target = $region36
      $region35: #{tpu_custom_call.1} parent=31 // pred_region
        %p2970 = scmp.lt.s32.totalorder %s52, 2
        %s2971 = scalar_select %p2970, %s52, 2
        %p2972 = scmp.lt.s32.totalorder %s51, 0
        %s2973 = scalar_select %p2972, %s51, 0
        %s2974 = smul.addr %s2971, 7
        %s2975 = sadd.s32 %s2973, %s2974
        %s2976 = smul.addr %s2975, 8
        %s2977 = scalar_lea.vmem %s6, %s2976
      $region36: #{tpu_custom_call.1} parent=31 // pred_fallthru
        _
    $region32: #{tpu_custom_call.1} parent=5 // pred_fallthru
      _
  $region6: #{tpu_custom_call.1} parent=0 // loop_footer
    %s44 = sadd.s32 1, %s40
  $region7: #{tpu_custom_call.1} parent=0 // loop_footer_branch
    %39 = sbr.rel target = $region3
  $region8: #{tpu_custom_call.1} parent=0 // loop_exit
    _

</llo_original>
